<compile_context>
chip_gen: v5e
topology: v5e:2x2
jax: 0.10.0
libtpu: 0.0.40
codegen_flags: <defaults>
</compile_context>

<pallas_src>
import functools

import jax
import jax.numpy as jnp
import numpy as np
from jax.experimental import pallas as pl


# ----------------------------------------------------------------------------
# Helpers used inside the kernel
# ----------------------------------------------------------------------------
def _sigmoid(x):
    # sigmoid(x) == 0.5 * (tanh(x / 2) + 1): single EUP op, no exp+divide.
    return 0.5 * (jnp.tanh(0.5 * x) + 1.0)


def _lstm_branch(x_ref, layer_refs, hidden_dim):
    """Run a stacked LSTM branch fully in-kernel.

    x_ref      : (T, B, D_in) time-major VMEM ref.
    layer_refs : flat tuple (w_ih, w_hh, b) * num_layers;
                 w_ih (D_in|H, 4H), w_hh (H, 4H), b (1, 4H), gate order i,f,g,o.
    Returns the final hidden state h_{T-1} of the top layer, shape (B, H).
    """
    H = hidden_dim
    T = x_ref.shape[0]
    B = x_ref.shape[1]
    num_layers = len(layer_refs) // 3

    # Per-timestep inputs to the current layer (Python list of (B, D_in)).
    cur_inputs = [x_ref[t] for t in range(T)]

    h = None
    for layer in range(num_layers):
        w_ih = layer_refs[3 * layer][...]
        w_hh = layer_refs[3 * layer + 1][...]
        b = layer_refs[3 * layer + 2][...]          # (1, 4H)

        # Hoist input projection (+ bias) off the serial recurrence chain:
        # all T projections are independent of h/c and can be scheduled ahead.
        xp = [
            jnp.dot(cur_inputs[t], w_ih, preferred_element_type=jnp.float32) + b
            for t in range(T)
        ]

        h = jnp.zeros((B, H), jnp.float32)
        c = jnp.zeros((B, H), jnp.float32)
        last_layer = layer == num_layers - 1
        next_inputs = []

        # Static unroll of the (short) time loop: keeps everything in one
        # basic block so the LLO scheduler can overlap EUP / VPU / MXU work.
        for t in range(T):
            gates = xp[t] + jnp.dot(h, w_hh, preferred_element_type=jnp.float32)
            i = _sigmoid(gates[:, 0 * H:1 * H])
            f = _sigmoid(gates[:, 1 * H:2 * H])
            g = jnp.tanh(gates[:, 2 * H:3 * H])
            o = _sigmoid(gates[:, 3 * H:4 * H])
            c = f * c + i * g
            h = o * jnp.tanh(c)
            if not last_layer:
                next_inputs.append(h)

        cur_inputs = next_inputs

    return h


# ----------------------------------------------------------------------------
# Fused kernel: both LSTM branches + fc0 + concat-fc1 (split matmuls) + head.
# ----------------------------------------------------------------------------
def fused_forward_kernel(*refs, num_layers, hidden_dim):
    nL = num_layers
    x1_ref, x2_ref, x3_ref = refs[0], refs[1], refs[2]
    p = 3
    lstm1_refs = refs[p:p + 3 * nL]
    p += 3 * nL
    lstm2_refs = refs[p:p + 3 * nL]
    p += 3 * nL
    (w0_ref, b0_ref, w1a_ref, w1b_ref, w1c_ref, b1_ref,
     w2_ref, b2_ref, w3_ref, b3_ref) = refs[p:p + 10]
    p += 10
    out_ref = refs[p]

    # Two independent LSTM branches (only the final hidden state is needed).
    h1 = _lstm_branch(x1_ref, lstm1_refs, hidden_dim)   # (B, H)
    h2 = _lstm_branch(x2_ref, lstm2_refs, hidden_dim)   # (B, H)

    # fc0 on the last timestep of x3 (fc0 then [:, -1] == fc0 on last step).
    fc0 = (jnp.dot(x3_ref[...], w0_ref[...],
                   preferred_element_type=jnp.float32) + b0_ref[...])

    # concat([h1, h2, fc0]) @ W1  ==  h1@W1a + h2@W1b + fc0@W1c
    z1 = jnp.tanh(
        jnp.dot(h1, w1a_ref[...], preferred_element_type=jnp.float32)
        + jnp.dot(h2, w1b_ref[...], preferred_element_type=jnp.float32)
        + jnp.dot(fc0, w1c_ref[...], preferred_element_type=jnp.float32)
        + b1_ref[...])
    z2 = jnp.tanh(jnp.dot(z1, w2_ref[...],
                          preferred_element_type=jnp.float32) + b2_ref[...])
    z3 = jnp.tanh(jnp.dot(z2, w3_ref[...],
                          preferred_element_type=jnp.float32) + b3_ref[...])
    out_ref[...] = _sigmoid(z3)


# ----------------------------------------------------------------------------
# Python wrapper: one pallas_call for the whole forward pass.
# ----------------------------------------------------------------------------
def two_branches_lstm_forward(x1, x2, x3, params):
    H = params["hidden_dim"]
    out_size = params["output_size"]
    num_layers = len(params["lstm1"])
    B = x1.shape[0]

    # Tiny layout-only XLA ops (a few KB each): time-major views for cheap
    # leading-dim indexing inside the kernel, and the last step of x3.
    x1_tm = jnp.transpose(x1, (1, 0, 2))
    x2_tm = jnp.transpose(x2, (1, 0, 2))
    x3_last = x3[:, -1, :]

    lstm1_flat = [w for layer in params["lstm1"] for w in layer]
    lstm2_flat = [w for layer in params["lstm2"] for w in layer]
    head = params["head"]

    kernel = functools.partial(
        fused_forward_kernel, num_layers=num_layers, hidden_dim=H)

    return pl.pallas_call(
        kernel,
        out_shape=jax.ShapeDtypeStruct((B, out_size), jnp.float32),
    )(x1_tm, x2_tm, x3_last, *lstm1_flat, *lstm2_flat, *head)


# ----------------------------------------------------------------------------
# Deterministic parameter construction (synthetic, PyTorch-like uniform init)
# ----------------------------------------------------------------------------
def uniform(key, shape, scale):
    return jax.random.uniform(key, shape, jnp.float32, -scale, scale)


def make_params(key, d1, d2, d3, H, num_layers, fc0_u, fc1_u, fc2_u, out_sz):
    ks = iter(jax.random.split(key, 64))
    scale = 1.0 / np.sqrt(H)

    def lstm_stack(d_in):
        layers = []
        for layer in range(num_layers):
            din = d_in if layer == 0 else H
            w_ih = uniform(next(ks), (din, 4 * H), scale)
            w_hh = uniform(next(ks), (H, 4 * H), scale)
            b_ih = uniform(next(ks), (1, 4 * H), scale)
            b_hh = uniform(next(ks), (1, 4 * H), scale)
            layers.append((w_ih, w_hh, b_ih + b_hh))
        return layers

    lstm1 = lstm_stack(d1)
    lstm2 = lstm_stack(d2)

    def linear(din, dout):
        s = 1.0 / np.sqrt(din)
        return uniform(next(ks), (din, dout), s), uniform(next(ks), (1, dout), s)

    w0, b0 = linear(d3, fc0_u)
    w1, b1 = linear(2 * H + fc0_u, fc1_u)   # = 32*3 = 96 in the reference module
    w2, b2 = linear(fc1_u, fc2_u)
    w3, b3 = linear(fc2_u, out_sz)

    # split fc1 into the three concat chunks
    w1a, w1b, w1c = w1[:H], w1[H:2 * H], w1[2 * H:]

    head = (w0, b0, w1a, w1b, w1c, b1, w2, b2, w3, b3)
    return {
        "hidden_dim": H,
        "output_size": out_sz,
        "lstm1": lstm1,
        "lstm2": lstm2,
        "head": head,
    }


# ----------------------------------------------------------------------------
# Pure-JAX reference (sanity check against the Pallas path)
# ----------------------------------------------------------------------------
def lstm_ref(x, layers, H):
    B, T, _ = x.shape
    inp = x
    for (w_ih, w_hh, b) in layers:
        h = jnp.zeros((B, H), jnp.float32)
        c = jnp.zeros((B, H), jnp.float32)
        ys = []
        for t in range(T):
            g = inp[:, t, :] @ w_ih + h @ w_hh + b[0]
            i = jax.nn.sigmoid(g[:, :H])
            f = jax.nn.sigmoid(g[:, H:2 * H])
            gg = jnp.tanh(g[:, 2 * H:3 * H])
            o = jax.nn.sigmoid(g[:, 3 * H:])
            c = f * c + i * gg
            h = o * jnp.tanh(c)
            ys.append(h)
        inp = jnp.stack(ys, axis=1)
    return inp


def forward_ref(x1, x2, x3, params):
    H = params["hidden_dim"]
    h1 = lstm_ref(x1, params["lstm1"], H)[:, -1, :]
    h2 = lstm_ref(x2, params["lstm2"], H)[:, -1, :]
    (w0, b0, w1a, w1b, w1c, b1, w2, b2, w3, b3) = params["head"]
    fc0 = x3[:, -1, :] @ w0 + b0
    z1 = jnp.tanh(h1 @ w1a + h2 @ w1b + fc0 @ w1c + b1)
    z2 = jnp.tanh(z1 @ w2 + b2)
    z3 = jnp.tanh(z2 @ w3 + b3)
    return jax.nn.sigmoid(z3)


# ----------------------------------------------------------------------------
if __name__ == "__main__":
    # Small, module-consistent shapes.  fc1 input is hard-coded to 32*3 in the
    # PyTorch module, which forces hidden_dim_lstm == fc0_units == 32.
    B = 4
    T1, T2, T3 = 8, 8, 8
    D1, D2, D3 = 16, 12, 10
    H = 32
    NUM_LAYERS = 2
    FC0_U, FC1_U, FC2_U = 32, 48, 24
    OUT = 4

    root = jax.random.PRNGKey(0)
    kx1, kx2, kx3, kp = jax.random.split(root, 4)
    x1 = jax.random.normal(kx1, (B, T1, D1), jnp.float32)
    x2 = jax.random.normal(kx2, (B, T2, D2), jnp.float32)
    x3 = jax.random.normal(kx3, (B, T3, D3), jnp.float32)

    params = make_params(kp, D1, D2, D3, H, NUM_LAYERS,
                         FC0_U, FC1_U, FC2_U, OUT)

    out = two_branches_lstm_forward(x1, x2, x3, params)
    out = jax.block_until_ready(out)

    ref = jax.block_until_ready(forward_ref(x1, x2, x3, params))

    assert out.shape == (B, OUT), out.shape
    assert bool(jnp.all(jnp.isfinite(out)))
    np.testing.assert_allclose(np.asarray(out), np.asarray(ref),
                               rtol=2e-2, atol=2e-2)
    print("KERNEL_OK")
</pallas_src>

<mosaic_0001>
module attributes {stable_mosaic.version = 11 : i64} {
  func.func @fused_forward_kernel(%arg0: memref<8x4x16xf32, #tpu.memory_space<vmem>>, %arg1: memref<8x4x12xf32, #tpu.memory_space<vmem>>, %arg2: memref<4x10xf32, #tpu.memory_space<vmem>>, %arg3: memref<16x128xf32, #tpu.memory_space<vmem>>, %arg4: memref<32x128xf32, #tpu.memory_space<vmem>>, %arg5: memref<1x128xf32, #tpu.memory_space<vmem>>, %arg6: memref<32x128xf32, #tpu.memory_space<vmem>>, %arg7: memref<32x128xf32, #tpu.memory_space<vmem>>, %arg8: memref<1x128xf32, #tpu.memory_space<vmem>>, %arg9: memref<12x128xf32, #tpu.memory_space<vmem>>, %arg10: memref<32x128xf32, #tpu.memory_space<vmem>>, %arg11: memref<1x128xf32, #tpu.memory_space<vmem>>, %arg12: memref<32x128xf32, #tpu.memory_space<vmem>>, %arg13: memref<32x128xf32, #tpu.memory_space<vmem>>, %arg14: memref<1x128xf32, #tpu.memory_space<vmem>>, %arg15: memref<10x32xf32, #tpu.memory_space<vmem>>, %arg16: memref<1x32xf32, #tpu.memory_space<vmem>>, %arg17: memref<32x48xf32, #tpu.memory_space<vmem>>, %arg18: memref<32x48xf32, #tpu.memory_space<vmem>>, %arg19: memref<32x48xf32, #tpu.memory_space<vmem>>, %arg20: memref<1x48xf32, #tpu.memory_space<vmem>>, %arg21: memref<48x24xf32, #tpu.memory_space<vmem>>, %arg22: memref<1x24xf32, #tpu.memory_space<vmem>>, %arg23: memref<24x4xf32, #tpu.memory_space<vmem>>, %arg24: memref<1x4xf32, #tpu.memory_space<vmem>>, %arg25: memref<4x4xf32, #tpu.memory_space<vmem>>) attributes {dimension_semantics = [], scalar_prefetch = 0 : i64, scratch_operands = 0 : i64, tpu.core_type = #tpu.core_type<tc>} {
    %c0 = arith.constant 0 : index
    %c0_0 = arith.constant 0 : index
    %c0_1 = arith.constant 0 : index
    %0 = vector.load %arg0[%c0, %c0_0, %c0_1] : memref<8x4x16xf32, #tpu.memory_space<vmem>>, vector<1x4x16xf32>
    %1 = vector.shape_cast %0 : vector<1x4x16xf32> to vector<4x16xf32>
    %c1 = arith.constant 1 : index
    %c0_2 = arith.constant 0 : index
    %c0_3 = arith.constant 0 : index
    %2 = vector.load %arg0[%c1, %c0_2, %c0_3] : memref<8x4x16xf32, #tpu.memory_space<vmem>>, vector<1x4x16xf32>
    %3 = vector.shape_cast %2 : vector<1x4x16xf32> to vector<4x16xf32>
    %c2 = arith.constant 2 : index
    %c0_4 = arith.constant 0 : index
    %c0_5 = arith.constant 0 : index
    %4 = vector.load %arg0[%c2, %c0_4, %c0_5] : memref<8x4x16xf32, #tpu.memory_space<vmem>>, vector<1x4x16xf32>
    %5 = vector.shape_cast %4 : vector<1x4x16xf32> to vector<4x16xf32>
    %c3 = arith.constant 3 : index
    %c0_6 = arith.constant 0 : index
    %c0_7 = arith.constant 0 : index
    %6 = vector.load %arg0[%c3, %c0_6, %c0_7] : memref<8x4x16xf32, #tpu.memory_space<vmem>>, vector<1x4x16xf32>
    %7 = vector.shape_cast %6 : vector<1x4x16xf32> to vector<4x16xf32>
    %c4 = arith.constant 4 : index
    %c0_8 = arith.constant 0 : index
    %c0_9 = arith.constant 0 : index
    %8 = vector.load %arg0[%c4, %c0_8, %c0_9] : memref<8x4x16xf32, #tpu.memory_space<vmem>>, vector<1x4x16xf32>
    %9 = vector.shape_cast %8 : vector<1x4x16xf32> to vector<4x16xf32>
    %c5 = arith.constant 5 : index
    %c0_10 = arith.constant 0 : index
    %c0_11 = arith.constant 0 : index
    %10 = vector.load %arg0[%c5, %c0_10, %c0_11] : memref<8x4x16xf32, #tpu.memory_space<vmem>>, vector<1x4x16xf32>
    %11 = vector.shape_cast %10 : vector<1x4x16xf32> to vector<4x16xf32>
    %c6 = arith.constant 6 : index
    %c0_12 = arith.constant 0 : index
    %c0_13 = arith.constant 0 : index
    %12 = vector.load %arg0[%c6, %c0_12, %c0_13] : memref<8x4x16xf32, #tpu.memory_space<vmem>>, vector<1x4x16xf32>
    %13 = vector.shape_cast %12 : vector<1x4x16xf32> to vector<4x16xf32>
    %c7 = arith.constant 7 : index
    %c0_14 = arith.constant 0 : index
    %c0_15 = arith.constant 0 : index
    %14 = vector.load %arg0[%c7, %c0_14, %c0_15] : memref<8x4x16xf32, #tpu.memory_space<vmem>>, vector<1x4x16xf32>
    %15 = vector.shape_cast %14 : vector<1x4x16xf32> to vector<4x16xf32>
    %c0_16 = arith.constant 0 : index
    %c0_17 = arith.constant 0 : index
    %16 = vector.load %arg3[%c0_16, %c0_17] : memref<16x128xf32, #tpu.memory_space<vmem>>, vector<16x128xf32>
    %c0_18 = arith.constant 0 : index
    %c0_19 = arith.constant 0 : index
    %17 = vector.load %arg4[%c0_18, %c0_19] : memref<32x128xf32, #tpu.memory_space<vmem>>, vector<32x128xf32>
    %c0_20 = arith.constant 0 : index
    %c0_21 = arith.constant 0 : index
    %18 = vector.load %arg5[%c0_20, %c0_21] : memref<1x128xf32, #tpu.memory_space<vmem>>, vector<1x128xf32>
    %cst = arith.constant dense<0.000000e+00> : vector<4x128xf32>
    %19 = tpu.matmul %1, %16, %cst {dimension_numbers = #tpu.dot_dimension_numbers<[1], [0], [0], [1], [0, 0, 1, 1], [], []>} : vector<4x16xf32>, vector<16x128xf32>, vector<4x128xf32> -> vector<4x128xf32>
    %20 = vector.broadcast %18 : vector<1x128xf32> to vector<4x128xf32>
    %21 = arith.addf %19, %20 : vector<4x128xf32>
    %cst_22 = arith.constant dense<0.000000e+00> : vector<4x128xf32>
    %22 = tpu.matmul %3, %16, %cst_22 {dimension_numbers = #tpu.dot_dimension_numbers<[1], [0], [0], [1], [0, 0, 1, 1], [], []>} : vector<4x16xf32>, vector<16x128xf32>, vector<4x128xf32> -> vector<4x128xf32>
    %23 = vector.broadcast %18 : vector<1x128xf32> to vector<4x128xf32>
    %24 = arith.addf %22, %23 : vector<4x128xf32>
    %cst_23 = arith.constant dense<0.000000e+00> : vector<4x128xf32>
    %25 = tpu.matmul %5, %16, %cst_23 {dimension_numbers = #tpu.dot_dimension_numbers<[1], [0], [0], [1], [0, 0, 1, 1], [], []>} : vector<4x16xf32>, vector<16x128xf32>, vector<4x128xf32> -> vector<4x128xf32>
    %26 = vector.broadcast %18 : vector<1x128xf32> to vector<4x128xf32>
    %27 = arith.addf %25, %26 : vector<4x128xf32>
    %cst_24 = arith.constant dense<0.000000e+00> : vector<4x128xf32>
    %28 = tpu.matmul %7, %16, %cst_24 {dimension_numbers = #tpu.dot_dimension_numbers<[1], [0], [0], [1], [0, 0, 1, 1], [], []>} : vector<4x16xf32>, vector<16x128xf32>, vector<4x128xf32> -> vector<4x128xf32>
    %29 = vector.broadcast %18 : vector<1x128xf32> to vector<4x128xf32>
    %30 = arith.addf %28, %29 : vector<4x128xf32>
    %cst_25 = arith.constant dense<0.000000e+00> : vector<4x128xf32>
    %31 = tpu.matmul %9, %16, %cst_25 {dimension_numbers = #tpu.dot_dimension_numbers<[1], [0], [0], [1], [0, 0, 1, 1], [], []>} : vector<4x16xf32>, vector<16x128xf32>, vector<4x128xf32> -> vector<4x128xf32>
    %32 = vector.broadcast %18 : vector<1x128xf32> to vector<4x128xf32>
    %33 = arith.addf %31, %32 : vector<4x128xf32>
    %cst_26 = arith.constant dense<0.000000e+00> : vector<4x128xf32>
    %34 = tpu.matmul %11, %16, %cst_26 {dimension_numbers = #tpu.dot_dimension_numbers<[1], [0], [0], [1], [0, 0, 1, 1], [], []>} : vector<4x16xf32>, vector<16x128xf32>, vector<4x128xf32> -> vector<4x128xf32>
    %35 = vector.broadcast %18 : vector<1x128xf32> to vector<4x128xf32>
    %36 = arith.addf %34, %35 : vector<4x128xf32>
    %cst_27 = arith.constant dense<0.000000e+00> : vector<4x128xf32>
    %37 = tpu.matmul %13, %16, %cst_27 {dimension_numbers = #tpu.dot_dimension_numbers<[1], [0], [0], [1], [0, 0, 1, 1], [], []>} : vector<4x16xf32>, vector<16x128xf32>, vector<4x128xf32> -> vector<4x128xf32>
    %38 = vector.broadcast %18 : vector<1x128xf32> to vector<4x128xf32>
    %39 = arith.addf %37, %38 : vector<4x128xf32>
    %cst_28 = arith.constant dense<0.000000e+00> : vector<4x128xf32>
    %40 = tpu.matmul %15, %16, %cst_28 {dimension_numbers = #tpu.dot_dimension_numbers<[1], [0], [0], [1], [0, 0, 1, 1], [], []>} : vector<4x16xf32>, vector<16x128xf32>, vector<4x128xf32> -> vector<4x128xf32>
    %41 = vector.broadcast %18 : vector<1x128xf32> to vector<4x128xf32>
    %42 = arith.addf %40, %41 : vector<4x128xf32>
    %cst_29 = arith.constant 0.000000e+00 : f32
    %43 = vector.broadcast %cst_29 : f32 to vector<4x32xf32>
    %cst_30 = arith.constant 0.000000e+00 : f32
    %44 = vector.broadcast %cst_30 : f32 to vector<4x32xf32>
    %cst_31 = arith.constant dense<0.000000e+00> : vector<4x128xf32>
    %45 = tpu.matmul %43, %17, %cst_31 {dimension_numbers = #tpu.dot_dimension_numbers<[1], [0], [0], [1], [0, 0, 1, 1], [], []>} : vector<4x32xf32>, vector<32x128xf32>, vector<4x128xf32> -> vector<4x128xf32>
    %46 = arith.addf %21, %45 : vector<4x128xf32>
    %47 = vector.extract_strided_slice %46 {offsets = [0, 0], sizes = [4, 32], strides = [1, 1]} : vector<4x128xf32> to vector<4x32xf32>
    %cst_32 = arith.constant 5.000000e-01 : f32
    %48 = vector.broadcast %cst_32 : f32 to vector<4x32xf32>
    %49 = arith.mulf %48, %47 : vector<4x32xf32>
    %50 = math.tanh %49 : vector<4x32xf32>
    %cst_33 = arith.constant 1.000000e+00 : f32
    %51 = vector.broadcast %cst_33 : f32 to vector<4x32xf32>
    %52 = arith.addf %50, %51 : vector<4x32xf32>
    %cst_34 = arith.constant 5.000000e-01 : f32
    %53 = vector.broadcast %cst_34 : f32 to vector<4x32xf32>
    %54 = arith.mulf %53, %52 : vector<4x32xf32>
    %55 = vector.extract_strided_slice %46 {offsets = [0, 32], sizes = [4, 32], strides = [1, 1]} : vector<4x128xf32> to vector<4x32xf32>
    %cst_35 = arith.constant 5.000000e-01 : f32
    %56 = vector.broadcast %cst_35 : f32 to vector<4x32xf32>
    %57 = arith.mulf %56, %55 : vector<4x32xf32>
    %58 = math.tanh %57 : vector<4x32xf32>
    %cst_36 = arith.constant 1.000000e+00 : f32
    %59 = vector.broadcast %cst_36 : f32 to vector<4x32xf32>
    %60 = arith.addf %58, %59 : vector<4x32xf32>
    %cst_37 = arith.constant 5.000000e-01 : f32
    %61 = vector.broadcast %cst_37 : f32 to vector<4x32xf32>
    %62 = arith.mulf %61, %60 : vector<4x32xf32>
    %63 = vector.extract_strided_slice %46 {offsets = [0, 64], sizes = [4, 32], strides = [1, 1]} : vector<4x128xf32> to vector<4x32xf32>
    %64 = math.tanh %63 : vector<4x32xf32>
    %65 = vector.extract_strided_slice %46 {offsets = [0, 96], sizes = [4, 32], strides = [1, 1]} : vector<4x128xf32> to vector<4x32xf32>
    %cst_38 = arith.constant 5.000000e-01 : f32
    %66 = vector.broadcast %cst_38 : f32 to vector<4x32xf32>
    %67 = arith.mulf %66, %65 : vector<4x32xf32>
    %68 = math.tanh %67 : vector<4x32xf32>
    %cst_39 = arith.constant 1.000000e+00 : f32
    %69 = vector.broadcast %cst_39 : f32 to vector<4x32xf32>
    %70 = arith.addf %68, %69 : vector<4x32xf32>
    %cst_40 = arith.constant 5.000000e-01 : f32
    %71 = vector.broadcast %cst_40 : f32 to vector<4x32xf32>
    %72 = arith.mulf %71, %70 : vector<4x32xf32>
    %73 = arith.mulf %62, %44 : vector<4x32xf32>
    %74 = arith.mulf %54, %64 : vector<4x32xf32>
    %75 = arith.addf %73, %74 : vector<4x32xf32>
    %76 = math.tanh %75 : vector<4x32xf32>
    %77 = arith.mulf %72, %76 : vector<4x32xf32>
    %cst_41 = arith.constant dense<0.000000e+00> : vector<4x128xf32>
    %78 = tpu.matmul %77, %17, %cst_41 {dimension_numbers = #tpu.dot_dimension_numbers<[1], [0], [0], [1], [0, 0, 1, 1], [], []>} : vector<4x32xf32>, vector<32x128xf32>, vector<4x128xf32> -> vector<4x128xf32>
    %79 = arith.addf %24, %78 : vector<4x128xf32>
    %80 = vector.extract_strided_slice %79 {offsets = [0, 0], sizes = [4, 32], strides = [1, 1]} : vector<4x128xf32> to vector<4x32xf32>
    %cst_42 = arith.constant 5.000000e-01 : f32
    %81 = vector.broadcast %cst_42 : f32 to vector<4x32xf32>
    %82 = arith.mulf %81, %80 : vector<4x32xf32>
    %83 = math.tanh %82 : vector<4x32xf32>
    %cst_43 = arith.constant 1.000000e+00 : f32
    %84 = vector.broadcast %cst_43 : f32 to vector<4x32xf32>
    %85 = arith.addf %83, %84 : vector<4x32xf32>
    %cst_44 = arith.constant 5.000000e-01 : f32
    %86 = vector.broadcast %cst_44 : f32 to vector<4x32xf32>
    %87 = arith.mulf %86, %85 : vector<4x32xf32>
    %88 = vector.extract_strided_slice %79 {offsets = [0, 32], sizes = [4, 32], strides = [1, 1]} : vector<4x128xf32> to vector<4x32xf32>
    %cst_45 = arith.constant 5.000000e-01 : f32
    %89 = vector.broadcast %cst_45 : f32 to vector<4x32xf32>
    %90 = arith.mulf %89, %88 : vector<4x32xf32>
    %91 = math.tanh %90 : vector<4x32xf32>
    %cst_46 = arith.constant 1.000000e+00 : f32
    %92 = vector.broadcast %cst_46 : f32 to vector<4x32xf32>
    %93 = arith.addf %91, %92 : vector<4x32xf32>
    %cst_47 = arith.constant 5.000000e-01 : f32
    %94 = vector.broadcast %cst_47 : f32 to vector<4x32xf32>
    %95 = arith.mulf %94, %93 : vector<4x32xf32>
    %96 = vector.extract_strided_slice %79 {offsets = [0, 64], sizes = [4, 32], strides = [1, 1]} : vector<4x128xf32> to vector<4x32xf32>
    %97 = math.tanh %96 : vector<4x32xf32>
    %98 = vector.extract_strided_slice %79 {offsets = [0, 96], sizes = [4, 32], strides = [1, 1]} : vector<4x128xf32> to vector<4x32xf32>
    %cst_48 = arith.constant 5.000000e-01 : f32
    %99 = vector.broadcast %cst_48 : f32 to vector<4x32xf32>
    %100 = arith.mulf %99, %98 : vector<4x32xf32>
    %101 = math.tanh %100 : vector<4x32xf32>
    %cst_49 = arith.constant 1.000000e+00 : f32
    %102 = vector.broadcast %cst_49 : f32 to vector<4x32xf32>
    %103 = arith.addf %101, %102 : vector<4x32xf32>
    %cst_50 = arith.constant 5.000000e-01 : f32
    %104 = vector.broadcast %cst_50 : f32 to vector<4x32xf32>
    %105 = arith.mulf %104, %103 : vector<4x32xf32>
    %106 = arith.mulf %95, %75 : vector<4x32xf32>
    %107 = arith.mulf %87, %97 : vector<4x32xf32>
    %108 = arith.addf %106, %107 : vector<4x32xf32>
    %109 = math.tanh %108 : vector<4x32xf32>
    %110 = arith.mulf %105, %109 : vector<4x32xf32>
    %cst_51 = arith.constant dense<0.000000e+00> : vector<4x128xf32>
    %111 = tpu.matmul %110, %17, %cst_51 {dimension_numbers = #tpu.dot_dimension_numbers<[1], [0], [0], [1], [0, 0, 1, 1], [], []>} : vector<4x32xf32>, vector<32x128xf32>, vector<4x128xf32> -> vector<4x128xf32>
    %112 = arith.addf %27, %111 : vector<4x128xf32>
    %113 = vector.extract_strided_slice %112 {offsets = [0, 0], sizes = [4, 32], strides = [1, 1]} : vector<4x128xf32> to vector<4x32xf32>
    %cst_52 = arith.constant 5.000000e-01 : f32
    %114 = vector.broadcast %cst_52 : f32 to vector<4x32xf32>
    %115 = arith.mulf %114, %113 : vector<4x32xf32>
    %116 = math.tanh %115 : vector<4x32xf32>
    %cst_53 = arith.constant 1.000000e+00 : f32
    %117 = vector.broadcast %cst_53 : f32 to vector<4x32xf32>
    %118 = arith.addf %116, %117 : vector<4x32xf32>
    %cst_54 = arith.constant 5.000000e-01 : f32
    %119 = vector.broadcast %cst_54 : f32 to vector<4x32xf32>
    %120 = arith.mulf %119, %118 : vector<4x32xf32>
    %121 = vector.extract_strided_slice %112 {offsets = [0, 32], sizes = [4, 32], strides = [1, 1]} : vector<4x128xf32> to vector<4x32xf32>
    %cst_55 = arith.constant 5.000000e-01 : f32
    %122 = vector.broadcast %cst_55 : f32 to vector<4x32xf32>
    %123 = arith.mulf %122, %121 : vector<4x32xf32>
    %124 = math.tanh %123 : vector<4x32xf32>
    %cst_56 = arith.constant 1.000000e+00 : f32
    %125 = vector.broadcast %cst_56 : f32 to vector<4x32xf32>
    %126 = arith.addf %124, %125 : vector<4x32xf32>
    %cst_57 = arith.constant 5.000000e-01 : f32
    %127 = vector.broadcast %cst_57 : f32 to vector<4x32xf32>
    %128 = arith.mulf %127, %126 : vector<4x32xf32>
    %129 = vector.extract_strided_slice %112 {offsets = [0, 64], sizes = [4, 32], strides = [1, 1]} : vector<4x128xf32> to vector<4x32xf32>
    %130 = math.tanh %129 : vector<4x32xf32>
    %131 = vector.extract_strided_slice %112 {offsets = [0, 96], sizes = [4, 32], strides = [1, 1]} : vector<4x128xf32> to vector<4x32xf32>
    %cst_58 = arith.constant 5.000000e-01 : f32
    %132 = vector.broadcast %cst_58 : f32 to vector<4x32xf32>
    %133 = arith.mulf %132, %131 : vector<4x32xf32>
    %134 = math.tanh %133 : vector<4x32xf32>
    %cst_59 = arith.constant 1.000000e+00 : f32
    %135 = vector.broadcast %cst_59 : f32 to vector<4x32xf32>
    %136 = arith.addf %134, %135 : vector<4x32xf32>
    %cst_60 = arith.constant 5.000000e-01 : f32
    %137 = vector.broadcast %cst_60 : f32 to vector<4x32xf32>
    %138 = arith.mulf %137, %136 : vector<4x32xf32>
    %139 = arith.mulf %128, %108 : vector<4x32xf32>
    %140 = arith.mulf %120, %130 : vector<4x32xf32>
    %141 = arith.addf %139, %140 : vector<4x32xf32>
    %142 = math.tanh %141 : vector<4x32xf32>
    %143 = arith.mulf %138, %142 : vector<4x32xf32>
    %cst_61 = arith.constant dense<0.000000e+00> : vector<4x128xf32>
    %144 = tpu.matmul %143, %17, %cst_61 {dimension_numbers = #tpu.dot_dimension_numbers<[1], [0], [0], [1], [0, 0, 1, 1], [], []>} : vector<4x32xf32>, vector<32x128xf32>, vector<4x128xf32> -> vector<4x128xf32>
    %145 = arith.addf %30, %144 : vector<4x128xf32>
    %146 = vector.extract_strided_slice %145 {offsets = [0, 0], sizes = [4, 32], strides = [1, 1]} : vector<4x128xf32> to vector<4x32xf32>
    %cst_62 = arith.constant 5.000000e-01 : f32
    %147 = vector.broadcast %cst_62 : f32 to vector<4x32xf32>
    %148 = arith.mulf %147, %146 : vector<4x32xf32>
    %149 = math.tanh %148 : vector<4x32xf32>
    %cst_63 = arith.constant 1.000000e+00 : f32
    %150 = vector.broadcast %cst_63 : f32 to vector<4x32xf32>
    %151 = arith.addf %149, %150 : vector<4x32xf32>
    %cst_64 = arith.constant 5.000000e-01 : f32
    %152 = vector.broadcast %cst_64 : f32 to vector<4x32xf32>
    %153 = arith.mulf %152, %151 : vector<4x32xf32>
    %154 = vector.extract_strided_slice %145 {offsets = [0, 32], sizes = [4, 32], strides = [1, 1]} : vector<4x128xf32> to vector<4x32xf32>
    %cst_65 = arith.constant 5.000000e-01 : f32
    %155 = vector.broadcast %cst_65 : f32 to vector<4x32xf32>
    %156 = arith.mulf %155, %154 : vector<4x32xf32>
    %157 = math.tanh %156 : vector<4x32xf32>
    %cst_66 = arith.constant 1.000000e+00 : f32
    %158 = vector.broadcast %cst_66 : f32 to vector<4x32xf32>
    %159 = arith.addf %157, %158 : vector<4x32xf32>
    %cst_67 = arith.constant 5.000000e-01 : f32
    %160 = vector.broadcast %cst_67 : f32 to vector<4x32xf32>
    %161 = arith.mulf %160, %159 : vector<4x32xf32>
    %162 = vector.extract_strided_slice %145 {offsets = [0, 64], sizes = [4, 32], strides = [1, 1]} : vector<4x128xf32> to vector<4x32xf32>
    %163 = math.tanh %162 : vector<4x32xf32>
    %164 = vector.extract_strided_slice %145 {offsets = [0, 96], sizes = [4, 32], strides = [1, 1]} : vector<4x128xf32> to vector<4x32xf32>
    %cst_68 = arith.constant 5.000000e-01 : f32
    %165 = vector.broadcast %cst_68 : f32 to vector<4x32xf32>
    %166 = arith.mulf %165, %164 : vector<4x32xf32>
    %167 = math.tanh %166 : vector<4x32xf32>
    %cst_69 = arith.constant 1.000000e+00 : f32
    %168 = vector.broadcast %cst_69 : f32 to vector<4x32xf32>
    %169 = arith.addf %167, %168 : vector<4x32xf32>
    %cst_70 = arith.constant 5.000000e-01 : f32
    %170 = vector.broadcast %cst_70 : f32 to vector<4x32xf32>
    %171 = arith.mulf %170, %169 : vector<4x32xf32>
    %172 = arith.mulf %161, %141 : vector<4x32xf32>
    %173 = arith.mulf %153, %163 : vector<4x32xf32>
    %174 = arith.addf %172, %173 : vector<4x32xf32>
    %175 = math.tanh %174 : vector<4x32xf32>
    %176 = arith.mulf %171, %175 : vector<4x32xf32>
    %cst_71 = arith.constant dense<0.000000e+00> : vector<4x128xf32>
    %177 = tpu.matmul %176, %17, %cst_71 {dimension_numbers = #tpu.dot_dimension_numbers<[1], [0], [0], [1], [0, 0, 1, 1], [], []>} : vector<4x32xf32>, vector<32x128xf32>, vector<4x128xf32> -> vector<4x128xf32>
    %178 = arith.addf %33, %177 : vector<4x128xf32>
    %179 = vector.extract_strided_slice %178 {offsets = [0, 0], sizes = [4, 32], strides = [1, 1]} : vector<4x128xf32> to vector<4x32xf32>
    %cst_72 = arith.constant 5.000000e-01 : f32
    %180 = vector.broadcast %cst_72 : f32 to vector<4x32xf32>
    %181 = arith.mulf %180, %179 : vector<4x32xf32>
    %182 = math.tanh %181 : vector<4x32xf32>
    %cst_73 = arith.constant 1.000000e+00 : f32
    %183 = vector.broadcast %cst_73 : f32 to vector<4x32xf32>
    %184 = arith.addf %182, %183 : vector<4x32xf32>
    %cst_74 = arith.constant 5.000000e-01 : f32
    %185 = vector.broadcast %cst_74 : f32 to vector<4x32xf32>
    %186 = arith.mulf %185, %184 : vector<4x32xf32>
    %187 = vector.extract_strided_slice %178 {offsets = [0, 32], sizes = [4, 32], strides = [1, 1]} : vector<4x128xf32> to vector<4x32xf32>
    %cst_75 = arith.constant 5.000000e-01 : f32
    %188 = vector.broadcast %cst_75 : f32 to vector<4x32xf32>
    %189 = arith.mulf %188, %187 : vector<4x32xf32>
    %190 = math.tanh %189 : vector<4x32xf32>
    %cst_76 = arith.constant 1.000000e+00 : f32
    %191 = vector.broadcast %cst_76 : f32 to vector<4x32xf32>
    %192 = arith.addf %190, %191 : vector<4x32xf32>
    %cst_77 = arith.constant 5.000000e-01 : f32
    %193 = vector.broadcast %cst_77 : f32 to vector<4x32xf32>
    %194 = arith.mulf %193, %192 : vector<4x32xf32>
    %195 = vector.extract_strided_slice %178 {offsets = [0, 64], sizes = [4, 32], strides = [1, 1]} : vector<4x128xf32> to vector<4x32xf32>
    %196 = math.tanh %195 : vector<4x32xf32>
    %197 = vector.extract_strided_slice %178 {offsets = [0, 96], sizes = [4, 32], strides = [1, 1]} : vector<4x128xf32> to vector<4x32xf32>
    %cst_78 = arith.constant 5.000000e-01 : f32
    %198 = vector.broadcast %cst_78 : f32 to vector<4x32xf32>
    %199 = arith.mulf %198, %197 : vector<4x32xf32>
    %200 = math.tanh %199 : vector<4x32xf32>
    %cst_79 = arith.constant 1.000000e+00 : f32
    %201 = vector.broadcast %cst_79 : f32 to vector<4x32xf32>
    %202 = arith.addf %200, %201 : vector<4x32xf32>
    %cst_80 = arith.constant 5.000000e-01 : f32
    %203 = vector.broadcast %cst_80 : f32 to vector<4x32xf32>
    %204 = arith.mulf %203, %202 : vector<4x32xf32>
    %205 = arith.mulf %194, %174 : vector<4x32xf32>
    %206 = arith.mulf %186, %196 : vector<4x32xf32>
    %207 = arith.addf %205, %206 : vector<4x32xf32>
    %208 = math.tanh %207 : vector<4x32xf32>
    %209 = arith.mulf %204, %208 : vector<4x32xf32>
    %cst_81 = arith.constant dense<0.000000e+00> : vector<4x128xf32>
    %210 = tpu.matmul %209, %17, %cst_81 {dimension_numbers = #tpu.dot_dimension_numbers<[1], [0], [0], [1], [0, 0, 1, 1], [], []>} : vector<4x32xf32>, vector<32x128xf32>, vector<4x128xf32> -> vector<4x128xf32>
    %211 = arith.addf %36, %210 : vector<4x128xf32>
    %212 = vector.extract_strided_slice %211 {offsets = [0, 0], sizes = [4, 32], strides = [1, 1]} : vector<4x128xf32> to vector<4x32xf32>
    %cst_82 = arith.constant 5.000000e-01 : f32
    %213 = vector.broadcast %cst_82 : f32 to vector<4x32xf32>
    %214 = arith.mulf %213, %212 : vector<4x32xf32>
    %215 = math.tanh %214 : vector<4x32xf32>
    %cst_83 = arith.constant 1.000000e+00 : f32
    %216 = vector.broadcast %cst_83 : f32 to vector<4x32xf32>
    %217 = arith.addf %215, %216 : vector<4x32xf32>
    %cst_84 = arith.constant 5.000000e-01 : f32
    %218 = vector.broadcast %cst_84 : f32 to vector<4x32xf32>
    %219 = arith.mulf %218, %217 : vector<4x32xf32>
    %220 = vector.extract_strided_slice %211 {offsets = [0, 32], sizes = [4, 32], strides = [1, 1]} : vector<4x128xf32> to vector<4x32xf32>
    %cst_85 = arith.constant 5.000000e-01 : f32
    %221 = vector.broadcast %cst_85 : f32 to vector<4x32xf32>
    %222 = arith.mulf %221, %220 : vector<4x32xf32>
    %223 = math.tanh %222 : vector<4x32xf32>
    %cst_86 = arith.constant 1.000000e+00 : f32
    %224 = vector.broadcast %cst_86 : f32 to vector<4x32xf32>
    %225 = arith.addf %223, %224 : vector<4x32xf32>
    %cst_87 = arith.constant 5.000000e-01 : f32
    %226 = vector.broadcast %cst_87 : f32 to vector<4x32xf32>
    %227 = arith.mulf %226, %225 : vector<4x32xf32>
    %228 = vector.extract_strided_slice %211 {offsets = [0, 64], sizes = [4, 32], strides = [1, 1]} : vector<4x128xf32> to vector<4x32xf32>
    %229 = math.tanh %228 : vector<4x32xf32>
    %230 = vector.extract_strided_slice %211 {offsets = [0, 96], sizes = [4, 32], strides = [1, 1]} : vector<4x128xf32> to vector<4x32xf32>
    %cst_88 = arith.constant 5.000000e-01 : f32
    %231 = vector.broadcast %cst_88 : f32 to vector<4x32xf32>
    %232 = arith.mulf %231, %230 : vector<4x32xf32>
    %233 = math.tanh %232 : vector<4x32xf32>
    %cst_89 = arith.constant 1.000000e+00 : f32
    %234 = vector.broadcast %cst_89 : f32 to vector<4x32xf32>
    %235 = arith.addf %233, %234 : vector<4x32xf32>
    %cst_90 = arith.constant 5.000000e-01 : f32
    %236 = vector.broadcast %cst_90 : f32 to vector<4x32xf32>
    %237 = arith.mulf %236, %235 : vector<4x32xf32>
    %238 = arith.mulf %227, %207 : vector<4x32xf32>
    %239 = arith.mulf %219, %229 : vector<4x32xf32>
    %240 = arith.addf %238, %239 : vector<4x32xf32>
    %241 = math.tanh %240 : vector<4x32xf32>
    %242 = arith.mulf %237, %241 : vector<4x32xf32>
    %cst_91 = arith.constant dense<0.000000e+00> : vector<4x128xf32>
    %243 = tpu.matmul %242, %17, %cst_91 {dimension_numbers = #tpu.dot_dimension_numbers<[1], [0], [0], [1], [0, 0, 1, 1], [], []>} : vector<4x32xf32>, vector<32x128xf32>, vector<4x128xf32> -> vector<4x128xf32>
    %244 = arith.addf %39, %243 : vector<4x128xf32>
    %245 = vector.extract_strided_slice %244 {offsets = [0, 0], sizes = [4, 32], strides = [1, 1]} : vector<4x128xf32> to vector<4x32xf32>
    %cst_92 = arith.constant 5.000000e-01 : f32
    %246 = vector.broadcast %cst_92 : f32 to vector<4x32xf32>
    %247 = arith.mulf %246, %245 : vector<4x32xf32>
    %248 = math.tanh %247 : vector<4x32xf32>
    %cst_93 = arith.constant 1.000000e+00 : f32
    %249 = vector.broadcast %cst_93 : f32 to vector<4x32xf32>
    %250 = arith.addf %248, %249 : vector<4x32xf32>
    %cst_94 = arith.constant 5.000000e-01 : f32
    %251 = vector.broadcast %cst_94 : f32 to vector<4x32xf32>
    %252 = arith.mulf %251, %250 : vector<4x32xf32>
    %253 = vector.extract_strided_slice %244 {offsets = [0, 32], sizes = [4, 32], strides = [1, 1]} : vector<4x128xf32> to vector<4x32xf32>
    %cst_95 = arith.constant 5.000000e-01 : f32
    %254 = vector.broadcast %cst_95 : f32 to vector<4x32xf32>
    %255 = arith.mulf %254, %253 : vector<4x32xf32>
    %256 = math.tanh %255 : vector<4x32xf32>
    %cst_96 = arith.constant 1.000000e+00 : f32
    %257 = vector.broadcast %cst_96 : f32 to vector<4x32xf32>
    %258 = arith.addf %256, %257 : vector<4x32xf32>
    %cst_97 = arith.constant 5.000000e-01 : f32
    %259 = vector.broadcast %cst_97 : f32 to vector<4x32xf32>
    %260 = arith.mulf %259, %258 : vector<4x32xf32>
    %261 = vector.extract_strided_slice %244 {offsets = [0, 64], sizes = [4, 32], strides = [1, 1]} : vector<4x128xf32> to vector<4x32xf32>
    %262 = math.tanh %261 : vector<4x32xf32>
    %263 = vector.extract_strided_slice %244 {offsets = [0, 96], sizes = [4, 32], strides = [1, 1]} : vector<4x128xf32> to vector<4x32xf32>
    %cst_98 = arith.constant 5.000000e-01 : f32
    %264 = vector.broadcast %cst_98 : f32 to vector<4x32xf32>
    %265 = arith.mulf %264, %263 : vector<4x32xf32>
    %266 = math.tanh %265 : vector<4x32xf32>
    %cst_99 = arith.constant 1.000000e+00 : f32
    %267 = vector.broadcast %cst_99 : f32 to vector<4x32xf32>
    %268 = arith.addf %266, %267 : vector<4x32xf32>
    %cst_100 = arith.constant 5.000000e-01 : f32
    %269 = vector.broadcast %cst_100 : f32 to vector<4x32xf32>
    %270 = arith.mulf %269, %268 : vector<4x32xf32>
    %271 = arith.mulf %260, %240 : vector<4x32xf32>
    %272 = arith.mulf %252, %262 : vector<4x32xf32>
    %273 = arith.addf %271, %272 : vector<4x32xf32>
    %274 = math.tanh %273 : vector<4x32xf32>
    %275 = arith.mulf %270, %274 : vector<4x32xf32>
    %cst_101 = arith.constant dense<0.000000e+00> : vector<4x128xf32>
    %276 = tpu.matmul %275, %17, %cst_101 {dimension_numbers = #tpu.dot_dimension_numbers<[1], [0], [0], [1], [0, 0, 1, 1], [], []>} : vector<4x32xf32>, vector<32x128xf32>, vector<4x128xf32> -> vector<4x128xf32>
    %277 = arith.addf %42, %276 : vector<4x128xf32>
    %278 = vector.extract_strided_slice %277 {offsets = [0, 0], sizes = [4, 32], strides = [1, 1]} : vector<4x128xf32> to vector<4x32xf32>
    %cst_102 = arith.constant 5.000000e-01 : f32
    %279 = vector.broadcast %cst_102 : f32 to vector<4x32xf32>
    %280 = arith.mulf %279, %278 : vector<4x32xf32>
    %281 = math.tanh %280 : vector<4x32xf32>
    %cst_103 = arith.constant 1.000000e+00 : f32
    %282 = vector.broadcast %cst_103 : f32 to vector<4x32xf32>
    %283 = arith.addf %281, %282 : vector<4x32xf32>
    %cst_104 = arith.constant 5.000000e-01 : f32
    %284 = vector.broadcast %cst_104 : f32 to vector<4x32xf32>
    %285 = arith.mulf %284, %283 : vector<4x32xf32>
    %286 = vector.extract_strided_slice %277 {offsets = [0, 32], sizes = [4, 32], strides = [1, 1]} : vector<4x128xf32> to vector<4x32xf32>
    %cst_105 = arith.constant 5.000000e-01 : f32
    %287 = vector.broadcast %cst_105 : f32 to vector<4x32xf32>
    %288 = arith.mulf %287, %286 : vector<4x32xf32>
    %289 = math.tanh %288 : vector<4x32xf32>
    %cst_106 = arith.constant 1.000000e+00 : f32
    %290 = vector.broadcast %cst_106 : f32 to vector<4x32xf32>
    %291 = arith.addf %289, %290 : vector<4x32xf32>
    %cst_107 = arith.constant 5.000000e-01 : f32
    %292 = vector.broadcast %cst_107 : f32 to vector<4x32xf32>
    %293 = arith.mulf %292, %291 : vector<4x32xf32>
    %294 = vector.extract_strided_slice %277 {offsets = [0, 64], sizes = [4, 32], strides = [1, 1]} : vector<4x128xf32> to vector<4x32xf32>
    %295 = math.tanh %294 : vector<4x32xf32>
    %296 = vector.extract_strided_slice %277 {offsets = [0, 96], sizes = [4, 32], strides = [1, 1]} : vector<4x128xf32> to vector<4x32xf32>
    %cst_108 = arith.constant 5.000000e-01 : f32
    %297 = vector.broadcast %cst_108 : f32 to vector<4x32xf32>
    %298 = arith.mulf %297, %296 : vector<4x32xf32>
    %299 = math.tanh %298 : vector<4x32xf32>
    %cst_109 = arith.constant 1.000000e+00 : f32
    %300 = vector.broadcast %cst_109 : f32 to vector<4x32xf32>
    %301 = arith.addf %299, %300 : vector<4x32xf32>
    %cst_110 = arith.constant 5.000000e-01 : f32
    %302 = vector.broadcast %cst_110 : f32 to vector<4x32xf32>
    %303 = arith.mulf %302, %301 : vector<4x32xf32>
    %304 = arith.mulf %293, %273 : vector<4x32xf32>
    %305 = arith.mulf %285, %295 : vector<4x32xf32>
    %306 = arith.addf %304, %305 : vector<4x32xf32>
    %307 = math.tanh %306 : vector<4x32xf32>
    %308 = arith.mulf %303, %307 : vector<4x32xf32>
    %c0_111 = arith.constant 0 : index
    %c0_112 = arith.constant 0 : index
    %309 = vector.load %arg6[%c0_111, %c0_112] : memref<32x128xf32, #tpu.memory_space<vmem>>, vector<32x128xf32>
    %c0_113 = arith.constant 0 : index
    %c0_114 = arith.constant 0 : index
    %310 = vector.load %arg7[%c0_113, %c0_114] : memref<32x128xf32, #tpu.memory_space<vmem>>, vector<32x128xf32>
    %c0_115 = arith.constant 0 : index
    %c0_116 = arith.constant 0 : index
    %311 = vector.load %arg8[%c0_115, %c0_116] : memref<1x128xf32, #tpu.memory_space<vmem>>, vector<1x128xf32>
    %cst_117 = arith.constant dense<0.000000e+00> : vector<4x128xf32>
    %312 = tpu.matmul %77, %309, %cst_117 {dimension_numbers = #tpu.dot_dimension_numbers<[1], [0], [0], [1], [0, 0, 1, 1], [], []>} : vector<4x32xf32>, vector<32x128xf32>, vector<4x128xf32> -> vector<4x128xf32>
    %313 = vector.broadcast %311 : vector<1x128xf32> to vector<4x128xf32>
    %314 = arith.addf %312, %313 : vector<4x128xf32>
    %cst_118 = arith.constant dense<0.000000e+00> : vector<4x128xf32>
    %315 = tpu.matmul %110, %309, %cst_118 {dimension_numbers = #tpu.dot_dimension_numbers<[1], [0], [0], [1], [0, 0, 1, 1], [], []>} : vector<4x32xf32>, vector<32x128xf32>, vector<4x128xf32> -> vector<4x128xf32>
    %316 = vector.broadcast %311 : vector<1x128xf32> to vector<4x128xf32>
    %317 = arith.addf %315, %316 : vector<4x128xf32>
    %cst_119 = arith.constant dense<0.000000e+00> : vector<4x128xf32>
    %318 = tpu.matmul %143, %309, %cst_119 {dimension_numbers = #tpu.dot_dimension_numbers<[1], [0], [0], [1], [0, 0, 1, 1], [], []>} : vector<4x32xf32>, vector<32x128xf32>, vector<4x128xf32> -> vector<4x128xf32>
    %319 = vector.broadcast %311 : vector<1x128xf32> to vector<4x128xf32>
    %320 = arith.addf %318, %319 : vector<4x128xf32>
    %cst_120 = arith.constant dense<0.000000e+00> : vector<4x128xf32>
    %321 = tpu.matmul %176, %309, %cst_120 {dimension_numbers = #tpu.dot_dimension_numbers<[1], [0], [0], [1], [0, 0, 1, 1], [], []>} : vector<4x32xf32>, vector<32x128xf32>, vector<4x128xf32> -> vector<4x128xf32>
    %322 = vector.broadcast %311 : vector<1x128xf32> to vector<4x128xf32>
    %323 = arith.addf %321, %322 : vector<4x128xf32>
    %cst_121 = arith.constant dense<0.000000e+00> : vector<4x128xf32>
    %324 = tpu.matmul %209, %309, %cst_121 {dimension_numbers = #tpu.dot_dimension_numbers<[1], [0], [0], [1], [0, 0, 1, 1], [], []>} : vector<4x32xf32>, vector<32x128xf32>, vector<4x128xf32> -> vector<4x128xf32>
    %325 = vector.broadcast %311 : vector<1x128xf32> to vector<4x128xf32>
    %326 = arith.addf %324, %325 : vector<4x128xf32>
    %cst_122 = arith.constant dense<0.000000e+00> : vector<4x128xf32>
    %327 = tpu.matmul %242, %309, %cst_122 {dimension_numbers = #tpu.dot_dimension_numbers<[1], [0], [0], [1], [0, 0, 1, 1], [], []>} : vector<4x32xf32>, vector<32x128xf32>, vector<4x128xf32> -> vector<4x128xf32>
    %328 = vector.broadcast %311 : vector<1x128xf32> to vector<4x128xf32>
    %329 = arith.addf %327, %328 : vector<4x128xf32>
    %cst_123 = arith.constant dense<0.000000e+00> : vector<4x128xf32>
    %330 = tpu.matmul %275, %309, %cst_123 {dimension_numbers = #tpu.dot_dimension_numbers<[1], [0], [0], [1], [0, 0, 1, 1], [], []>} : vector<4x32xf32>, vector<32x128xf32>, vector<4x128xf32> -> vector<4x128xf32>
    %331 = vector.broadcast %311 : vector<1x128xf32> to vector<4x128xf32>
    %332 = arith.addf %330, %331 : vector<4x128xf32>
    %cst_124 = arith.constant dense<0.000000e+00> : vector<4x128xf32>
    %333 = tpu.matmul %308, %309, %cst_124 {dimension_numbers = #tpu.dot_dimension_numbers<[1], [0], [0], [1], [0, 0, 1, 1], [], []>} : vector<4x32xf32>, vector<32x128xf32>, vector<4x128xf32> -> vector<4x128xf32>
    %334 = vector.broadcast %311 : vector<1x128xf32> to vector<4x128xf32>
    %335 = arith.addf %333, %334 : vector<4x128xf32>
    %cst_125 = arith.constant 0.000000e+00 : f32
    %336 = vector.broadcast %cst_125 : f32 to vector<4x32xf32>
    %cst_126 = arith.constant 0.000000e+00 : f32
    %337 = vector.broadcast %cst_126 : f32 to vector<4x32xf32>
    %cst_127 = arith.constant dense<0.000000e+00> : vector<4x128xf32>
    %338 = tpu.matmul %336, %310, %cst_127 {dimension_numbers = #tpu.dot_dimension_numbers<[1], [0], [0], [1], [0, 0, 1, 1], [], []>} : vector<4x32xf32>, vector<32x128xf32>, vector<4x128xf32> -> vector<4x128xf32>
    %339 = arith.addf %314, %338 : vector<4x128xf32>
    %340 = vector.extract_strided_slice %339 {offsets = [0, 0], sizes = [4, 32], strides = [1, 1]} : vector<4x128xf32> to vector<4x32xf32>
    %cst_128 = arith.constant 5.000000e-01 : f32
    %341 = vector.broadcast %cst_128 : f32 to vector<4x32xf32>
    %342 = arith.mulf %341, %340 : vector<4x32xf32>
    %343 = math.tanh %342 : vector<4x32xf32>
    %cst_129 = arith.constant 1.000000e+00 : f32
    %344 = vector.broadcast %cst_129 : f32 to vector<4x32xf32>
    %345 = arith.addf %343, %344 : vector<4x32xf32>
    %cst_130 = arith.constant 5.000000e-01 : f32
    %346 = vector.broadcast %cst_130 : f32 to vector<4x32xf32>
    %347 = arith.mulf %346, %345 : vector<4x32xf32>
    %348 = vector.extract_strided_slice %339 {offsets = [0, 32], sizes = [4, 32], strides = [1, 1]} : vector<4x128xf32> to vector<4x32xf32>
    %cst_131 = arith.constant 5.000000e-01 : f32
    %349 = vector.broadcast %cst_131 : f32 to vector<4x32xf32>
    %350 = arith.mulf %349, %348 : vector<4x32xf32>
    %351 = math.tanh %350 : vector<4x32xf32>
    %cst_132 = arith.constant 1.000000e+00 : f32
    %352 = vector.broadcast %cst_132 : f32 to vector<4x32xf32>
    %353 = arith.addf %351, %352 : vector<4x32xf32>
    %cst_133 = arith.constant 5.000000e-01 : f32
    %354 = vector.broadcast %cst_133 : f32 to vector<4x32xf32>
    %355 = arith.mulf %354, %353 : vector<4x32xf32>
    %356 = vector.extract_strided_slice %339 {offsets = [0, 64], sizes = [4, 32], strides = [1, 1]} : vector<4x128xf32> to vector<4x32xf32>
    %357 = math.tanh %356 : vector<4x32xf32>
    %358 = vector.extract_strided_slice %339 {offsets = [0, 96], sizes = [4, 32], strides = [1, 1]} : vector<4x128xf32> to vector<4x32xf32>
    %cst_134 = arith.constant 5.000000e-01 : f32
    %359 = vector.broadcast %cst_134 : f32 to vector<4x32xf32>
    %360 = arith.mulf %359, %358 : vector<4x32xf32>
    %361 = math.tanh %360 : vector<4x32xf32>
    %cst_135 = arith.constant 1.000000e+00 : f32
    %362 = vector.broadcast %cst_135 : f32 to vector<4x32xf32>
    %363 = arith.addf %361, %362 : vector<4x32xf32>
    %cst_136 = arith.constant 5.000000e-01 : f32
    %364 = vector.broadcast %cst_136 : f32 to vector<4x32xf32>
    %365 = arith.mulf %364, %363 : vector<4x32xf32>
    %366 = arith.mulf %355, %337 : vector<4x32xf32>
    %367 = arith.mulf %347, %357 : vector<4x32xf32>
    %368 = arith.addf %366, %367 : vector<4x32xf32>
    %369 = math.tanh %368 : vector<4x32xf32>
    %370 = arith.mulf %365, %369 : vector<4x32xf32>
    %cst_137 = arith.constant dense<0.000000e+00> : vector<4x128xf32>
    %371 = tpu.matmul %370, %310, %cst_137 {dimension_numbers = #tpu.dot_dimension_numbers<[1], [0], [0], [1], [0, 0, 1, 1], [], []>} : vector<4x32xf32>, vector<32x128xf32>, vector<4x128xf32> -> vector<4x128xf32>
    %372 = arith.addf %317, %371 : vector<4x128xf32>
    %373 = vector.extract_strided_slice %372 {offsets = [0, 0], sizes = [4, 32], strides = [1, 1]} : vector<4x128xf32> to vector<4x32xf32>
    %cst_138 = arith.constant 5.000000e-01 : f32
    %374 = vector.broadcast %cst_138 : f32 to vector<4x32xf32>
    %375 = arith.mulf %374, %373 : vector<4x32xf32>
    %376 = math.tanh %375 : vector<4x32xf32>
    %cst_139 = arith.constant 1.000000e+00 : f32
    %377 = vector.broadcast %cst_139 : f32 to vector<4x32xf32>
    %378 = arith.addf %376, %377 : vector<4x32xf32>
    %cst_140 = arith.constant 5.000000e-01 : f32
    %379 = vector.broadcast %cst_140 : f32 to vector<4x32xf32>
    %380 = arith.mulf %379, %378 : vector<4x32xf32>
    %381 = vector.extract_strided_slice %372 {offsets = [0, 32], sizes = [4, 32], strides = [1, 1]} : vector<4x128xf32> to vector<4x32xf32>
    %cst_141 = arith.constant 5.000000e-01 : f32
    %382 = vector.broadcast %cst_141 : f32 to vector<4x32xf32>
    %383 = arith.mulf %382, %381 : vector<4x32xf32>
    %384 = math.tanh %383 : vector<4x32xf32>
    %cst_142 = arith.constant 1.000000e+00 : f32
    %385 = vector.broadcast %cst_142 : f32 to vector<4x32xf32>
    %386 = arith.addf %384, %385 : vector<4x32xf32>
    %cst_143 = arith.constant 5.000000e-01 : f32
    %387 = vector.broadcast %cst_143 : f32 to vector<4x32xf32>
    %388 = arith.mulf %387, %386 : vector<4x32xf32>
    %389 = vector.extract_strided_slice %372 {offsets = [0, 64], sizes = [4, 32], strides = [1, 1]} : vector<4x128xf32> to vector<4x32xf32>
    %390 = math.tanh %389 : vector<4x32xf32>
    %391 = vector.extract_strided_slice %372 {offsets = [0, 96], sizes = [4, 32], strides = [1, 1]} : vector<4x128xf32> to vector<4x32xf32>
    %cst_144 = arith.constant 5.000000e-01 : f32
    %392 = vector.broadcast %cst_144 : f32 to vector<4x32xf32>
    %393 = arith.mulf %392, %391 : vector<4x32xf32>
    %394 = math.tanh %393 : vector<4x32xf32>
    %cst_145 = arith.constant 1.000000e+00 : f32
    %395 = vector.broadcast %cst_145 : f32 to vector<4x32xf32>
    %396 = arith.addf %394, %395 : vector<4x32xf32>
    %cst_146 = arith.constant 5.000000e-01 : f32
    %397 = vector.broadcast %cst_146 : f32 to vector<4x32xf32>
    %398 = arith.mulf %397, %396 : vector<4x32xf32>
    %399 = arith.mulf %388, %368 : vector<4x32xf32>
    %400 = arith.mulf %380, %390 : vector<4x32xf32>
    %401 = arith.addf %399, %400 : vector<4x32xf32>
    %402 = math.tanh %401 : vector<4x32xf32>
    %403 = arith.mulf %398, %402 : vector<4x32xf32>
    %cst_147 = arith.constant dense<0.000000e+00> : vector<4x128xf32>
    %404 = tpu.matmul %403, %310, %cst_147 {dimension_numbers = #tpu.dot_dimension_numbers<[1], [0], [0], [1], [0, 0, 1, 1], [], []>} : vector<4x32xf32>, vector<32x128xf32>, vector<4x128xf32> -> vector<4x128xf32>
    %405 = arith.addf %320, %404 : vector<4x128xf32>
    %406 = vector.extract_strided_slice %405 {offsets = [0, 0], sizes = [4, 32], strides = [1, 1]} : vector<4x128xf32> to vector<4x32xf32>
    %cst_148 = arith.constant 5.000000e-01 : f32
    %407 = vector.broadcast %cst_148 : f32 to vector<4x32xf32>
    %408 = arith.mulf %407, %406 : vector<4x32xf32>
    %409 = math.tanh %408 : vector<4x32xf32>
    %cst_149 = arith.constant 1.000000e+00 : f32
    %410 = vector.broadcast %cst_149 : f32 to vector<4x32xf32>
    %411 = arith.addf %409, %410 : vector<4x32xf32>
    %cst_150 = arith.constant 5.000000e-01 : f32
    %412 = vector.broadcast %cst_150 : f32 to vector<4x32xf32>
    %413 = arith.mulf %412, %411 : vector<4x32xf32>
    %414 = vector.extract_strided_slice %405 {offsets = [0, 32], sizes = [4, 32], strides = [1, 1]} : vector<4x128xf32> to vector<4x32xf32>
    %cst_151 = arith.constant 5.000000e-01 : f32
    %415 = vector.broadcast %cst_151 : f32 to vector<4x32xf32>
    %416 = arith.mulf %415, %414 : vector<4x32xf32>
    %417 = math.tanh %416 : vector<4x32xf32>
    %cst_152 = arith.constant 1.000000e+00 : f32
    %418 = vector.broadcast %cst_152 : f32 to vector<4x32xf32>
    %419 = arith.addf %417, %418 : vector<4x32xf32>
    %cst_153 = arith.constant 5.000000e-01 : f32
    %420 = vector.broadcast %cst_153 : f32 to vector<4x32xf32>
    %421 = arith.mulf %420, %419 : vector<4x32xf32>
    %422 = vector.extract_strided_slice %405 {offsets = [0, 64], sizes = [4, 32], strides = [1, 1]} : vector<4x128xf32> to vector<4x32xf32>
    %423 = math.tanh %422 : vector<4x32xf32>
    %424 = vector.extract_strided_slice %405 {offsets = [0, 96], sizes = [4, 32], strides = [1, 1]} : vector<4x128xf32> to vector<4x32xf32>
    %cst_154 = arith.constant 5.000000e-01 : f32
    %425 = vector.broadcast %cst_154 : f32 to vector<4x32xf32>
    %426 = arith.mulf %425, %424 : vector<4x32xf32>
    %427 = math.tanh %426 : vector<4x32xf32>
    %cst_155 = arith.constant 1.000000e+00 : f32
    %428 = vector.broadcast %cst_155 : f32 to vector<4x32xf32>
    %429 = arith.addf %427, %428 : vector<4x32xf32>
    %cst_156 = arith.constant 5.000000e-01 : f32
    %430 = vector.broadcast %cst_156 : f32 to vector<4x32xf32>
    %431 = arith.mulf %430, %429 : vector<4x32xf32>
    %432 = arith.mulf %421, %401 : vector<4x32xf32>
    %433 = arith.mulf %413, %423 : vector<4x32xf32>
    %434 = arith.addf %432, %433 : vector<4x32xf32>
    %435 = math.tanh %434 : vector<4x32xf32>
    %436 = arith.mulf %431, %435 : vector<4x32xf32>
    %cst_157 = arith.constant dense<0.000000e+00> : vector<4x128xf32>
    %437 = tpu.matmul %436, %310, %cst_157 {dimension_numbers = #tpu.dot_dimension_numbers<[1], [0], [0], [1], [0, 0, 1, 1], [], []>} : vector<4x32xf32>, vector<32x128xf32>, vector<4x128xf32> -> vector<4x128xf32>
    %438 = arith.addf %323, %437 : vector<4x128xf32>
    %439 = vector.extract_strided_slice %438 {offsets = [0, 0], sizes = [4, 32], strides = [1, 1]} : vector<4x128xf32> to vector<4x32xf32>
    %cst_158 = arith.constant 5.000000e-01 : f32
    %440 = vector.broadcast %cst_158 : f32 to vector<4x32xf32>
    %441 = arith.mulf %440, %439 : vector<4x32xf32>
    %442 = math.tanh %441 : vector<4x32xf32>
    %cst_159 = arith.constant 1.000000e+00 : f32
    %443 = vector.broadcast %cst_159 : f32 to vector<4x32xf32>
    %444 = arith.addf %442, %443 : vector<4x32xf32>
    %cst_160 = arith.constant 5.000000e-01 : f32
    %445 = vector.broadcast %cst_160 : f32 to vector<4x32xf32>
    %446 = arith.mulf %445, %444 : vector<4x32xf32>
    %447 = vector.extract_strided_slice %438 {offsets = [0, 32], sizes = [4, 32], strides = [1, 1]} : vector<4x128xf32> to vector<4x32xf32>
    %cst_161 = arith.constant 5.000000e-01 : f32
    %448 = vector.broadcast %cst_161 : f32 to vector<4x32xf32>
    %449 = arith.mulf %448, %447 : vector<4x32xf32>
    %450 = math.tanh %449 : vector<4x32xf32>
    %cst_162 = arith.constant 1.000000e+00 : f32
    %451 = vector.broadcast %cst_162 : f32 to vector<4x32xf32>
    %452 = arith.addf %450, %451 : vector<4x32xf32>
    %cst_163 = arith.constant 5.000000e-01 : f32
    %453 = vector.broadcast %cst_163 : f32 to vector<4x32xf32>
    %454 = arith.mulf %453, %452 : vector<4x32xf32>
    %455 = vector.extract_strided_slice %438 {offsets = [0, 64], sizes = [4, 32], strides = [1, 1]} : vector<4x128xf32> to vector<4x32xf32>
    %456 = math.tanh %455 : vector<4x32xf32>
    %457 = vector.extract_strided_slice %438 {offsets = [0, 96], sizes = [4, 32], strides = [1, 1]} : vector<4x128xf32> to vector<4x32xf32>
    %cst_164 = arith.constant 5.000000e-01 : f32
    %458 = vector.broadcast %cst_164 : f32 to vector<4x32xf32>
    %459 = arith.mulf %458, %457 : vector<4x32xf32>
    %460 = math.tanh %459 : vector<4x32xf32>
    %cst_165 = arith.constant 1.000000e+00 : f32
    %461 = vector.broadcast %cst_165 : f32 to vector<4x32xf32>
    %462 = arith.addf %460, %461 : vector<4x32xf32>
    %cst_166 = arith.constant 5.000000e-01 : f32
    %463 = vector.broadcast %cst_166 : f32 to vector<4x32xf32>
    %464 = arith.mulf %463, %462 : vector<4x32xf32>
    %465 = arith.mulf %454, %434 : vector<4x32xf32>
    %466 = arith.mulf %446, %456 : vector<4x32xf32>
    %467 = arith.addf %465, %466 : vector<4x32xf32>
    %468 = math.tanh %467 : vector<4x32xf32>
    %469 = arith.mulf %464, %468 : vector<4x32xf32>
    %cst_167 = arith.constant dense<0.000000e+00> : vector<4x128xf32>
    %470 = tpu.matmul %469, %310, %cst_167 {dimension_numbers = #tpu.dot_dimension_numbers<[1], [0], [0], [1], [0, 0, 1, 1], [], []>} : vector<4x32xf32>, vector<32x128xf32>, vector<4x128xf32> -> vector<4x128xf32>
    %471 = arith.addf %326, %470 : vector<4x128xf32>
    %472 = vector.extract_strided_slice %471 {offsets = [0, 0], sizes = [4, 32], strides = [1, 1]} : vector<4x128xf32> to vector<4x32xf32>
    %cst_168 = arith.constant 5.000000e-01 : f32
    %473 = vector.broadcast %cst_168 : f32 to vector<4x32xf32>
    %474 = arith.mulf %473, %472 : vector<4x32xf32>
    %475 = math.tanh %474 : vector<4x32xf32>
    %cst_169 = arith.constant 1.000000e+00 : f32
    %476 = vector.broadcast %cst_169 : f32 to vector<4x32xf32>
    %477 = arith.addf %475, %476 : vector<4x32xf32>
    %cst_170 = arith.constant 5.000000e-01 : f32
    %478 = vector.broadcast %cst_170 : f32 to vector<4x32xf32>
    %479 = arith.mulf %478, %477 : vector<4x32xf32>
    %480 = vector.extract_strided_slice %471 {offsets = [0, 32], sizes = [4, 32], strides = [1, 1]} : vector<4x128xf32> to vector<4x32xf32>
    %cst_171 = arith.constant 5.000000e-01 : f32
    %481 = vector.broadcast %cst_171 : f32 to vector<4x32xf32>
    %482 = arith.mulf %481, %480 : vector<4x32xf32>
    %483 = math.tanh %482 : vector<4x32xf32>
    %cst_172 = arith.constant 1.000000e+00 : f32
    %484 = vector.broadcast %cst_172 : f32 to vector<4x32xf32>
    %485 = arith.addf %483, %484 : vector<4x32xf32>
    %cst_173 = arith.constant 5.000000e-01 : f32
    %486 = vector.broadcast %cst_173 : f32 to vector<4x32xf32>
    %487 = arith.mulf %486, %485 : vector<4x32xf32>
    %488 = vector.extract_strided_slice %471 {offsets = [0, 64], sizes = [4, 32], strides = [1, 1]} : vector<4x128xf32> to vector<4x32xf32>
    %489 = math.tanh %488 : vector<4x32xf32>
    %490 = vector.extract_strided_slice %471 {offsets = [0, 96], sizes = [4, 32], strides = [1, 1]} : vector<4x128xf32> to vector<4x32xf32>
    %cst_174 = arith.constant 5.000000e-01 : f32
    %491 = vector.broadcast %cst_174 : f32 to vector<4x32xf32>
    %492 = arith.mulf %491, %490 : vector<4x32xf32>
    %493 = math.tanh %492 : vector<4x32xf32>
    %cst_175 = arith.constant 1.000000e+00 : f32
    %494 = vector.broadcast %cst_175 : f32 to vector<4x32xf32>
    %495 = arith.addf %493, %494 : vector<4x32xf32>
    %cst_176 = arith.constant 5.000000e-01 : f32
    %496 = vector.broadcast %cst_176 : f32 to vector<4x32xf32>
    %497 = arith.mulf %496, %495 : vector<4x32xf32>
    %498 = arith.mulf %487, %467 : vector<4x32xf32>
    %499 = arith.mulf %479, %489 : vector<4x32xf32>
    %500 = arith.addf %498, %499 : vector<4x32xf32>
    %501 = math.tanh %500 : vector<4x32xf32>
    %502 = arith.mulf %497, %501 : vector<4x32xf32>
    %cst_177 = arith.constant dense<0.000000e+00> : vector<4x128xf32>
    %503 = tpu.matmul %502, %310, %cst_177 {dimension_numbers = #tpu.dot_dimension_numbers<[1], [0], [0], [1], [0, 0, 1, 1], [], []>} : vector<4x32xf32>, vector<32x128xf32>, vector<4x128xf32> -> vector<4x128xf32>
    %504 = arith.addf %329, %503 : vector<4x128xf32>
    %505 = vector.extract_strided_slice %504 {offsets = [0, 0], sizes = [4, 32], strides = [1, 1]} : vector<4x128xf32> to vector<4x32xf32>
    %cst_178 = arith.constant 5.000000e-01 : f32
    %506 = vector.broadcast %cst_178 : f32 to vector<4x32xf32>
    %507 = arith.mulf %506, %505 : vector<4x32xf32>
    %508 = math.tanh %507 : vector<4x32xf32>
    %cst_179 = arith.constant 1.000000e+00 : f32
    %509 = vector.broadcast %cst_179 : f32 to vector<4x32xf32>
    %510 = arith.addf %508, %509 : vector<4x32xf32>
    %cst_180 = arith.constant 5.000000e-01 : f32
    %511 = vector.broadcast %cst_180 : f32 to vector<4x32xf32>
    %512 = arith.mulf %511, %510 : vector<4x32xf32>
    %513 = vector.extract_strided_slice %504 {offsets = [0, 32], sizes = [4, 32], strides = [1, 1]} : vector<4x128xf32> to vector<4x32xf32>
    %cst_181 = arith.constant 5.000000e-01 : f32
    %514 = vector.broadcast %cst_181 : f32 to vector<4x32xf32>
    %515 = arith.mulf %514, %513 : vector<4x32xf32>
    %516 = math.tanh %515 : vector<4x32xf32>
    %cst_182 = arith.constant 1.000000e+00 : f32
    %517 = vector.broadcast %cst_182 : f32 to vector<4x32xf32>
    %518 = arith.addf %516, %517 : vector<4x32xf32>
    %cst_183 = arith.constant 5.000000e-01 : f32
    %519 = vector.broadcast %cst_183 : f32 to vector<4x32xf32>
    %520 = arith.mulf %519, %518 : vector<4x32xf32>
    %521 = vector.extract_strided_slice %504 {offsets = [0, 64], sizes = [4, 32], strides = [1, 1]} : vector<4x128xf32> to vector<4x32xf32>
    %522 = math.tanh %521 : vector<4x32xf32>
    %523 = vector.extract_strided_slice %504 {offsets = [0, 96], sizes = [4, 32], strides = [1, 1]} : vector<4x128xf32> to vector<4x32xf32>
    %cst_184 = arith.constant 5.000000e-01 : f32
    %524 = vector.broadcast %cst_184 : f32 to vector<4x32xf32>
    %525 = arith.mulf %524, %523 : vector<4x32xf32>
    %526 = math.tanh %525 : vector<4x32xf32>
    %cst_185 = arith.constant 1.000000e+00 : f32
    %527 = vector.broadcast %cst_185 : f32 to vector<4x32xf32>
    %528 = arith.addf %526, %527 : vector<4x32xf32>
    %cst_186 = arith.constant 5.000000e-01 : f32
    %529 = vector.broadcast %cst_186 : f32 to vector<4x32xf32>
    %530 = arith.mulf %529, %528 : vector<4x32xf32>
    %531 = arith.mulf %520, %500 : vector<4x32xf32>
    %532 = arith.mulf %512, %522 : vector<4x32xf32>
    %533 = arith.addf %531, %532 : vector<4x32xf32>
    %534 = math.tanh %533 : vector<4x32xf32>
    %535 = arith.mulf %530, %534 : vector<4x32xf32>
    %cst_187 = arith.constant dense<0.000000e+00> : vector<4x128xf32>
    %536 = tpu.matmul %535, %310, %cst_187 {dimension_numbers = #tpu.dot_dimension_numbers<[1], [0], [0], [1], [0, 0, 1, 1], [], []>} : vector<4x32xf32>, vector<32x128xf32>, vector<4x128xf32> -> vector<4x128xf32>
    %537 = arith.addf %332, %536 : vector<4x128xf32>
    %538 = vector.extract_strided_slice %537 {offsets = [0, 0], sizes = [4, 32], strides = [1, 1]} : vector<4x128xf32> to vector<4x32xf32>
    %cst_188 = arith.constant 5.000000e-01 : f32
    %539 = vector.broadcast %cst_188 : f32 to vector<4x32xf32>
    %540 = arith.mulf %539, %538 : vector<4x32xf32>
    %541 = math.tanh %540 : vector<4x32xf32>
    %cst_189 = arith.constant 1.000000e+00 : f32
    %542 = vector.broadcast %cst_189 : f32 to vector<4x32xf32>
    %543 = arith.addf %541, %542 : vector<4x32xf32>
    %cst_190 = arith.constant 5.000000e-01 : f32
    %544 = vector.broadcast %cst_190 : f32 to vector<4x32xf32>
    %545 = arith.mulf %544, %543 : vector<4x32xf32>
    %546 = vector.extract_strided_slice %537 {offsets = [0, 32], sizes = [4, 32], strides = [1, 1]} : vector<4x128xf32> to vector<4x32xf32>
    %cst_191 = arith.constant 5.000000e-01 : f32
    %547 = vector.broadcast %cst_191 : f32 to vector<4x32xf32>
    %548 = arith.mulf %547, %546 : vector<4x32xf32>
    %549 = math.tanh %548 : vector<4x32xf32>
    %cst_192 = arith.constant 1.000000e+00 : f32
    %550 = vector.broadcast %cst_192 : f32 to vector<4x32xf32>
    %551 = arith.addf %549, %550 : vector<4x32xf32>
    %cst_193 = arith.constant 5.000000e-01 : f32
    %552 = vector.broadcast %cst_193 : f32 to vector<4x32xf32>
    %553 = arith.mulf %552, %551 : vector<4x32xf32>
    %554 = vector.extract_strided_slice %537 {offsets = [0, 64], sizes = [4, 32], strides = [1, 1]} : vector<4x128xf32> to vector<4x32xf32>
    %555 = math.tanh %554 : vector<4x32xf32>
    %556 = vector.extract_strided_slice %537 {offsets = [0, 96], sizes = [4, 32], strides = [1, 1]} : vector<4x128xf32> to vector<4x32xf32>
    %cst_194 = arith.constant 5.000000e-01 : f32
    %557 = vector.broadcast %cst_194 : f32 to vector<4x32xf32>
    %558 = arith.mulf %557, %556 : vector<4x32xf32>
    %559 = math.tanh %558 : vector<4x32xf32>
    %cst_195 = arith.constant 1.000000e+00 : f32
    %560 = vector.broadcast %cst_195 : f32 to vector<4x32xf32>
    %561 = arith.addf %559, %560 : vector<4x32xf32>
    %cst_196 = arith.constant 5.000000e-01 : f32
    %562 = vector.broadcast %cst_196 : f32 to vector<4x32xf32>
    %563 = arith.mulf %562, %561 : vector<4x32xf32>
    %564 = arith.mulf %553, %533 : vector<4x32xf32>
    %565 = arith.mulf %545, %555 : vector<4x32xf32>
    %566 = arith.addf %564, %565 : vector<4x32xf32>
    %567 = math.tanh %566 : vector<4x32xf32>
    %568 = arith.mulf %563, %567 : vector<4x32xf32>
    %cst_197 = arith.constant dense<0.000000e+00> : vector<4x128xf32>
    %569 = tpu.matmul %568, %310, %cst_197 {dimension_numbers = #tpu.dot_dimension_numbers<[1], [0], [0], [1], [0, 0, 1, 1], [], []>} : vector<4x32xf32>, vector<32x128xf32>, vector<4x128xf32> -> vector<4x128xf32>
    %570 = arith.addf %335, %569 : vector<4x128xf32>
    %571 = vector.extract_strided_slice %570 {offsets = [0, 0], sizes = [4, 32], strides = [1, 1]} : vector<4x128xf32> to vector<4x32xf32>
    %cst_198 = arith.constant 5.000000e-01 : f32
    %572 = vector.broadcast %cst_198 : f32 to vector<4x32xf32>
    %573 = arith.mulf %572, %571 : vector<4x32xf32>
    %574 = math.tanh %573 : vector<4x32xf32>
    %cst_199 = arith.constant 1.000000e+00 : f32
    %575 = vector.broadcast %cst_199 : f32 to vector<4x32xf32>
    %576 = arith.addf %574, %575 : vector<4x32xf32>
    %cst_200 = arith.constant 5.000000e-01 : f32
    %577 = vector.broadcast %cst_200 : f32 to vector<4x32xf32>
    %578 = arith.mulf %577, %576 : vector<4x32xf32>
    %579 = vector.extract_strided_slice %570 {offsets = [0, 32], sizes = [4, 32], strides = [1, 1]} : vector<4x128xf32> to vector<4x32xf32>
    %cst_201 = arith.constant 5.000000e-01 : f32
    %580 = vector.broadcast %cst_201 : f32 to vector<4x32xf32>
    %581 = arith.mulf %580, %579 : vector<4x32xf32>
    %582 = math.tanh %581 : vector<4x32xf32>
    %cst_202 = arith.constant 1.000000e+00 : f32
    %583 = vector.broadcast %cst_202 : f32 to vector<4x32xf32>
    %584 = arith.addf %582, %583 : vector<4x32xf32>
    %cst_203 = arith.constant 5.000000e-01 : f32
    %585 = vector.broadcast %cst_203 : f32 to vector<4x32xf32>
    %586 = arith.mulf %585, %584 : vector<4x32xf32>
    %587 = vector.extract_strided_slice %570 {offsets = [0, 64], sizes = [4, 32], strides = [1, 1]} : vector<4x128xf32> to vector<4x32xf32>
    %588 = math.tanh %587 : vector<4x32xf32>
    %589 = vector.extract_strided_slice %570 {offsets = [0, 96], sizes = [4, 32], strides = [1, 1]} : vector<4x128xf32> to vector<4x32xf32>
    %cst_204 = arith.constant 5.000000e-01 : f32
    %590 = vector.broadcast %cst_204 : f32 to vector<4x32xf32>
    %591 = arith.mulf %590, %589 : vector<4x32xf32>
    %592 = math.tanh %591 : vector<4x32xf32>
    %cst_205 = arith.constant 1.000000e+00 : f32
    %593 = vector.broadcast %cst_205 : f32 to vector<4x32xf32>
    %594 = arith.addf %592, %593 : vector<4x32xf32>
    %cst_206 = arith.constant 5.000000e-01 : f32
    %595 = vector.broadcast %cst_206 : f32 to vector<4x32xf32>
    %596 = arith.mulf %595, %594 : vector<4x32xf32>
    %597 = arith.mulf %586, %566 : vector<4x32xf32>
    %598 = arith.mulf %578, %588 : vector<4x32xf32>
    %599 = arith.addf %597, %598 : vector<4x32xf32>
    %600 = math.tanh %599 : vector<4x32xf32>
    %601 = arith.mulf %596, %600 : vector<4x32xf32>
    %c0_207 = arith.constant 0 : index
    %c0_208 = arith.constant 0 : index
    %c0_209 = arith.constant 0 : index
    %602 = vector.load %arg1[%c0_207, %c0_208, %c0_209] : memref<8x4x12xf32, #tpu.memory_space<vmem>>, vector<1x4x12xf32>
    %603 = vector.shape_cast %602 : vector<1x4x12xf32> to vector<4x12xf32>
    %c1_210 = arith.constant 1 : index
    %c0_211 = arith.constant 0 : index
    %c0_212 = arith.constant 0 : index
    %604 = vector.load %arg1[%c1_210, %c0_211, %c0_212] : memref<8x4x12xf32, #tpu.memory_space<vmem>>, vector<1x4x12xf32>
    %605 = vector.shape_cast %604 : vector<1x4x12xf32> to vector<4x12xf32>
    %c2_213 = arith.constant 2 : index
    %c0_214 = arith.constant 0 : index
    %c0_215 = arith.constant 0 : index
    %606 = vector.load %arg1[%c2_213, %c0_214, %c0_215] : memref<8x4x12xf32, #tpu.memory_space<vmem>>, vector<1x4x12xf32>
    %607 = vector.shape_cast %606 : vector<1x4x12xf32> to vector<4x12xf32>
    %c3_216 = arith.constant 3 : index
    %c0_217 = arith.constant 0 : index
    %c0_218 = arith.constant 0 : index
    %608 = vector.load %arg1[%c3_216, %c0_217, %c0_218] : memref<8x4x12xf32, #tpu.memory_space<vmem>>, vector<1x4x12xf32>
    %609 = vector.shape_cast %608 : vector<1x4x12xf32> to vector<4x12xf32>
    %c4_219 = arith.constant 4 : index
    %c0_220 = arith.constant 0 : index
    %c0_221 = arith.constant 0 : index
    %610 = vector.load %arg1[%c4_219, %c0_220, %c0_221] : memref<8x4x12xf32, #tpu.memory_space<vmem>>, vector<1x4x12xf32>
    %611 = vector.shape_cast %610 : vector<1x4x12xf32> to vector<4x12xf32>
    %c5_222 = arith.constant 5 : index
    %c0_223 = arith.constant 0 : index
    %c0_224 = arith.constant 0 : index
    %612 = vector.load %arg1[%c5_222, %c0_223, %c0_224] : memref<8x4x12xf32, #tpu.memory_space<vmem>>, vector<1x4x12xf32>
    %613 = vector.shape_cast %612 : vector<1x4x12xf32> to vector<4x12xf32>
    %c6_225 = arith.constant 6 : index
    %c0_226 = arith.constant 0 : index
    %c0_227 = arith.constant 0 : index
    %614 = vector.load %arg1[%c6_225, %c0_226, %c0_227] : memref<8x4x12xf32, #tpu.memory_space<vmem>>, vector<1x4x12xf32>
    %615 = vector.shape_cast %614 : vector<1x4x12xf32> to vector<4x12xf32>
    %c7_228 = arith.constant 7 : index
    %c0_229 = arith.constant 0 : index
    %c0_230 = arith.constant 0 : index
    %616 = vector.load %arg1[%c7_228, %c0_229, %c0_230] : memref<8x4x12xf32, #tpu.memory_space<vmem>>, vector<1x4x12xf32>
    %617 = vector.shape_cast %616 : vector<1x4x12xf32> to vector<4x12xf32>
    %c0_231 = arith.constant 0 : index
    %c0_232 = arith.constant 0 : index
    %618 = vector.load %arg9[%c0_231, %c0_232] : memref<12x128xf32, #tpu.memory_space<vmem>>, vector<12x128xf32>
    %c0_233 = arith.constant 0 : index
    %c0_234 = arith.constant 0 : index
    %619 = vector.load %arg10[%c0_233, %c0_234] : memref<32x128xf32, #tpu.memory_space<vmem>>, vector<32x128xf32>
    %c0_235 = arith.constant 0 : index
    %c0_236 = arith.constant 0 : index
    %620 = vector.load %arg11[%c0_235, %c0_236] : memref<1x128xf32, #tpu.memory_space<vmem>>, vector<1x128xf32>
    %cst_237 = arith.constant dense<0.000000e+00> : vector<4x128xf32>
    %621 = tpu.matmul %603, %618, %cst_237 {dimension_numbers = #tpu.dot_dimension_numbers<[1], [0], [0], [1], [0, 0, 1, 1], [], []>} : vector<4x12xf32>, vector<12x128xf32>, vector<4x128xf32> -> vector<4x128xf32>
    %622 = vector.broadcast %620 : vector<1x128xf32> to vector<4x128xf32>
    %623 = arith.addf %621, %622 : vector<4x128xf32>
    %cst_238 = arith.constant dense<0.000000e+00> : vector<4x128xf32>
    %624 = tpu.matmul %605, %618, %cst_238 {dimension_numbers = #tpu.dot_dimension_numbers<[1], [0], [0], [1], [0, 0, 1, 1], [], []>} : vector<4x12xf32>, vector<12x128xf32>, vector<4x128xf32> -> vector<4x128xf32>
    %625 = vector.broadcast %620 : vector<1x128xf32> to vector<4x128xf32>
    %626 = arith.addf %624, %625 : vector<4x128xf32>
    %cst_239 = arith.constant dense<0.000000e+00> : vector<4x128xf32>
    %627 = tpu.matmul %607, %618, %cst_239 {dimension_numbers = #tpu.dot_dimension_numbers<[1], [0], [0], [1], [0, 0, 1, 1], [], []>} : vector<4x12xf32>, vector<12x128xf32>, vector<4x128xf32> -> vector<4x128xf32>
    %628 = vector.broadcast %620 : vector<1x128xf32> to vector<4x128xf32>
    %629 = arith.addf %627, %628 : vector<4x128xf32>
    %cst_240 = arith.constant dense<0.000000e+00> : vector<4x128xf32>
    %630 = tpu.matmul %609, %618, %cst_240 {dimension_numbers = #tpu.dot_dimension_numbers<[1], [0], [0], [1], [0, 0, 1, 1], [], []>} : vector<4x12xf32>, vector<12x128xf32>, vector<4x128xf32> -> vector<4x128xf32>
    %631 = vector.broadcast %620 : vector<1x128xf32> to vector<4x128xf32>
    %632 = arith.addf %630, %631 : vector<4x128xf32>
    %cst_241 = arith.constant dense<0.000000e+00> : vector<4x128xf32>
    %633 = tpu.matmul %611, %618, %cst_241 {dimension_numbers = #tpu.dot_dimension_numbers<[1], [0], [0], [1], [0, 0, 1, 1], [], []>} : vector<4x12xf32>, vector<12x128xf32>, vector<4x128xf32> -> vector<4x128xf32>
    %634 = vector.broadcast %620 : vector<1x128xf32> to vector<4x128xf32>
    %635 = arith.addf %633, %634 : vector<4x128xf32>
    %cst_242 = arith.constant dense<0.000000e+00> : vector<4x128xf32>
    %636 = tpu.matmul %613, %618, %cst_242 {dimension_numbers = #tpu.dot_dimension_numbers<[1], [0], [0], [1], [0, 0, 1, 1], [], []>} : vector<4x12xf32>, vector<12x128xf32>, vector<4x128xf32> -> vector<4x128xf32>
    %637 = vector.broadcast %620 : vector<1x128xf32> to vector<4x128xf32>
    %638 = arith.addf %636, %637 : vector<4x128xf32>
    %cst_243 = arith.constant dense<0.000000e+00> : vector<4x128xf32>
    %639 = tpu.matmul %615, %618, %cst_243 {dimension_numbers = #tpu.dot_dimension_numbers<[1], [0], [0], [1], [0, 0, 1, 1], [], []>} : vector<4x12xf32>, vector<12x128xf32>, vector<4x128xf32> -> vector<4x128xf32>
    %640 = vector.broadcast %620 : vector<1x128xf32> to vector<4x128xf32>
    %641 = arith.addf %639, %640 : vector<4x128xf32>
    %cst_244 = arith.constant dense<0.000000e+00> : vector<4x128xf32>
    %642 = tpu.matmul %617, %618, %cst_244 {dimension_numbers = #tpu.dot_dimension_numbers<[1], [0], [0], [1], [0, 0, 1, 1], [], []>} : vector<4x12xf32>, vector<12x128xf32>, vector<4x128xf32> -> vector<4x128xf32>
    %643 = vector.broadcast %620 : vector<1x128xf32> to vector<4x128xf32>
    %644 = arith.addf %642, %643 : vector<4x128xf32>
    %cst_245 = arith.constant 0.000000e+00 : f32
    %645 = vector.broadcast %cst_245 : f32 to vector<4x32xf32>
    %cst_246 = arith.constant 0.000000e+00 : f32
    %646 = vector.broadcast %cst_246 : f32 to vector<4x32xf32>
    %cst_247 = arith.constant dense<0.000000e+00> : vector<4x128xf32>
    %647 = tpu.matmul %645, %619, %cst_247 {dimension_numbers = #tpu.dot_dimension_numbers<[1], [0], [0], [1], [0, 0, 1, 1], [], []>} : vector<4x32xf32>, vector<32x128xf32>, vector<4x128xf32> -> vector<4x128xf32>
    %648 = arith.addf %623, %647 : vector<4x128xf32>
    %649 = vector.extract_strided_slice %648 {offsets = [0, 0], sizes = [4, 32], strides = [1, 1]} : vector<4x128xf32> to vector<4x32xf32>
    %cst_248 = arith.constant 5.000000e-01 : f32
    %650 = vector.broadcast %cst_248 : f32 to vector<4x32xf32>
    %651 = arith.mulf %650, %649 : vector<4x32xf32>
    %652 = math.tanh %651 : vector<4x32xf32>
    %cst_249 = arith.constant 1.000000e+00 : f32
    %653 = vector.broadcast %cst_249 : f32 to vector<4x32xf32>
    %654 = arith.addf %652, %653 : vector<4x32xf32>
    %cst_250 = arith.constant 5.000000e-01 : f32
    %655 = vector.broadcast %cst_250 : f32 to vector<4x32xf32>
    %656 = arith.mulf %655, %654 : vector<4x32xf32>
    %657 = vector.extract_strided_slice %648 {offsets = [0, 32], sizes = [4, 32], strides = [1, 1]} : vector<4x128xf32> to vector<4x32xf32>
    %cst_251 = arith.constant 5.000000e-01 : f32
    %658 = vector.broadcast %cst_251 : f32 to vector<4x32xf32>
    %659 = arith.mulf %658, %657 : vector<4x32xf32>
    %660 = math.tanh %659 : vector<4x32xf32>
    %cst_252 = arith.constant 1.000000e+00 : f32
    %661 = vector.broadcast %cst_252 : f32 to vector<4x32xf32>
    %662 = arith.addf %660, %661 : vector<4x32xf32>
    %cst_253 = arith.constant 5.000000e-01 : f32
    %663 = vector.broadcast %cst_253 : f32 to vector<4x32xf32>
    %664 = arith.mulf %663, %662 : vector<4x32xf32>
    %665 = vector.extract_strided_slice %648 {offsets = [0, 64], sizes = [4, 32], strides = [1, 1]} : vector<4x128xf32> to vector<4x32xf32>
    %666 = math.tanh %665 : vector<4x32xf32>
    %667 = vector.extract_strided_slice %648 {offsets = [0, 96], sizes = [4, 32], strides = [1, 1]} : vector<4x128xf32> to vector<4x32xf32>
    %cst_254 = arith.constant 5.000000e-01 : f32
    %668 = vector.broadcast %cst_254 : f32 to vector<4x32xf32>
    %669 = arith.mulf %668, %667 : vector<4x32xf32>
    %670 = math.tanh %669 : vector<4x32xf32>
    %cst_255 = arith.constant 1.000000e+00 : f32
    %671 = vector.broadcast %cst_255 : f32 to vector<4x32xf32>
    %672 = arith.addf %670, %671 : vector<4x32xf32>
    %cst_256 = arith.constant 5.000000e-01 : f32
    %673 = vector.broadcast %cst_256 : f32 to vector<4x32xf32>
    %674 = arith.mulf %673, %672 : vector<4x32xf32>
    %675 = arith.mulf %664, %646 : vector<4x32xf32>
    %676 = arith.mulf %656, %666 : vector<4x32xf32>
    %677 = arith.addf %675, %676 : vector<4x32xf32>
    %678 = math.tanh %677 : vector<4x32xf32>
    %679 = arith.mulf %674, %678 : vector<4x32xf32>
    %cst_257 = arith.constant dense<0.000000e+00> : vector<4x128xf32>
    %680 = tpu.matmul %679, %619, %cst_257 {dimension_numbers = #tpu.dot_dimension_numbers<[1], [0], [0], [1], [0, 0, 1, 1], [], []>} : vector<4x32xf32>, vector<32x128xf32>, vector<4x128xf32> -> vector<4x128xf32>
    %681 = arith.addf %626, %680 : vector<4x128xf32>
    %682 = vector.extract_strided_slice %681 {offsets = [0, 0], sizes = [4, 32], strides = [1, 1]} : vector<4x128xf32> to vector<4x32xf32>
    %cst_258 = arith.constant 5.000000e-01 : f32
    %683 = vector.broadcast %cst_258 : f32 to vector<4x32xf32>
    %684 = arith.mulf %683, %682 : vector<4x32xf32>
    %685 = math.tanh %684 : vector<4x32xf32>
    %cst_259 = arith.constant 1.000000e+00 : f32
    %686 = vector.broadcast %cst_259 : f32 to vector<4x32xf32>
    %687 = arith.addf %685, %686 : vector<4x32xf32>
    %cst_260 = arith.constant 5.000000e-01 : f32
    %688 = vector.broadcast %cst_260 : f32 to vector<4x32xf32>
    %689 = arith.mulf %688, %687 : vector<4x32xf32>
    %690 = vector.extract_strided_slice %681 {offsets = [0, 32], sizes = [4, 32], strides = [1, 1]} : vector<4x128xf32> to vector<4x32xf32>
    %cst_261 = arith.constant 5.000000e-01 : f32
    %691 = vector.broadcast %cst_261 : f32 to vector<4x32xf32>
    %692 = arith.mulf %691, %690 : vector<4x32xf32>
    %693 = math.tanh %692 : vector<4x32xf32>
    %cst_262 = arith.constant 1.000000e+00 : f32
    %694 = vector.broadcast %cst_262 : f32 to vector<4x32xf32>
    %695 = arith.addf %693, %694 : vector<4x32xf32>
    %cst_263 = arith.constant 5.000000e-01 : f32
    %696 = vector.broadcast %cst_263 : f32 to vector<4x32xf32>
    %697 = arith.mulf %696, %695 : vector<4x32xf32>
    %698 = vector.extract_strided_slice %681 {offsets = [0, 64], sizes = [4, 32], strides = [1, 1]} : vector<4x128xf32> to vector<4x32xf32>
    %699 = math.tanh %698 : vector<4x32xf32>
    %700 = vector.extract_strided_slice %681 {offsets = [0, 96], sizes = [4, 32], strides = [1, 1]} : vector<4x128xf32> to vector<4x32xf32>
    %cst_264 = arith.constant 5.000000e-01 : f32
    %701 = vector.broadcast %cst_264 : f32 to vector<4x32xf32>
    %702 = arith.mulf %701, %700 : vector<4x32xf32>
    %703 = math.tanh %702 : vector<4x32xf32>
    %cst_265 = arith.constant 1.000000e+00 : f32
    %704 = vector.broadcast %cst_265 : f32 to vector<4x32xf32>
    %705 = arith.addf %703, %704 : vector<4x32xf32>
    %cst_266 = arith.constant 5.000000e-01 : f32
    %706 = vector.broadcast %cst_266 : f32 to vector<4x32xf32>
    %707 = arith.mulf %706, %705 : vector<4x32xf32>
    %708 = arith.mulf %697, %677 : vector<4x32xf32>
    %709 = arith.mulf %689, %699 : vector<4x32xf32>
    %710 = arith.addf %708, %709 : vector<4x32xf32>
    %711 = math.tanh %710 : vector<4x32xf32>
    %712 = arith.mulf %707, %711 : vector<4x32xf32>
    %cst_267 = arith.constant dense<0.000000e+00> : vector<4x128xf32>
    %713 = tpu.matmul %712, %619, %cst_267 {dimension_numbers = #tpu.dot_dimension_numbers<[1], [0], [0], [1], [0, 0, 1, 1], [], []>} : vector<4x32xf32>, vector<32x128xf32>, vector<4x128xf32> -> vector<4x128xf32>
    %714 = arith.addf %629, %713 : vector<4x128xf32>
    %715 = vector.extract_strided_slice %714 {offsets = [0, 0], sizes = [4, 32], strides = [1, 1]} : vector<4x128xf32> to vector<4x32xf32>
    %cst_268 = arith.constant 5.000000e-01 : f32
    %716 = vector.broadcast %cst_268 : f32 to vector<4x32xf32>
    %717 = arith.mulf %716, %715 : vector<4x32xf32>
    %718 = math.tanh %717 : vector<4x32xf32>
    %cst_269 = arith.constant 1.000000e+00 : f32
    %719 = vector.broadcast %cst_269 : f32 to vector<4x32xf32>
    %720 = arith.addf %718, %719 : vector<4x32xf32>
    %cst_270 = arith.constant 5.000000e-01 : f32
    %721 = vector.broadcast %cst_270 : f32 to vector<4x32xf32>
    %722 = arith.mulf %721, %720 : vector<4x32xf32>
    %723 = vector.extract_strided_slice %714 {offsets = [0, 32], sizes = [4, 32], strides = [1, 1]} : vector<4x128xf32> to vector<4x32xf32>
    %cst_271 = arith.constant 5.000000e-01 : f32
    %724 = vector.broadcast %cst_271 : f32 to vector<4x32xf32>
    %725 = arith.mulf %724, %723 : vector<4x32xf32>
    %726 = math.tanh %725 : vector<4x32xf32>
    %cst_272 = arith.constant 1.000000e+00 : f32
    %727 = vector.broadcast %cst_272 : f32 to vector<4x32xf32>
    %728 = arith.addf %726, %727 : vector<4x32xf32>
    %cst_273 = arith.constant 5.000000e-01 : f32
    %729 = vector.broadcast %cst_273 : f32 to vector<4x32xf32>
    %730 = arith.mulf %729, %728 : vector<4x32xf32>
    %731 = vector.extract_strided_slice %714 {offsets = [0, 64], sizes = [4, 32], strides = [1, 1]} : vector<4x128xf32> to vector<4x32xf32>
    %732 = math.tanh %731 : vector<4x32xf32>
    %733 = vector.extract_strided_slice %714 {offsets = [0, 96], sizes = [4, 32], strides = [1, 1]} : vector<4x128xf32> to vector<4x32xf32>
    %cst_274 = arith.constant 5.000000e-01 : f32
    %734 = vector.broadcast %cst_274 : f32 to vector<4x32xf32>
    %735 = arith.mulf %734, %733 : vector<4x32xf32>
    %736 = math.tanh %735 : vector<4x32xf32>
    %cst_275 = arith.constant 1.000000e+00 : f32
    %737 = vector.broadcast %cst_275 : f32 to vector<4x32xf32>
    %738 = arith.addf %736, %737 : vector<4x32xf32>
    %cst_276 = arith.constant 5.000000e-01 : f32
    %739 = vector.broadcast %cst_276 : f32 to vector<4x32xf32>
    %740 = arith.mulf %739, %738 : vector<4x32xf32>
    %741 = arith.mulf %730, %710 : vector<4x32xf32>
    %742 = arith.mulf %722, %732 : vector<4x32xf32>
    %743 = arith.addf %741, %742 : vector<4x32xf32>
    %744 = math.tanh %743 : vector<4x32xf32>
    %745 = arith.mulf %740, %744 : vector<4x32xf32>
    %cst_277 = arith.constant dense<0.000000e+00> : vector<4x128xf32>
    %746 = tpu.matmul %745, %619, %cst_277 {dimension_numbers = #tpu.dot_dimension_numbers<[1], [0], [0], [1], [0, 0, 1, 1], [], []>} : vector<4x32xf32>, vector<32x128xf32>, vector<4x128xf32> -> vector<4x128xf32>
    %747 = arith.addf %632, %746 : vector<4x128xf32>
    %748 = vector.extract_strided_slice %747 {offsets = [0, 0], sizes = [4, 32], strides = [1, 1]} : vector<4x128xf32> to vector<4x32xf32>
    %cst_278 = arith.constant 5.000000e-01 : f32
    %749 = vector.broadcast %cst_278 : f32 to vector<4x32xf32>
    %750 = arith.mulf %749, %748 : vector<4x32xf32>
    %751 = math.tanh %750 : vector<4x32xf32>
    %cst_279 = arith.constant 1.000000e+00 : f32
    %752 = vector.broadcast %cst_279 : f32 to vector<4x32xf32>
    %753 = arith.addf %751, %752 : vector<4x32xf32>
    %cst_280 = arith.constant 5.000000e-01 : f32
    %754 = vector.broadcast %cst_280 : f32 to vector<4x32xf32>
    %755 = arith.mulf %754, %753 : vector<4x32xf32>
    %756 = vector.extract_strided_slice %747 {offsets = [0, 32], sizes = [4, 32], strides = [1, 1]} : vector<4x128xf32> to vector<4x32xf32>
    %cst_281 = arith.constant 5.000000e-01 : f32
    %757 = vector.broadcast %cst_281 : f32 to vector<4x32xf32>
    %758 = arith.mulf %757, %756 : vector<4x32xf32>
    %759 = math.tanh %758 : vector<4x32xf32>
    %cst_282 = arith.constant 1.000000e+00 : f32
    %760 = vector.broadcast %cst_282 : f32 to vector<4x32xf32>
    %761 = arith.addf %759, %760 : vector<4x32xf32>
    %cst_283 = arith.constant 5.000000e-01 : f32
    %762 = vector.broadcast %cst_283 : f32 to vector<4x32xf32>
    %763 = arith.mulf %762, %761 : vector<4x32xf32>
    %764 = vector.extract_strided_slice %747 {offsets = [0, 64], sizes = [4, 32], strides = [1, 1]} : vector<4x128xf32> to vector<4x32xf32>
    %765 = math.tanh %764 : vector<4x32xf32>
    %766 = vector.extract_strided_slice %747 {offsets = [0, 96], sizes = [4, 32], strides = [1, 1]} : vector<4x128xf32> to vector<4x32xf32>
    %cst_284 = arith.constant 5.000000e-01 : f32
    %767 = vector.broadcast %cst_284 : f32 to vector<4x32xf32>
    %768 = arith.mulf %767, %766 : vector<4x32xf32>
    %769 = math.tanh %768 : vector<4x32xf32>
    %cst_285 = arith.constant 1.000000e+00 : f32
    %770 = vector.broadcast %cst_285 : f32 to vector<4x32xf32>
    %771 = arith.addf %769, %770 : vector<4x32xf32>
    %cst_286 = arith.constant 5.000000e-01 : f32
    %772 = vector.broadcast %cst_286 : f32 to vector<4x32xf32>
    %773 = arith.mulf %772, %771 : vector<4x32xf32>
    %774 = arith.mulf %763, %743 : vector<4x32xf32>
    %775 = arith.mulf %755, %765 : vector<4x32xf32>
    %776 = arith.addf %774, %775 : vector<4x32xf32>
    %777 = math.tanh %776 : vector<4x32xf32>
    %778 = arith.mulf %773, %777 : vector<4x32xf32>
    %cst_287 = arith.constant dense<0.000000e+00> : vector<4x128xf32>
    %779 = tpu.matmul %778, %619, %cst_287 {dimension_numbers = #tpu.dot_dimension_numbers<[1], [0], [0], [1], [0, 0, 1, 1], [], []>} : vector<4x32xf32>, vector<32x128xf32>, vector<4x128xf32> -> vector<4x128xf32>
    %780 = arith.addf %635, %779 : vector<4x128xf32>
    %781 = vector.extract_strided_slice %780 {offsets = [0, 0], sizes = [4, 32], strides = [1, 1]} : vector<4x128xf32> to vector<4x32xf32>
    %cst_288 = arith.constant 5.000000e-01 : f32
    %782 = vector.broadcast %cst_288 : f32 to vector<4x32xf32>
    %783 = arith.mulf %782, %781 : vector<4x32xf32>
    %784 = math.tanh %783 : vector<4x32xf32>
    %cst_289 = arith.constant 1.000000e+00 : f32
    %785 = vector.broadcast %cst_289 : f32 to vector<4x32xf32>
    %786 = arith.addf %784, %785 : vector<4x32xf32>
    %cst_290 = arith.constant 5.000000e-01 : f32
    %787 = vector.broadcast %cst_290 : f32 to vector<4x32xf32>
    %788 = arith.mulf %787, %786 : vector<4x32xf32>
    %789 = vector.extract_strided_slice %780 {offsets = [0, 32], sizes = [4, 32], strides = [1, 1]} : vector<4x128xf32> to vector<4x32xf32>
    %cst_291 = arith.constant 5.000000e-01 : f32
    %790 = vector.broadcast %cst_291 : f32 to vector<4x32xf32>
    %791 = arith.mulf %790, %789 : vector<4x32xf32>
    %792 = math.tanh %791 : vector<4x32xf32>
    %cst_292 = arith.constant 1.000000e+00 : f32
    %793 = vector.broadcast %cst_292 : f32 to vector<4x32xf32>
    %794 = arith.addf %792, %793 : vector<4x32xf32>
    %cst_293 = arith.constant 5.000000e-01 : f32
    %795 = vector.broadcast %cst_293 : f32 to vector<4x32xf32>
    %796 = arith.mulf %795, %794 : vector<4x32xf32>
    %797 = vector.extract_strided_slice %780 {offsets = [0, 64], sizes = [4, 32], strides = [1, 1]} : vector<4x128xf32> to vector<4x32xf32>
    %798 = math.tanh %797 : vector<4x32xf32>
    %799 = vector.extract_strided_slice %780 {offsets = [0, 96], sizes = [4, 32], strides = [1, 1]} : vector<4x128xf32> to vector<4x32xf32>
    %cst_294 = arith.constant 5.000000e-01 : f32
    %800 = vector.broadcast %cst_294 : f32 to vector<4x32xf32>
    %801 = arith.mulf %800, %799 : vector<4x32xf32>
    %802 = math.tanh %801 : vector<4x32xf32>
    %cst_295 = arith.constant 1.000000e+00 : f32
    %803 = vector.broadcast %cst_295 : f32 to vector<4x32xf32>
    %804 = arith.addf %802, %803 : vector<4x32xf32>
    %cst_296 = arith.constant 5.000000e-01 : f32
    %805 = vector.broadcast %cst_296 : f32 to vector<4x32xf32>
    %806 = arith.mulf %805, %804 : vector<4x32xf32>
    %807 = arith.mulf %796, %776 : vector<4x32xf32>
    %808 = arith.mulf %788, %798 : vector<4x32xf32>
    %809 = arith.addf %807, %808 : vector<4x32xf32>
    %810 = math.tanh %809 : vector<4x32xf32>
    %811 = arith.mulf %806, %810 : vector<4x32xf32>
    %cst_297 = arith.constant dense<0.000000e+00> : vector<4x128xf32>
    %812 = tpu.matmul %811, %619, %cst_297 {dimension_numbers = #tpu.dot_dimension_numbers<[1], [0], [0], [1], [0, 0, 1, 1], [], []>} : vector<4x32xf32>, vector<32x128xf32>, vector<4x128xf32> -> vector<4x128xf32>
    %813 = arith.addf %638, %812 : vector<4x128xf32>
    %814 = vector.extract_strided_slice %813 {offsets = [0, 0], sizes = [4, 32], strides = [1, 1]} : vector<4x128xf32> to vector<4x32xf32>
    %cst_298 = arith.constant 5.000000e-01 : f32
    %815 = vector.broadcast %cst_298 : f32 to vector<4x32xf32>
    %816 = arith.mulf %815, %814 : vector<4x32xf32>
    %817 = math.tanh %816 : vector<4x32xf32>
    %cst_299 = arith.constant 1.000000e+00 : f32
    %818 = vector.broadcast %cst_299 : f32 to vector<4x32xf32>
    %819 = arith.addf %817, %818 : vector<4x32xf32>
    %cst_300 = arith.constant 5.000000e-01 : f32
    %820 = vector.broadcast %cst_300 : f32 to vector<4x32xf32>
    %821 = arith.mulf %820, %819 : vector<4x32xf32>
    %822 = vector.extract_strided_slice %813 {offsets = [0, 32], sizes = [4, 32], strides = [1, 1]} : vector<4x128xf32> to vector<4x32xf32>
    %cst_301 = arith.constant 5.000000e-01 : f32
    %823 = vector.broadcast %cst_301 : f32 to vector<4x32xf32>
    %824 = arith.mulf %823, %822 : vector<4x32xf32>
    %825 = math.tanh %824 : vector<4x32xf32>
    %cst_302 = arith.constant 1.000000e+00 : f32
    %826 = vector.broadcast %cst_302 : f32 to vector<4x32xf32>
    %827 = arith.addf %825, %826 : vector<4x32xf32>
    %cst_303 = arith.constant 5.000000e-01 : f32
    %828 = vector.broadcast %cst_303 : f32 to vector<4x32xf32>
    %829 = arith.mulf %828, %827 : vector<4x32xf32>
    %830 = vector.extract_strided_slice %813 {offsets = [0, 64], sizes = [4, 32], strides = [1, 1]} : vector<4x128xf32> to vector<4x32xf32>
    %831 = math.tanh %830 : vector<4x32xf32>
    %832 = vector.extract_strided_slice %813 {offsets = [0, 96], sizes = [4, 32], strides = [1, 1]} : vector<4x128xf32> to vector<4x32xf32>
    %cst_304 = arith.constant 5.000000e-01 : f32
    %833 = vector.broadcast %cst_304 : f32 to vector<4x32xf32>
    %834 = arith.mulf %833, %832 : vector<4x32xf32>
    %835 = math.tanh %834 : vector<4x32xf32>
    %cst_305 = arith.constant 1.000000e+00 : f32
    %836 = vector.broadcast %cst_305 : f32 to vector<4x32xf32>
    %837 = arith.addf %835, %836 : vector<4x32xf32>
    %cst_306 = arith.constant 5.000000e-01 : f32
    %838 = vector.broadcast %cst_306 : f32 to vector<4x32xf32>
    %839 = arith.mulf %838, %837 : vector<4x32xf32>
    %840 = arith.mulf %829, %809 : vector<4x32xf32>
    %841 = arith.mulf %821, %831 : vector<4x32xf32>
    %842 = arith.addf %840, %841 : vector<4x32xf32>
    %843 = math.tanh %842 : vector<4x32xf32>
    %844 = arith.mulf %839, %843 : vector<4x32xf32>
    %cst_307 = arith.constant dense<0.000000e+00> : vector<4x128xf32>
    %845 = tpu.matmul %844, %619, %cst_307 {dimension_numbers = #tpu.dot_dimension_numbers<[1], [0], [0], [1], [0, 0, 1, 1], [], []>} : vector<4x32xf32>, vector<32x128xf32>, vector<4x128xf32> -> vector<4x128xf32>
    %846 = arith.addf %641, %845 : vector<4x128xf32>
    %847 = vector.extract_strided_slice %846 {offsets = [0, 0], sizes = [4, 32], strides = [1, 1]} : vector<4x128xf32> to vector<4x32xf32>
    %cst_308 = arith.constant 5.000000e-01 : f32
    %848 = vector.broadcast %cst_308 : f32 to vector<4x32xf32>
    %849 = arith.mulf %848, %847 : vector<4x32xf32>
    %850 = math.tanh %849 : vector<4x32xf32>
    %cst_309 = arith.constant 1.000000e+00 : f32
    %851 = vector.broadcast %cst_309 : f32 to vector<4x32xf32>
    %852 = arith.addf %850, %851 : vector<4x32xf32>
    %cst_310 = arith.constant 5.000000e-01 : f32
    %853 = vector.broadcast %cst_310 : f32 to vector<4x32xf32>
    %854 = arith.mulf %853, %852 : vector<4x32xf32>
    %855 = vector.extract_strided_slice %846 {offsets = [0, 32], sizes = [4, 32], strides = [1, 1]} : vector<4x128xf32> to vector<4x32xf32>
    %cst_311 = arith.constant 5.000000e-01 : f32
    %856 = vector.broadcast %cst_311 : f32 to vector<4x32xf32>
    %857 = arith.mulf %856, %855 : vector<4x32xf32>
    %858 = math.tanh %857 : vector<4x32xf32>
    %cst_312 = arith.constant 1.000000e+00 : f32
    %859 = vector.broadcast %cst_312 : f32 to vector<4x32xf32>
    %860 = arith.addf %858, %859 : vector<4x32xf32>
    %cst_313 = arith.constant 5.000000e-01 : f32
    %861 = vector.broadcast %cst_313 : f32 to vector<4x32xf32>
    %862 = arith.mulf %861, %860 : vector<4x32xf32>
    %863 = vector.extract_strided_slice %846 {offsets = [0, 64], sizes = [4, 32], strides = [1, 1]} : vector<4x128xf32> to vector<4x32xf32>
    %864 = math.tanh %863 : vector<4x32xf32>
    %865 = vector.extract_strided_slice %846 {offsets = [0, 96], sizes = [4, 32], strides = [1, 1]} : vector<4x128xf32> to vector<4x32xf32>
    %cst_314 = arith.constant 5.000000e-01 : f32
    %866 = vector.broadcast %cst_314 : f32 to vector<4x32xf32>
    %867 = arith.mulf %866, %865 : vector<4x32xf32>
    %868 = math.tanh %867 : vector<4x32xf32>
    %cst_315 = arith.constant 1.000000e+00 : f32
    %869 = vector.broadcast %cst_315 : f32 to vector<4x32xf32>
    %870 = arith.addf %868, %869 : vector<4x32xf32>
    %cst_316 = arith.constant 5.000000e-01 : f32
    %871 = vector.broadcast %cst_316 : f32 to vector<4x32xf32>
    %872 = arith.mulf %871, %870 : vector<4x32xf32>
    %873 = arith.mulf %862, %842 : vector<4x32xf32>
    %874 = arith.mulf %854, %864 : vector<4x32xf32>
    %875 = arith.addf %873, %874 : vector<4x32xf32>
    %876 = math.tanh %875 : vector<4x32xf32>
    %877 = arith.mulf %872, %876 : vector<4x32xf32>
    %cst_317 = arith.constant dense<0.000000e+00> : vector<4x128xf32>
    %878 = tpu.matmul %877, %619, %cst_317 {dimension_numbers = #tpu.dot_dimension_numbers<[1], [0], [0], [1], [0, 0, 1, 1], [], []>} : vector<4x32xf32>, vector<32x128xf32>, vector<4x128xf32> -> vector<4x128xf32>
    %879 = arith.addf %644, %878 : vector<4x128xf32>
    %880 = vector.extract_strided_slice %879 {offsets = [0, 0], sizes = [4, 32], strides = [1, 1]} : vector<4x128xf32> to vector<4x32xf32>
    %cst_318 = arith.constant 5.000000e-01 : f32
    %881 = vector.broadcast %cst_318 : f32 to vector<4x32xf32>
    %882 = arith.mulf %881, %880 : vector<4x32xf32>
    %883 = math.tanh %882 : vector<4x32xf32>
    %cst_319 = arith.constant 1.000000e+00 : f32
    %884 = vector.broadcast %cst_319 : f32 to vector<4x32xf32>
    %885 = arith.addf %883, %884 : vector<4x32xf32>
    %cst_320 = arith.constant 5.000000e-01 : f32
    %886 = vector.broadcast %cst_320 : f32 to vector<4x32xf32>
    %887 = arith.mulf %886, %885 : vector<4x32xf32>
    %888 = vector.extract_strided_slice %879 {offsets = [0, 32], sizes = [4, 32], strides = [1, 1]} : vector<4x128xf32> to vector<4x32xf32>
    %cst_321 = arith.constant 5.000000e-01 : f32
    %889 = vector.broadcast %cst_321 : f32 to vector<4x32xf32>
    %890 = arith.mulf %889, %888 : vector<4x32xf32>
    %891 = math.tanh %890 : vector<4x32xf32>
    %cst_322 = arith.constant 1.000000e+00 : f32
    %892 = vector.broadcast %cst_322 : f32 to vector<4x32xf32>
    %893 = arith.addf %891, %892 : vector<4x32xf32>
    %cst_323 = arith.constant 5.000000e-01 : f32
    %894 = vector.broadcast %cst_323 : f32 to vector<4x32xf32>
    %895 = arith.mulf %894, %893 : vector<4x32xf32>
    %896 = vector.extract_strided_slice %879 {offsets = [0, 64], sizes = [4, 32], strides = [1, 1]} : vector<4x128xf32> to vector<4x32xf32>
    %897 = math.tanh %896 : vector<4x32xf32>
    %898 = vector.extract_strided_slice %879 {offsets = [0, 96], sizes = [4, 32], strides = [1, 1]} : vector<4x128xf32> to vector<4x32xf32>
    %cst_324 = arith.constant 5.000000e-01 : f32
    %899 = vector.broadcast %cst_324 : f32 to vector<4x32xf32>
    %900 = arith.mulf %899, %898 : vector<4x32xf32>
    %901 = math.tanh %900 : vector<4x32xf32>
    %cst_325 = arith.constant 1.000000e+00 : f32
    %902 = vector.broadcast %cst_325 : f32 to vector<4x32xf32>
    %903 = arith.addf %901, %902 : vector<4x32xf32>
    %cst_326 = arith.constant 5.000000e-01 : f32
    %904 = vector.broadcast %cst_326 : f32 to vector<4x32xf32>
    %905 = arith.mulf %904, %903 : vector<4x32xf32>
    %906 = arith.mulf %895, %875 : vector<4x32xf32>
    %907 = arith.mulf %887, %897 : vector<4x32xf32>
    %908 = arith.addf %906, %907 : vector<4x32xf32>
    %909 = math.tanh %908 : vector<4x32xf32>
    %910 = arith.mulf %905, %909 : vector<4x32xf32>
    %c0_327 = arith.constant 0 : index
    %c0_328 = arith.constant 0 : index
    %911 = vector.load %arg12[%c0_327, %c0_328] : memref<32x128xf32, #tpu.memory_space<vmem>>, vector<32x128xf32>
    %c0_329 = arith.constant 0 : index
    %c0_330 = arith.constant 0 : index
    %912 = vector.load %arg13[%c0_329, %c0_330] : memref<32x128xf32, #tpu.memory_space<vmem>>, vector<32x128xf32>
    %c0_331 = arith.constant 0 : index
    %c0_332 = arith.constant 0 : index
    %913 = vector.load %arg14[%c0_331, %c0_332] : memref<1x128xf32, #tpu.memory_space<vmem>>, vector<1x128xf32>
    %cst_333 = arith.constant dense<0.000000e+00> : vector<4x128xf32>
    %914 = tpu.matmul %679, %911, %cst_333 {dimension_numbers = #tpu.dot_dimension_numbers<[1], [0], [0], [1], [0, 0, 1, 1], [], []>} : vector<4x32xf32>, vector<32x128xf32>, vector<4x128xf32> -> vector<4x128xf32>
    %915 = vector.broadcast %913 : vector<1x128xf32> to vector<4x128xf32>
    %916 = arith.addf %914, %915 : vector<4x128xf32>
    %cst_334 = arith.constant dense<0.000000e+00> : vector<4x128xf32>
    %917 = tpu.matmul %712, %911, %cst_334 {dimension_numbers = #tpu.dot_dimension_numbers<[1], [0], [0], [1], [0, 0, 1, 1], [], []>} : vector<4x32xf32>, vector<32x128xf32>, vector<4x128xf32> -> vector<4x128xf32>
    %918 = vector.broadcast %913 : vector<1x128xf32> to vector<4x128xf32>
    %919 = arith.addf %917, %918 : vector<4x128xf32>
    %cst_335 = arith.constant dense<0.000000e+00> : vector<4x128xf32>
    %920 = tpu.matmul %745, %911, %cst_335 {dimension_numbers = #tpu.dot_dimension_numbers<[1], [0], [0], [1], [0, 0, 1, 1], [], []>} : vector<4x32xf32>, vector<32x128xf32>, vector<4x128xf32> -> vector<4x128xf32>
    %921 = vector.broadcast %913 : vector<1x128xf32> to vector<4x128xf32>
    %922 = arith.addf %920, %921 : vector<4x128xf32>
    %cst_336 = arith.constant dense<0.000000e+00> : vector<4x128xf32>
    %923 = tpu.matmul %778, %911, %cst_336 {dimension_numbers = #tpu.dot_dimension_numbers<[1], [0], [0], [1], [0, 0, 1, 1], [], []>} : vector<4x32xf32>, vector<32x128xf32>, vector<4x128xf32> -> vector<4x128xf32>
    %924 = vector.broadcast %913 : vector<1x128xf32> to vector<4x128xf32>
    %925 = arith.addf %923, %924 : vector<4x128xf32>
    %cst_337 = arith.constant dense<0.000000e+00> : vector<4x128xf32>
    %926 = tpu.matmul %811, %911, %cst_337 {dimension_numbers = #tpu.dot_dimension_numbers<[1], [0], [0], [1], [0, 0, 1, 1], [], []>} : vector<4x32xf32>, vector<32x128xf32>, vector<4x128xf32> -> vector<4x128xf32>
    %927 = vector.broadcast %913 : vector<1x128xf32> to vector<4x128xf32>
    %928 = arith.addf %926, %927 : vector<4x128xf32>
    %cst_338 = arith.constant dense<0.000000e+00> : vector<4x128xf32>
    %929 = tpu.matmul %844, %911, %cst_338 {dimension_numbers = #tpu.dot_dimension_numbers<[1], [0], [0], [1], [0, 0, 1, 1], [], []>} : vector<4x32xf32>, vector<32x128xf32>, vector<4x128xf32> -> vector<4x128xf32>
    %930 = vector.broadcast %913 : vector<1x128xf32> to vector<4x128xf32>
    %931 = arith.addf %929, %930 : vector<4x128xf32>
    %cst_339 = arith.constant dense<0.000000e+00> : vector<4x128xf32>
    %932 = tpu.matmul %877, %911, %cst_339 {dimension_numbers = #tpu.dot_dimension_numbers<[1], [0], [0], [1], [0, 0, 1, 1], [], []>} : vector<4x32xf32>, vector<32x128xf32>, vector<4x128xf32> -> vector<4x128xf32>
    %933 = vector.broadcast %913 : vector<1x128xf32> to vector<4x128xf32>
    %934 = arith.addf %932, %933 : vector<4x128xf32>
    %cst_340 = arith.constant dense<0.000000e+00> : vector<4x128xf32>
    %935 = tpu.matmul %910, %911, %cst_340 {dimension_numbers = #tpu.dot_dimension_numbers<[1], [0], [0], [1], [0, 0, 1, 1], [], []>} : vector<4x32xf32>, vector<32x128xf32>, vector<4x128xf32> -> vector<4x128xf32>
    %936 = vector.broadcast %913 : vector<1x128xf32> to vector<4x128xf32>
    %937 = arith.addf %935, %936 : vector<4x128xf32>
    %cst_341 = arith.constant 0.000000e+00 : f32
    %938 = vector.broadcast %cst_341 : f32 to vector<4x32xf32>
    %cst_342 = arith.constant 0.000000e+00 : f32
    %939 = vector.broadcast %cst_342 : f32 to vector<4x32xf32>
    %cst_343 = arith.constant dense<0.000000e+00> : vector<4x128xf32>
    %940 = tpu.matmul %938, %912, %cst_343 {dimension_numbers = #tpu.dot_dimension_numbers<[1], [0], [0], [1], [0, 0, 1, 1], [], []>} : vector<4x32xf32>, vector<32x128xf32>, vector<4x128xf32> -> vector<4x128xf32>
    %941 = arith.addf %916, %940 : vector<4x128xf32>
    %942 = vector.extract_strided_slice %941 {offsets = [0, 0], sizes = [4, 32], strides = [1, 1]} : vector<4x128xf32> to vector<4x32xf32>
    %cst_344 = arith.constant 5.000000e-01 : f32
    %943 = vector.broadcast %cst_344 : f32 to vector<4x32xf32>
    %944 = arith.mulf %943, %942 : vector<4x32xf32>
    %945 = math.tanh %944 : vector<4x32xf32>
    %cst_345 = arith.constant 1.000000e+00 : f32
    %946 = vector.broadcast %cst_345 : f32 to vector<4x32xf32>
    %947 = arith.addf %945, %946 : vector<4x32xf32>
    %cst_346 = arith.constant 5.000000e-01 : f32
    %948 = vector.broadcast %cst_346 : f32 to vector<4x32xf32>
    %949 = arith.mulf %948, %947 : vector<4x32xf32>
    %950 = vector.extract_strided_slice %941 {offsets = [0, 32], sizes = [4, 32], strides = [1, 1]} : vector<4x128xf32> to vector<4x32xf32>
    %cst_347 = arith.constant 5.000000e-01 : f32
    %951 = vector.broadcast %cst_347 : f32 to vector<4x32xf32>
    %952 = arith.mulf %951, %950 : vector<4x32xf32>
    %953 = math.tanh %952 : vector<4x32xf32>
    %cst_348 = arith.constant 1.000000e+00 : f32
    %954 = vector.broadcast %cst_348 : f32 to vector<4x32xf32>
    %955 = arith.addf %953, %954 : vector<4x32xf32>
    %cst_349 = arith.constant 5.000000e-01 : f32
    %956 = vector.broadcast %cst_349 : f32 to vector<4x32xf32>
    %957 = arith.mulf %956, %955 : vector<4x32xf32>
    %958 = vector.extract_strided_slice %941 {offsets = [0, 64], sizes = [4, 32], strides = [1, 1]} : vector<4x128xf32> to vector<4x32xf32>
    %959 = math.tanh %958 : vector<4x32xf32>
    %960 = vector.extract_strided_slice %941 {offsets = [0, 96], sizes = [4, 32], strides = [1, 1]} : vector<4x128xf32> to vector<4x32xf32>
    %cst_350 = arith.constant 5.000000e-01 : f32
    %961 = vector.broadcast %cst_350 : f32 to vector<4x32xf32>
    %962 = arith.mulf %961, %960 : vector<4x32xf32>
    %963 = math.tanh %962 : vector<4x32xf32>
    %cst_351 = arith.constant 1.000000e+00 : f32
    %964 = vector.broadcast %cst_351 : f32 to vector<4x32xf32>
    %965 = arith.addf %963, %964 : vector<4x32xf32>
    %cst_352 = arith.constant 5.000000e-01 : f32
    %966 = vector.broadcast %cst_352 : f32 to vector<4x32xf32>
    %967 = arith.mulf %966, %965 : vector<4x32xf32>
    %968 = arith.mulf %957, %939 : vector<4x32xf32>
    %969 = arith.mulf %949, %959 : vector<4x32xf32>
    %970 = arith.addf %968, %969 : vector<4x32xf32>
    %971 = math.tanh %970 : vector<4x32xf32>
    %972 = arith.mulf %967, %971 : vector<4x32xf32>
    %cst_353 = arith.constant dense<0.000000e+00> : vector<4x128xf32>
    %973 = tpu.matmul %972, %912, %cst_353 {dimension_numbers = #tpu.dot_dimension_numbers<[1], [0], [0], [1], [0, 0, 1, 1], [], []>} : vector<4x32xf32>, vector<32x128xf32>, vector<4x128xf32> -> vector<4x128xf32>
    %974 = arith.addf %919, %973 : vector<4x128xf32>
    %975 = vector.extract_strided_slice %974 {offsets = [0, 0], sizes = [4, 32], strides = [1, 1]} : vector<4x128xf32> to vector<4x32xf32>
    %cst_354 = arith.constant 5.000000e-01 : f32
    %976 = vector.broadcast %cst_354 : f32 to vector<4x32xf32>
    %977 = arith.mulf %976, %975 : vector<4x32xf32>
    %978 = math.tanh %977 : vector<4x32xf32>
    %cst_355 = arith.constant 1.000000e+00 : f32
    %979 = vector.broadcast %cst_355 : f32 to vector<4x32xf32>
    %980 = arith.addf %978, %979 : vector<4x32xf32>
    %cst_356 = arith.constant 5.000000e-01 : f32
    %981 = vector.broadcast %cst_356 : f32 to vector<4x32xf32>
    %982 = arith.mulf %981, %980 : vector<4x32xf32>
    %983 = vector.extract_strided_slice %974 {offsets = [0, 32], sizes = [4, 32], strides = [1, 1]} : vector<4x128xf32> to vector<4x32xf32>
    %cst_357 = arith.constant 5.000000e-01 : f32
    %984 = vector.broadcast %cst_357 : f32 to vector<4x32xf32>
    %985 = arith.mulf %984, %983 : vector<4x32xf32>
    %986 = math.tanh %985 : vector<4x32xf32>
    %cst_358 = arith.constant 1.000000e+00 : f32
    %987 = vector.broadcast %cst_358 : f32 to vector<4x32xf32>
    %988 = arith.addf %986, %987 : vector<4x32xf32>
    %cst_359 = arith.constant 5.000000e-01 : f32
    %989 = vector.broadcast %cst_359 : f32 to vector<4x32xf32>
    %990 = arith.mulf %989, %988 : vector<4x32xf32>
    %991 = vector.extract_strided_slice %974 {offsets = [0, 64], sizes = [4, 32], strides = [1, 1]} : vector<4x128xf32> to vector<4x32xf32>
    %992 = math.tanh %991 : vector<4x32xf32>
    %993 = vector.extract_strided_slice %974 {offsets = [0, 96], sizes = [4, 32], strides = [1, 1]} : vector<4x128xf32> to vector<4x32xf32>
    %cst_360 = arith.constant 5.000000e-01 : f32
    %994 = vector.broadcast %cst_360 : f32 to vector<4x32xf32>
    %995 = arith.mulf %994, %993 : vector<4x32xf32>
    %996 = math.tanh %995 : vector<4x32xf32>
    %cst_361 = arith.constant 1.000000e+00 : f32
    %997 = vector.broadcast %cst_361 : f32 to vector<4x32xf32>
    %998 = arith.addf %996, %997 : vector<4x32xf32>
    %cst_362 = arith.constant 5.000000e-01 : f32
    %999 = vector.broadcast %cst_362 : f32 to vector<4x32xf32>
    %1000 = arith.mulf %999, %998 : vector<4x32xf32>
    %1001 = arith.mulf %990, %970 : vector<4x32xf32>
    %1002 = arith.mulf %982, %992 : vector<4x32xf32>
    %1003 = arith.addf %1001, %1002 : vector<4x32xf32>
    %1004 = math.tanh %1003 : vector<4x32xf32>
    %1005 = arith.mulf %1000, %1004 : vector<4x32xf32>
    %cst_363 = arith.constant dense<0.000000e+00> : vector<4x128xf32>
    %1006 = tpu.matmul %1005, %912, %cst_363 {dimension_numbers = #tpu.dot_dimension_numbers<[1], [0], [0], [1], [0, 0, 1, 1], [], []>} : vector<4x32xf32>, vector<32x128xf32>, vector<4x128xf32> -> vector<4x128xf32>
    %1007 = arith.addf %922, %1006 : vector<4x128xf32>
    %1008 = vector.extract_strided_slice %1007 {offsets = [0, 0], sizes = [4, 32], strides = [1, 1]} : vector<4x128xf32> to vector<4x32xf32>
    %cst_364 = arith.constant 5.000000e-01 : f32
    %1009 = vector.broadcast %cst_364 : f32 to vector<4x32xf32>
    %1010 = arith.mulf %1009, %1008 : vector<4x32xf32>
    %1011 = math.tanh %1010 : vector<4x32xf32>
    %cst_365 = arith.constant 1.000000e+00 : f32
    %1012 = vector.broadcast %cst_365 : f32 to vector<4x32xf32>
    %1013 = arith.addf %1011, %1012 : vector<4x32xf32>
    %cst_366 = arith.constant 5.000000e-01 : f32
    %1014 = vector.broadcast %cst_366 : f32 to vector<4x32xf32>
    %1015 = arith.mulf %1014, %1013 : vector<4x32xf32>
    %1016 = vector.extract_strided_slice %1007 {offsets = [0, 32], sizes = [4, 32], strides = [1, 1]} : vector<4x128xf32> to vector<4x32xf32>
    %cst_367 = arith.constant 5.000000e-01 : f32
    %1017 = vector.broadcast %cst_367 : f32 to vector<4x32xf32>
    %1018 = arith.mulf %1017, %1016 : vector<4x32xf32>
    %1019 = math.tanh %1018 : vector<4x32xf32>
    %cst_368 = arith.constant 1.000000e+00 : f32
    %1020 = vector.broadcast %cst_368 : f32 to vector<4x32xf32>
    %1021 = arith.addf %1019, %1020 : vector<4x32xf32>
    %cst_369 = arith.constant 5.000000e-01 : f32
    %1022 = vector.broadcast %cst_369 : f32 to vector<4x32xf32>
    %1023 = arith.mulf %1022, %1021 : vector<4x32xf32>
    %1024 = vector.extract_strided_slice %1007 {offsets = [0, 64], sizes = [4, 32], strides = [1, 1]} : vector<4x128xf32> to vector<4x32xf32>
    %1025 = math.tanh %1024 : vector<4x32xf32>
    %1026 = vector.extract_strided_slice %1007 {offsets = [0, 96], sizes = [4, 32], strides = [1, 1]} : vector<4x128xf32> to vector<4x32xf32>
    %cst_370 = arith.constant 5.000000e-01 : f32
    %1027 = vector.broadcast %cst_370 : f32 to vector<4x32xf32>
    %1028 = arith.mulf %1027, %1026 : vector<4x32xf32>
    %1029 = math.tanh %1028 : vector<4x32xf32>
    %cst_371 = arith.constant 1.000000e+00 : f32
    %1030 = vector.broadcast %cst_371 : f32 to vector<4x32xf32>
    %1031 = arith.addf %1029, %1030 : vector<4x32xf32>
    %cst_372 = arith.constant 5.000000e-01 : f32
    %1032 = vector.broadcast %cst_372 : f32 to vector<4x32xf32>
    %1033 = arith.mulf %1032, %1031 : vector<4x32xf32>
    %1034 = arith.mulf %1023, %1003 : vector<4x32xf32>
    %1035 = arith.mulf %1015, %1025 : vector<4x32xf32>
    %1036 = arith.addf %1034, %1035 : vector<4x32xf32>
    %1037 = math.tanh %1036 : vector<4x32xf32>
    %1038 = arith.mulf %1033, %1037 : vector<4x32xf32>
    %cst_373 = arith.constant dense<0.000000e+00> : vector<4x128xf32>
    %1039 = tpu.matmul %1038, %912, %cst_373 {dimension_numbers = #tpu.dot_dimension_numbers<[1], [0], [0], [1], [0, 0, 1, 1], [], []>} : vector<4x32xf32>, vector<32x128xf32>, vector<4x128xf32> -> vector<4x128xf32>
    %1040 = arith.addf %925, %1039 : vector<4x128xf32>
    %1041 = vector.extract_strided_slice %1040 {offsets = [0, 0], sizes = [4, 32], strides = [1, 1]} : vector<4x128xf32> to vector<4x32xf32>
    %cst_374 = arith.constant 5.000000e-01 : f32
    %1042 = vector.broadcast %cst_374 : f32 to vector<4x32xf32>
    %1043 = arith.mulf %1042, %1041 : vector<4x32xf32>
    %1044 = math.tanh %1043 : vector<4x32xf32>
    %cst_375 = arith.constant 1.000000e+00 : f32
    %1045 = vector.broadcast %cst_375 : f32 to vector<4x32xf32>
    %1046 = arith.addf %1044, %1045 : vector<4x32xf32>
    %cst_376 = arith.constant 5.000000e-01 : f32
    %1047 = vector.broadcast %cst_376 : f32 to vector<4x32xf32>
    %1048 = arith.mulf %1047, %1046 : vector<4x32xf32>
    %1049 = vector.extract_strided_slice %1040 {offsets = [0, 32], sizes = [4, 32], strides = [1, 1]} : vector<4x128xf32> to vector<4x32xf32>
    %cst_377 = arith.constant 5.000000e-01 : f32
    %1050 = vector.broadcast %cst_377 : f32 to vector<4x32xf32>
    %1051 = arith.mulf %1050, %1049 : vector<4x32xf32>
    %1052 = math.tanh %1051 : vector<4x32xf32>
    %cst_378 = arith.constant 1.000000e+00 : f32
    %1053 = vector.broadcast %cst_378 : f32 to vector<4x32xf32>
    %1054 = arith.addf %1052, %1053 : vector<4x32xf32>
    %cst_379 = arith.constant 5.000000e-01 : f32
    %1055 = vector.broadcast %cst_379 : f32 to vector<4x32xf32>
    %1056 = arith.mulf %1055, %1054 : vector<4x32xf32>
    %1057 = vector.extract_strided_slice %1040 {offsets = [0, 64], sizes = [4, 32], strides = [1, 1]} : vector<4x128xf32> to vector<4x32xf32>
    %1058 = math.tanh %1057 : vector<4x32xf32>
    %1059 = vector.extract_strided_slice %1040 {offsets = [0, 96], sizes = [4, 32], strides = [1, 1]} : vector<4x128xf32> to vector<4x32xf32>
    %cst_380 = arith.constant 5.000000e-01 : f32
    %1060 = vector.broadcast %cst_380 : f32 to vector<4x32xf32>
    %1061 = arith.mulf %1060, %1059 : vector<4x32xf32>
    %1062 = math.tanh %1061 : vector<4x32xf32>
    %cst_381 = arith.constant 1.000000e+00 : f32
    %1063 = vector.broadcast %cst_381 : f32 to vector<4x32xf32>
    %1064 = arith.addf %1062, %1063 : vector<4x32xf32>
    %cst_382 = arith.constant 5.000000e-01 : f32
    %1065 = vector.broadcast %cst_382 : f32 to vector<4x32xf32>
    %1066 = arith.mulf %1065, %1064 : vector<4x32xf32>
    %1067 = arith.mulf %1056, %1036 : vector<4x32xf32>
    %1068 = arith.mulf %1048, %1058 : vector<4x32xf32>
    %1069 = arith.addf %1067, %1068 : vector<4x32xf32>
    %1070 = math.tanh %1069 : vector<4x32xf32>
    %1071 = arith.mulf %1066, %1070 : vector<4x32xf32>
    %cst_383 = arith.constant dense<0.000000e+00> : vector<4x128xf32>
    %1072 = tpu.matmul %1071, %912, %cst_383 {dimension_numbers = #tpu.dot_dimension_numbers<[1], [0], [0], [1], [0, 0, 1, 1], [], []>} : vector<4x32xf32>, vector<32x128xf32>, vector<4x128xf32> -> vector<4x128xf32>
    %1073 = arith.addf %928, %1072 : vector<4x128xf32>
    %1074 = vector.extract_strided_slice %1073 {offsets = [0, 0], sizes = [4, 32], strides = [1, 1]} : vector<4x128xf32> to vector<4x32xf32>
    %cst_384 = arith.constant 5.000000e-01 : f32
    %1075 = vector.broadcast %cst_384 : f32 to vector<4x32xf32>
    %1076 = arith.mulf %1075, %1074 : vector<4x32xf32>
    %1077 = math.tanh %1076 : vector<4x32xf32>
    %cst_385 = arith.constant 1.000000e+00 : f32
    %1078 = vector.broadcast %cst_385 : f32 to vector<4x32xf32>
    %1079 = arith.addf %1077, %1078 : vector<4x32xf32>
    %cst_386 = arith.constant 5.000000e-01 : f32
    %1080 = vector.broadcast %cst_386 : f32 to vector<4x32xf32>
    %1081 = arith.mulf %1080, %1079 : vector<4x32xf32>
    %1082 = vector.extract_strided_slice %1073 {offsets = [0, 32], sizes = [4, 32], strides = [1, 1]} : vector<4x128xf32> to vector<4x32xf32>
    %cst_387 = arith.constant 5.000000e-01 : f32
    %1083 = vector.broadcast %cst_387 : f32 to vector<4x32xf32>
    %1084 = arith.mulf %1083, %1082 : vector<4x32xf32>
    %1085 = math.tanh %1084 : vector<4x32xf32>
    %cst_388 = arith.constant 1.000000e+00 : f32
    %1086 = vector.broadcast %cst_388 : f32 to vector<4x32xf32>
    %1087 = arith.addf %1085, %1086 : vector<4x32xf32>
    %cst_389 = arith.constant 5.000000e-01 : f32
    %1088 = vector.broadcast %cst_389 : f32 to vector<4x32xf32>
    %1089 = arith.mulf %1088, %1087 : vector<4x32xf32>
    %1090 = vector.extract_strided_slice %1073 {offsets = [0, 64], sizes = [4, 32], strides = [1, 1]} : vector<4x128xf32> to vector<4x32xf32>
    %1091 = math.tanh %1090 : vector<4x32xf32>
    %1092 = vector.extract_strided_slice %1073 {offsets = [0, 96], sizes = [4, 32], strides = [1, 1]} : vector<4x128xf32> to vector<4x32xf32>
    %cst_390 = arith.constant 5.000000e-01 : f32
    %1093 = vector.broadcast %cst_390 : f32 to vector<4x32xf32>
    %1094 = arith.mulf %1093, %1092 : vector<4x32xf32>
    %1095 = math.tanh %1094 : vector<4x32xf32>
    %cst_391 = arith.constant 1.000000e+00 : f32
    %1096 = vector.broadcast %cst_391 : f32 to vector<4x32xf32>
    %1097 = arith.addf %1095, %1096 : vector<4x32xf32>
    %cst_392 = arith.constant 5.000000e-01 : f32
    %1098 = vector.broadcast %cst_392 : f32 to vector<4x32xf32>
    %1099 = arith.mulf %1098, %1097 : vector<4x32xf32>
    %1100 = arith.mulf %1089, %1069 : vector<4x32xf32>
    %1101 = arith.mulf %1081, %1091 : vector<4x32xf32>
    %1102 = arith.addf %1100, %1101 : vector<4x32xf32>
    %1103 = math.tanh %1102 : vector<4x32xf32>
    %1104 = arith.mulf %1099, %1103 : vector<4x32xf32>
    %cst_393 = arith.constant dense<0.000000e+00> : vector<4x128xf32>
    %1105 = tpu.matmul %1104, %912, %cst_393 {dimension_numbers = #tpu.dot_dimension_numbers<[1], [0], [0], [1], [0, 0, 1, 1], [], []>} : vector<4x32xf32>, vector<32x128xf32>, vector<4x128xf32> -> vector<4x128xf32>
    %1106 = arith.addf %931, %1105 : vector<4x128xf32>
    %1107 = vector.extract_strided_slice %1106 {offsets = [0, 0], sizes = [4, 32], strides = [1, 1]} : vector<4x128xf32> to vector<4x32xf32>
    %cst_394 = arith.constant 5.000000e-01 : f32
    %1108 = vector.broadcast %cst_394 : f32 to vector<4x32xf32>
    %1109 = arith.mulf %1108, %1107 : vector<4x32xf32>
    %1110 = math.tanh %1109 : vector<4x32xf32>
    %cst_395 = arith.constant 1.000000e+00 : f32
    %1111 = vector.broadcast %cst_395 : f32 to vector<4x32xf32>
    %1112 = arith.addf %1110, %1111 : vector<4x32xf32>
    %cst_396 = arith.constant 5.000000e-01 : f32
    %1113 = vector.broadcast %cst_396 : f32 to vector<4x32xf32>
    %1114 = arith.mulf %1113, %1112 : vector<4x32xf32>
    %1115 = vector.extract_strided_slice %1106 {offsets = [0, 32], sizes = [4, 32], strides = [1, 1]} : vector<4x128xf32> to vector<4x32xf32>
    %cst_397 = arith.constant 5.000000e-01 : f32
    %1116 = vector.broadcast %cst_397 : f32 to vector<4x32xf32>
    %1117 = arith.mulf %1116, %1115 : vector<4x32xf32>
    %1118 = math.tanh %1117 : vector<4x32xf32>
    %cst_398 = arith.constant 1.000000e+00 : f32
    %1119 = vector.broadcast %cst_398 : f32 to vector<4x32xf32>
    %1120 = arith.addf %1118, %1119 : vector<4x32xf32>
    %cst_399 = arith.constant 5.000000e-01 : f32
    %1121 = vector.broadcast %cst_399 : f32 to vector<4x32xf32>
    %1122 = arith.mulf %1121, %1120 : vector<4x32xf32>
    %1123 = vector.extract_strided_slice %1106 {offsets = [0, 64], sizes = [4, 32], strides = [1, 1]} : vector<4x128xf32> to vector<4x32xf32>
    %1124 = math.tanh %1123 : vector<4x32xf32>
    %1125 = vector.extract_strided_slice %1106 {offsets = [0, 96], sizes = [4, 32], strides = [1, 1]} : vector<4x128xf32> to vector<4x32xf32>
    %cst_400 = arith.constant 5.000000e-01 : f32
    %1126 = vector.broadcast %cst_400 : f32 to vector<4x32xf32>
    %1127 = arith.mulf %1126, %1125 : vector<4x32xf32>
    %1128 = math.tanh %1127 : vector<4x32xf32>
    %cst_401 = arith.constant 1.000000e+00 : f32
    %1129 = vector.broadcast %cst_401 : f32 to vector<4x32xf32>
    %1130 = arith.addf %1128, %1129 : vector<4x32xf32>
    %cst_402 = arith.constant 5.000000e-01 : f32
    %1131 = vector.broadcast %cst_402 : f32 to vector<4x32xf32>
    %1132 = arith.mulf %1131, %1130 : vector<4x32xf32>
    %1133 = arith.mulf %1122, %1102 : vector<4x32xf32>
    %1134 = arith.mulf %1114, %1124 : vector<4x32xf32>
    %1135 = arith.addf %1133, %1134 : vector<4x32xf32>
    %1136 = math.tanh %1135 : vector<4x32xf32>
    %1137 = arith.mulf %1132, %1136 : vector<4x32xf32>
    %cst_403 = arith.constant dense<0.000000e+00> : vector<4x128xf32>
    %1138 = tpu.matmul %1137, %912, %cst_403 {dimension_numbers = #tpu.dot_dimension_numbers<[1], [0], [0], [1], [0, 0, 1, 1], [], []>} : vector<4x32xf32>, vector<32x128xf32>, vector<4x128xf32> -> vector<4x128xf32>
    %1139 = arith.addf %934, %1138 : vector<4x128xf32>
    %1140 = vector.extract_strided_slice %1139 {offsets = [0, 0], sizes = [4, 32], strides = [1, 1]} : vector<4x128xf32> to vector<4x32xf32>
    %cst_404 = arith.constant 5.000000e-01 : f32
    %1141 = vector.broadcast %cst_404 : f32 to vector<4x32xf32>
    %1142 = arith.mulf %1141, %1140 : vector<4x32xf32>
    %1143 = math.tanh %1142 : vector<4x32xf32>
    %cst_405 = arith.constant 1.000000e+00 : f32
    %1144 = vector.broadcast %cst_405 : f32 to vector<4x32xf32>
    %1145 = arith.addf %1143, %1144 : vector<4x32xf32>
    %cst_406 = arith.constant 5.000000e-01 : f32
    %1146 = vector.broadcast %cst_406 : f32 to vector<4x32xf32>
    %1147 = arith.mulf %1146, %1145 : vector<4x32xf32>
    %1148 = vector.extract_strided_slice %1139 {offsets = [0, 32], sizes = [4, 32], strides = [1, 1]} : vector<4x128xf32> to vector<4x32xf32>
    %cst_407 = arith.constant 5.000000e-01 : f32
    %1149 = vector.broadcast %cst_407 : f32 to vector<4x32xf32>
    %1150 = arith.mulf %1149, %1148 : vector<4x32xf32>
    %1151 = math.tanh %1150 : vector<4x32xf32>
    %cst_408 = arith.constant 1.000000e+00 : f32
    %1152 = vector.broadcast %cst_408 : f32 to vector<4x32xf32>
    %1153 = arith.addf %1151, %1152 : vector<4x32xf32>
    %cst_409 = arith.constant 5.000000e-01 : f32
    %1154 = vector.broadcast %cst_409 : f32 to vector<4x32xf32>
    %1155 = arith.mulf %1154, %1153 : vector<4x32xf32>
    %1156 = vector.extract_strided_slice %1139 {offsets = [0, 64], sizes = [4, 32], strides = [1, 1]} : vector<4x128xf32> to vector<4x32xf32>
    %1157 = math.tanh %1156 : vector<4x32xf32>
    %1158 = vector.extract_strided_slice %1139 {offsets = [0, 96], sizes = [4, 32], strides = [1, 1]} : vector<4x128xf32> to vector<4x32xf32>
    %cst_410 = arith.constant 5.000000e-01 : f32
    %1159 = vector.broadcast %cst_410 : f32 to vector<4x32xf32>
    %1160 = arith.mulf %1159, %1158 : vector<4x32xf32>
    %1161 = math.tanh %1160 : vector<4x32xf32>
    %cst_411 = arith.constant 1.000000e+00 : f32
    %1162 = vector.broadcast %cst_411 : f32 to vector<4x32xf32>
    %1163 = arith.addf %1161, %1162 : vector<4x32xf32>
    %cst_412 = arith.constant 5.000000e-01 : f32
    %1164 = vector.broadcast %cst_412 : f32 to vector<4x32xf32>
    %1165 = arith.mulf %1164, %1163 : vector<4x32xf32>
    %1166 = arith.mulf %1155, %1135 : vector<4x32xf32>
    %1167 = arith.mulf %1147, %1157 : vector<4x32xf32>
    %1168 = arith.addf %1166, %1167 : vector<4x32xf32>
    %1169 = math.tanh %1168 : vector<4x32xf32>
    %1170 = arith.mulf %1165, %1169 : vector<4x32xf32>
    %cst_413 = arith.constant dense<0.000000e+00> : vector<4x128xf32>
    %1171 = tpu.matmul %1170, %912, %cst_413 {dimension_numbers = #tpu.dot_dimension_numbers<[1], [0], [0], [1], [0, 0, 1, 1], [], []>} : vector<4x32xf32>, vector<32x128xf32>, vector<4x128xf32> -> vector<4x128xf32>
    %1172 = arith.addf %937, %1171 : vector<4x128xf32>
    %1173 = vector.extract_strided_slice %1172 {offsets = [0, 0], sizes = [4, 32], strides = [1, 1]} : vector<4x128xf32> to vector<4x32xf32>
    %cst_414 = arith.constant 5.000000e-01 : f32
    %1174 = vector.broadcast %cst_414 : f32 to vector<4x32xf32>
    %1175 = arith.mulf %1174, %1173 : vector<4x32xf32>
    %1176 = math.tanh %1175 : vector<4x32xf32>
    %cst_415 = arith.constant 1.000000e+00 : f32
    %1177 = vector.broadcast %cst_415 : f32 to vector<4x32xf32>
    %1178 = arith.addf %1176, %1177 : vector<4x32xf32>
    %cst_416 = arith.constant 5.000000e-01 : f32
    %1179 = vector.broadcast %cst_416 : f32 to vector<4x32xf32>
    %1180 = arith.mulf %1179, %1178 : vector<4x32xf32>
    %1181 = vector.extract_strided_slice %1172 {offsets = [0, 32], sizes = [4, 32], strides = [1, 1]} : vector<4x128xf32> to vector<4x32xf32>
    %cst_417 = arith.constant 5.000000e-01 : f32
    %1182 = vector.broadcast %cst_417 : f32 to vector<4x32xf32>
    %1183 = arith.mulf %1182, %1181 : vector<4x32xf32>
    %1184 = math.tanh %1183 : vector<4x32xf32>
    %cst_418 = arith.constant 1.000000e+00 : f32
    %1185 = vector.broadcast %cst_418 : f32 to vector<4x32xf32>
    %1186 = arith.addf %1184, %1185 : vector<4x32xf32>
    %cst_419 = arith.constant 5.000000e-01 : f32
    %1187 = vector.broadcast %cst_419 : f32 to vector<4x32xf32>
    %1188 = arith.mulf %1187, %1186 : vector<4x32xf32>
    %1189 = vector.extract_strided_slice %1172 {offsets = [0, 64], sizes = [4, 32], strides = [1, 1]} : vector<4x128xf32> to vector<4x32xf32>
    %1190 = math.tanh %1189 : vector<4x32xf32>
    %1191 = vector.extract_strided_slice %1172 {offsets = [0, 96], sizes = [4, 32], strides = [1, 1]} : vector<4x128xf32> to vector<4x32xf32>
    %cst_420 = arith.constant 5.000000e-01 : f32
    %1192 = vector.broadcast %cst_420 : f32 to vector<4x32xf32>
    %1193 = arith.mulf %1192, %1191 : vector<4x32xf32>
    %1194 = math.tanh %1193 : vector<4x32xf32>
    %cst_421 = arith.constant 1.000000e+00 : f32
    %1195 = vector.broadcast %cst_421 : f32 to vector<4x32xf32>
    %1196 = arith.addf %1194, %1195 : vector<4x32xf32>
    %cst_422 = arith.constant 5.000000e-01 : f32
    %1197 = vector.broadcast %cst_422 : f32 to vector<4x32xf32>
    %1198 = arith.mulf %1197, %1196 : vector<4x32xf32>
    %1199 = arith.mulf %1188, %1168 : vector<4x32xf32>
    %1200 = arith.mulf %1180, %1190 : vector<4x32xf32>
    %1201 = arith.addf %1199, %1200 : vector<4x32xf32>
    %1202 = math.tanh %1201 : vector<4x32xf32>
    %1203 = arith.mulf %1198, %1202 : vector<4x32xf32>
    %c0_423 = arith.constant 0 : index
    %c0_424 = arith.constant 0 : index
    %1204 = vector.load %arg2[%c0_423, %c0_424] : memref<4x10xf32, #tpu.memory_space<vmem>>, vector<4x10xf32>
    %c0_425 = arith.constant 0 : index
    %c0_426 = arith.constant 0 : index
    %1205 = vector.load %arg15[%c0_425, %c0_426] : memref<10x32xf32, #tpu.memory_space<vmem>>, vector<10x32xf32>
    %cst_427 = arith.constant dense<0.000000e+00> : vector<4x32xf32>
    %1206 = tpu.matmul %1204, %1205, %cst_427 {dimension_numbers = #tpu.dot_dimension_numbers<[1], [0], [0], [1], [0, 0, 1, 1], [], []>} : vector<4x10xf32>, vector<10x32xf32>, vector<4x32xf32> -> vector<4x32xf32>
    %c0_428 = arith.constant 0 : index
    %c0_429 = arith.constant 0 : index
    %1207 = vector.load %arg16[%c0_428, %c0_429] : memref<1x32xf32, #tpu.memory_space<vmem>>, vector<1x32xf32>
    %1208 = vector.broadcast %1207 : vector<1x32xf32> to vector<4x32xf32>
    %1209 = arith.addf %1206, %1208 : vector<4x32xf32>
    %c0_430 = arith.constant 0 : index
    %c0_431 = arith.constant 0 : index
    %1210 = vector.load %arg17[%c0_430, %c0_431] : memref<32x48xf32, #tpu.memory_space<vmem>>, vector<32x48xf32>
    %cst_432 = arith.constant dense<0.000000e+00> : vector<4x48xf32>
    %1211 = tpu.matmul %601, %1210, %cst_432 {dimension_numbers = #tpu.dot_dimension_numbers<[1], [0], [0], [1], [0, 0, 1, 1], [], []>} : vector<4x32xf32>, vector<32x48xf32>, vector<4x48xf32> -> vector<4x48xf32>
    %c0_433 = arith.constant 0 : index
    %c0_434 = arith.constant 0 : index
    %1212 = vector.load %arg18[%c0_433, %c0_434] : memref<32x48xf32, #tpu.memory_space<vmem>>, vector<32x48xf32>
    %cst_435 = arith.constant dense<0.000000e+00> : vector<4x48xf32>
    %1213 = tpu.matmul %1203, %1212, %cst_435 {dimension_numbers = #tpu.dot_dimension_numbers<[1], [0], [0], [1], [0, 0, 1, 1], [], []>} : vector<4x32xf32>, vector<32x48xf32>, vector<4x48xf32> -> vector<4x48xf32>
    %1214 = arith.addf %1211, %1213 : vector<4x48xf32>
    %c0_436 = arith.constant 0 : index
    %c0_437 = arith.constant 0 : index
    %1215 = vector.load %arg19[%c0_436, %c0_437] : memref<32x48xf32, #tpu.memory_space<vmem>>, vector<32x48xf32>
    %cst_438 = arith.constant dense<0.000000e+00> : vector<4x48xf32>
    %1216 = tpu.matmul %1209, %1215, %cst_438 {dimension_numbers = #tpu.dot_dimension_numbers<[1], [0], [0], [1], [0, 0, 1, 1], [], []>} : vector<4x32xf32>, vector<32x48xf32>, vector<4x48xf32> -> vector<4x48xf32>
    %1217 = arith.addf %1214, %1216 : vector<4x48xf32>
    %c0_439 = arith.constant 0 : index
    %c0_440 = arith.constant 0 : index
    %1218 = vector.load %arg20[%c0_439, %c0_440] : memref<1x48xf32, #tpu.memory_space<vmem>>, vector<1x48xf32>
    %1219 = vector.broadcast %1218 : vector<1x48xf32> to vector<4x48xf32>
    %1220 = arith.addf %1217, %1219 : vector<4x48xf32>
    %1221 = math.tanh %1220 : vector<4x48xf32>
    %c0_441 = arith.constant 0 : index
    %c0_442 = arith.constant 0 : index
    %1222 = vector.load %arg21[%c0_441, %c0_442] : memref<48x24xf32, #tpu.memory_space<vmem>>, vector<48x24xf32>
    %cst_443 = arith.constant dense<0.000000e+00> : vector<4x24xf32>
    %1223 = tpu.matmul %1221, %1222, %cst_443 {dimension_numbers = #tpu.dot_dimension_numbers<[1], [0], [0], [1], [0, 0, 1, 1], [], []>} : vector<4x48xf32>, vector<48x24xf32>, vector<4x24xf32> -> vector<4x24xf32>
    %c0_444 = arith.constant 0 : index
    %c0_445 = arith.constant 0 : index
    %1224 = vector.load %arg22[%c0_444, %c0_445] : memref<1x24xf32, #tpu.memory_space<vmem>>, vector<1x24xf32>
    %1225 = vector.broadcast %1224 : vector<1x24xf32> to vector<4x24xf32>
    %1226 = arith.addf %1223, %1225 : vector<4x24xf32>
    %1227 = math.tanh %1226 : vector<4x24xf32>
    %c0_446 = arith.constant 0 : index
    %c0_447 = arith.constant 0 : index
    %1228 = vector.load %arg23[%c0_446, %c0_447] : memref<24x4xf32, #tpu.memory_space<vmem>>, vector<24x4xf32>
    %cst_448 = arith.constant dense<0.000000e+00> : vector<4x4xf32>
    %1229 = tpu.matmul %1227, %1228, %cst_448 {dimension_numbers = #tpu.dot_dimension_numbers<[1], [0], [0], [1], [0, 0, 1, 1], [], []>} : vector<4x24xf32>, vector<24x4xf32>, vector<4x4xf32> -> vector<4x4xf32>
    %c0_449 = arith.constant 0 : index
    %c0_450 = arith.constant 0 : index
    %1230 = vector.load %arg24[%c0_449, %c0_450] : memref<1x4xf32, #tpu.memory_space<vmem>>, vector<1x4xf32>
    %1231 = vector.broadcast %1230 : vector<1x4xf32> to vector<4x4xf32>
    %1232 = arith.addf %1229, %1231 : vector<4x4xf32>
    %1233 = math.tanh %1232 : vector<4x4xf32>
    %cst_451 = arith.constant 5.000000e-01 : f32
    %1234 = vector.broadcast %cst_451 : f32 to vector<4x4xf32>
    %1235 = arith.mulf %1234, %1233 : vector<4x4xf32>
    %1236 = math.tanh %1235 : vector<4x4xf32>
    %cst_452 = arith.constant 1.000000e+00 : f32
    %1237 = vector.broadcast %cst_452 : f32 to vector<4x4xf32>
    %1238 = arith.addf %1236, %1237 : vector<4x4xf32>
    %cst_453 = arith.constant 5.000000e-01 : f32
    %1239 = vector.broadcast %cst_453 : f32 to vector<4x4xf32>
    %1240 = arith.mulf %1239, %1238 : vector<4x4xf32>
    %c0_454 = arith.constant 0 : index
    %c0_455 = arith.constant 0 : index
    %1241 = vector.load %arg25[%c0_454, %c0_455] : memref<4x4xf32, #tpu.memory_space<vmem>>, vector<4x4xf32>
    tpu.vector_store %arg25[%c0_454, %c0_455], %1240 {strides = array<i32>} : memref<4x4xf32, #tpu.memory_space<vmem>>, vector<4x4xf32>,
    return
  }
}

</mosaic_0001>

<llo_original>
// kernel: tpu_custom_call.1
$region0: #{tpu_custom_call.1}
  #allocation0 [shape = 'u32[]', space=smem, size = 0x4, offset = 0x4, fixed_abs, tag = 'smem constant byte address 0x4 - core index']
  #allocation1 [shape = 'u32[72,128]{1,0:T(1,128)}', space=vmem, size = 0x9000, scoped, tag = 'internal scratch']
  %s0 = inlined_call_operand.vmem [shape: f32[8,4,16], index: 0, kind: input, shape index: {}]
  %s1 = inlined_call_operand.vmem [shape: f32[8,4,12], index: 1, kind: input, shape index: {}]
  %s2 = inlined_call_operand.vmem [shape: f32[4,10], index: 2, kind: input, shape index: {}]
  %s3 = inlined_call_operand.vmem [shape: f32[16,128], index: 3, kind: input, shape index: {}]
  %s4 = inlined_call_operand.hbm [shape: f32[32,128], index: 4, kind: input, shape index: {}]
  %s5 = inlined_call_operand.vmem [shape: f32[1,128], index: 5, kind: input, shape index: {}]
  %s6 = inlined_call_operand.hbm [shape: f32[32,128], index: 6, kind: input, shape index: {}]
  %s7 = inlined_call_operand.hbm [shape: f32[32,128], index: 7, kind: input, shape index: {}]
  %s8 = inlined_call_operand.vmem [shape: f32[1,128], index: 8, kind: input, shape index: {}]
  %s9 = inlined_call_operand.hbm [shape: f32[12,128], index: 9, kind: input, shape index: {}]
  %s10 = inlined_call_operand.hbm [shape: f32[32,128], index: 10, kind: input, shape index: {}]
  %s11 = inlined_call_operand.vmem [shape: f32[1,128], index: 11, kind: input, shape index: {}]
  %s12 = inlined_call_operand.hbm [shape: f32[32,128], index: 12, kind: input, shape index: {}]
  %s13 = inlined_call_operand.hbm [shape: f32[32,128], index: 13, kind: input, shape index: {}]
  %s14 = inlined_call_operand.vmem [shape: f32[1,128], index: 14, kind: input, shape index: {}]
  %s15 = inlined_call_operand.hbm [shape: f32[10,32], index: 15, kind: input, shape index: {}]
  %s16 = inlined_call_operand.vmem [shape: f32[1,32], index: 16, kind: input, shape index: {}]
  %s17 = inlined_call_operand.hbm [shape: f32[32,48], index: 17, kind: input, shape index: {}]
  %s18 = inlined_call_operand.hbm [shape: f32[32,48], index: 18, kind: input, shape index: {}]
  %s19 = inlined_call_operand.hbm [shape: f32[32,48], index: 19, kind: input, shape index: {}]
  %s20 = inlined_call_operand.vmem [shape: f32[1,48], index: 20, kind: input, shape index: {}]
  %s21 = inlined_call_operand.vmem [shape: f32[48,24], index: 21, kind: input, shape index: {}]
  %s22 = inlined_call_operand.vmem [shape: f32[1,24], index: 22, kind: input, shape index: {}]
  %s23 = inlined_call_operand.vmem [shape: f32[24,4], index: 23, kind: input, shape index: {}]
  %s24 = inlined_call_operand.vmem [shape: f32[1,4], index: 24, kind: input, shape index: {}]
  %s25 = inlined_call_operand.hbm [shape: f32[4,4], index: 25, kind: output, shape index: {}]
  %s26 = sld [smem:[#allocation0]]
  $region154: #{tpu_custom_call.1} parent=0
    _
  %s28 = ssub.s32 1, %s26
  %s29 = scalar_select 0, %s28, %s26
  $region1: #{tpu_custom_call.1} parent=0
    #allocation2 [shape = 'u8[16384]{0}', space=vmem, size = 0x4000, scoped, tag = 'input window, operand 4, single buffered']
    #allocation3 [shape = 's32[1]{0}', space=sflag, size = 0x4, scoped, tag = 'scoped memory for tpu_custom_call.1']
    #allocation4 [shape = 's32[1]{0}', space=sflag, size = 0x4, scoped, tag = 'scoped memory for tpu_custom_call.1']
    #allocation5 [shape = 'u8[16384]{0}', space=vmem, size = 0x4000, scoped, tag = 'input window, operand 6, single buffered']
    #allocation6 [shape = 's32[1]{0}', space=sflag, size = 0x4, scoped, tag = 'scoped memory for tpu_custom_call.1']
    #allocation7 [shape = 'u8[16384]{0}', space=vmem, size = 0x4000, scoped, tag = 'input window, operand 7, single buffered']
    #allocation8 [shape = 'u8[8192]{0}', space=vmem, size = 0x2000, scoped, tag = 'input window, operand 9, single buffered']
    #allocation9 [shape = 's32[1]{0}', space=sflag, size = 0x4, scoped, tag = 'scoped memory for tpu_custom_call.1']
    #allocation10 [shape = 'u8[16384]{0}', space=vmem, size = 0x4000, scoped, tag = 'input window, operand 10, single buffered']
    #allocation11 [shape = 'u8[16384]{0}', space=vmem, size = 0x4000, scoped, tag = 'input window, operand 12, single buffered']
    #allocation12 [shape = 's32[1]{0}', space=sflag, size = 0x4, scoped, tag = 'scoped memory for tpu_custom_call.1']
    #allocation13 [shape = 'u8[16384]{0}', space=vmem, size = 0x4000, scoped, tag = 'input window, operand 13, single buffered']
    #allocation14 [shape = 'u8[8192]{0}', space=vmem, size = 0x2000, scoped, tag = 'input window, operand 15, single buffered']
    #allocation15 [shape = 's32[1]{0}', space=sflag, size = 0x4, scoped, tag = 'scoped memory for tpu_custom_call.1']
    #allocation16 [shape = 'u8[16384]{0}', space=vmem, size = 0x4000, scoped, tag = 'input window, operand 17, single buffered']
    #allocation17 [shape = 'u8[16384]{0}', space=vmem, size = 0x4000, scoped, tag = 'input window, operand 18, single buffered']
    #allocation18 [shape = 's32[1]{0}', space=sflag, size = 0x4, scoped, tag = 'scoped memory for tpu_custom_call.1']
    #allocation19 [shape = 'u8[16384]{0}', space=vmem, size = 0x4000, scoped, tag = 'input window, operand 19, single buffered']
    #allocation20 [shape = 'u8[2048]{0}', space=vmem, size = 0x800, scoped, tag = 'output window, operand 0, single buffered']
    %30 = vsyncpa [#allocation3], 0
    %31 = vsyncpa [#allocation6], 0
    %32 = vsyncpa [#allocation9], 0
    %33 = vsyncpa [#allocation12], 0
    %34 = vsyncpa [#allocation15], 0
    %35 = vsyncpa [#allocation18], 0
    %36 = vsyncpa [#allocation4], 0
    // Predicated region
    $region2: #{tpu_custom_call.1} parent=1 // pred_check
      _
    $region3: #{tpu_custom_call.1} parent=1 // pred_check_branch
      %38 = sbr.rel (0) target = $region5
    $region4: #{tpu_custom_call.1} parent=1 // pred_region
      _
    $region5: #{tpu_custom_call.1} parent=1 // pred_fallthru
      _
    // Predicated region
    $region6: #{tpu_custom_call.1} parent=1 // pred_check
      _
    $region7: #{tpu_custom_call.1} parent=1 // pred_check_branch
      %40 = sbr.rel (0) target = $region9
    $region8: #{tpu_custom_call.1} parent=1 // pred_region
      _
    $region9: #{tpu_custom_call.1} parent=1 // pred_fallthru
      _
    // Predicated region
    $region10: #{tpu_custom_call.1} parent=1 // pred_check
      _
    $region11: #{tpu_custom_call.1} parent=1 // pred_check_branch
      %42 = sbr.rel (0) target = $region13
    $region12: #{tpu_custom_call.1} parent=1 // pred_region
      _
    $region13: #{tpu_custom_call.1} parent=1 // pred_fallthru
      _
    // Predicated region
    $region14: #{tpu_custom_call.1} parent=1 // pred_check
      _
    $region15: #{tpu_custom_call.1} parent=1 // pred_check_branch
      %44 = sbr.rel (0) target = $region17
    $region16: #{tpu_custom_call.1} parent=1 // pred_region
      _
    $region17: #{tpu_custom_call.1} parent=1 // pred_fallthru
      _
    // Predicated region
    $region18: #{tpu_custom_call.1} parent=1 // pred_check
      _
    $region19: #{tpu_custom_call.1} parent=1 // pred_check_branch
      %46 = sbr.rel (0) target = $region21
    $region20: #{tpu_custom_call.1} parent=1 // pred_region
      %48 = vsyncadd [#allocation3], 0
      %s49 = sshll.u32 %s4, 4
      %s50 = int_to_ptr.hbm [resolvable:$true] %s49
      %s51 = sshll.u32 [#allocation2], 4
      %s52 = int_to_ptr.vmem [resolvable:$true] %s51
      %57 = dma.hbm_to_vmem [thread:$0]  %s50, 512, %s52, [#allocation3], 128, 128, 8
    $region21: #{tpu_custom_call.1} parent=1 // pred_fallthru
      _
    // Predicated region
    $region22: #{tpu_custom_call.1} parent=1 // pred_check
      _
    $region23: #{tpu_custom_call.1} parent=1 // pred_check_branch
      %59 = sbr.rel (0) target = $region25
    $region24: #{tpu_custom_call.1} parent=1 // pred_region
      _
    $region25: #{tpu_custom_call.1} parent=1 // pred_fallthru
      _
    // Predicated region
    $region26: #{tpu_custom_call.1} parent=1 // pred_check
      _
    $region27: #{tpu_custom_call.1} parent=1 // pred_check_branch
      %61 = sbr.rel (0) target = $region29
    $region28: #{tpu_custom_call.1} parent=1 // pred_region
      %63 = vsyncadd [#allocation6], 0
      %s64 = sshll.u32 %s6, 4
      %s65 = int_to_ptr.hbm [resolvable:$true] %s64
      %s66 = sshll.u32 [#allocation5], 4
      %s67 = int_to_ptr.vmem [resolvable:$true] %s66
      %72 = dma.hbm_to_vmem [thread:$0]  %s65, 512, %s67, [#allocation6], 128, 128, 8
    $region29: #{tpu_custom_call.1} parent=1 // pred_fallthru
      _
    // Predicated region
    $region30: #{tpu_custom_call.1} parent=1 // pred_check
      _
    $region31: #{tpu_custom_call.1} parent=1 // pred_check_branch
      %74 = sbr.rel (0) target = $region33
    $region32: #{tpu_custom_call.1} parent=1 // pred_region
      %76 = vsyncadd [#allocation6], 0
      %s77 = sshll.u32 %s7, 4
      %s78 = int_to_ptr.hbm [resolvable:$true] %s77
      %s79 = sshll.u32 [#allocation7], 4
      %s80 = int_to_ptr.vmem [resolvable:$true] %s79
      %85 = dma.hbm_to_vmem [thread:$0]  %s78, 512, %s80, [#allocation6], 128, 128, 8
    $region33: #{tpu_custom_call.1} parent=1 // pred_fallthru
      _
    // Predicated region
    $region34: #{tpu_custom_call.1} parent=1 // pred_check
      _
    $region35: #{tpu_custom_call.1} parent=1 // pred_check_branch
      %87 = sbr.rel (0) target = $region37
    $region36: #{tpu_custom_call.1} parent=1 // pred_region
      _
    $region37: #{tpu_custom_call.1} parent=1 // pred_fallthru
      _
    // Predicated region
    $region38: #{tpu_custom_call.1} parent=1 // pred_check
      _
    $region39: #{tpu_custom_call.1} parent=1 // pred_check_branch
      %89 = sbr.rel (0) target = $region41
    $region40: #{tpu_custom_call.1} parent=1 // pred_region
      %91 = vsyncadd [#allocation9], 0
      %s92 = sshll.u32 %s9, 4
      %s93 = int_to_ptr.hbm [resolvable:$true] %s92
      %s94 = sshll.u32 [#allocation8], 4
      %s95 = int_to_ptr.vmem [resolvable:$true] %s94
      %100 = dma.hbm_to_vmem [thread:$0]  %s93, 256, %s95, [#allocation9], 128, 128, 8
    $region41: #{tpu_custom_call.1} parent=1 // pred_fallthru
      _
    // Predicated region
    $region42: #{tpu_custom_call.1} parent=1 // pred_check
      _
    $region43: #{tpu_custom_call.1} parent=1 // pred_check_branch
      %102 = sbr.rel (0) target = $region45
    $region44: #{tpu_custom_call.1} parent=1 // pred_region
      %104 = vsyncadd [#allocation9], 0
      %s105 = sshll.u32 %s10, 4
      %s106 = int_to_ptr.hbm [resolvable:$true] %s105
      %s107 = sshll.u32 [#allocation10], 4
      %s108 = int_to_ptr.vmem [resolvable:$true] %s107
      %113 = dma.hbm_to_vmem [thread:$0]  %s106, 512, %s108, [#allocation9], 128, 128, 8
    $region45: #{tpu_custom_call.1} parent=1 // pred_fallthru
      _
    // Predicated region
    $region46: #{tpu_custom_call.1} parent=1 // pred_check
      _
    $region47: #{tpu_custom_call.1} parent=1 // pred_check_branch
      %115 = sbr.rel (0) target = $region49
    $region48: #{tpu_custom_call.1} parent=1 // pred_region
      _
    $region49: #{tpu_custom_call.1} parent=1 // pred_fallthru
      _
    // Predicated region
    $region50: #{tpu_custom_call.1} parent=1 // pred_check
      _
    $region51: #{tpu_custom_call.1} parent=1 // pred_check_branch
      %117 = sbr.rel (0) target = $region53
    $region52: #{tpu_custom_call.1} parent=1 // pred_region
      %119 = vsyncadd [#allocation12], 0
      %s120 = sshll.u32 %s12, 4
      %s121 = int_to_ptr.hbm [resolvable:$true] %s120
      %s122 = sshll.u32 [#allocation11], 4
      %s123 = int_to_ptr.vmem [resolvable:$true] %s122
      %128 = dma.hbm_to_vmem [thread:$0]  %s121, 512, %s123, [#allocation12], 128, 128, 8
    $region53: #{tpu_custom_call.1} parent=1 // pred_fallthru
      _
    // Predicated region
    $region54: #{tpu_custom_call.1} parent=1 // pred_check
      _
    $region55: #{tpu_custom_call.1} parent=1 // pred_check_branch
      %130 = sbr.rel (0) target = $region57
    $region56: #{tpu_custom_call.1} parent=1 // pred_region
      %132 = vsyncadd [#allocation12], 0
      %s133 = sshll.u32 %s13, 4
      %s134 = int_to_ptr.hbm [resolvable:$true] %s133
      %s135 = sshll.u32 [#allocation13], 4
      %s136 = int_to_ptr.vmem [resolvable:$true] %s135
      %141 = dma.hbm_to_vmem [thread:$0]  %s134, 512, %s136, [#allocation12], 128, 128, 8
    $region57: #{tpu_custom_call.1} parent=1 // pred_fallthru
      _
    // Predicated region
    $region58: #{tpu_custom_call.1} parent=1 // pred_check
      _
    $region59: #{tpu_custom_call.1} parent=1 // pred_check_branch
      %143 = sbr.rel (0) target = $region61
    $region60: #{tpu_custom_call.1} parent=1 // pred_region
      _
    $region61: #{tpu_custom_call.1} parent=1 // pred_fallthru
      _
    // Predicated region
    $region62: #{tpu_custom_call.1} parent=1 // pred_check
      _
    $region63: #{tpu_custom_call.1} parent=1 // pred_check_branch
      %145 = sbr.rel (0) target = $region65
    $region64: #{tpu_custom_call.1} parent=1 // pred_region
      %147 = vsyncadd [#allocation15], 0
      %s148 = sshll.u32 %s15, 4
      %s149 = int_to_ptr.hbm [resolvable:$true] %s148
      %s150 = sshll.u32 [#allocation14], 4
      %s151 = int_to_ptr.vmem [resolvable:$true] %s150
      %156 = dma.hbm_to_vmem [thread:$0]  %s149, 256, %s151, [#allocation15], 128, 128, 8
    $region65: #{tpu_custom_call.1} parent=1 // pred_fallthru
      _
    // Predicated region
    $region66: #{tpu_custom_call.1} parent=1 // pred_check
      _
    $region67: #{tpu_custom_call.1} parent=1 // pred_check_branch
      %158 = sbr.rel (0) target = $region69
    $region68: #{tpu_custom_call.1} parent=1 // pred_region
      _
    $region69: #{tpu_custom_call.1} parent=1 // pred_fallthru
      _
    // Predicated region
    $region70: #{tpu_custom_call.1} parent=1 // pred_check
      _
    $region71: #{tpu_custom_call.1} parent=1 // pred_check_branch
      %160 = sbr.rel (0) target = $region73
    $region72: #{tpu_custom_call.1} parent=1 // pred_region
      %162 = vsyncadd [#allocation15], 0
      %s163 = sshll.u32 %s17, 4
      %s164 = int_to_ptr.hbm [resolvable:$true] %s163
      %s165 = sshll.u32 [#allocation16], 4
      %s166 = int_to_ptr.vmem [resolvable:$true] %s165
      %171 = dma.hbm_to_vmem [thread:$0]  %s164, 512, %s166, [#allocation15], 128, 128, 8
    $region73: #{tpu_custom_call.1} parent=1 // pred_fallthru
      _
    // Predicated region
    $region74: #{tpu_custom_call.1} parent=1 // pred_check
      _
    $region75: #{tpu_custom_call.1} parent=1 // pred_check_branch
      %173 = sbr.rel (0) target = $region77
    $region76: #{tpu_custom_call.1} parent=1 // pred_region
      %175 = vsyncadd [#allocation18], 0
      %s176 = sshll.u32 %s18, 4
      %s177 = int_to_ptr.hbm [resolvable:$true] %s176
      %s178 = sshll.u32 [#allocation17], 4
      %s179 = int_to_ptr.vmem [resolvable:$true] %s178
      %184 = dma.hbm_to_vmem [thread:$0]  %s177, 512, %s179, [#allocation18], 128, 128, 8
    $region77: #{tpu_custom_call.1} parent=1 // pred_fallthru
      _
    // Predicated region
    $region78: #{tpu_custom_call.1} parent=1 // pred_check
      _
    $region79: #{tpu_custom_call.1} parent=1 // pred_check_branch
      %186 = sbr.rel (0) target = $region81
    $region80: #{tpu_custom_call.1} parent=1 // pred_region
      %188 = vsyncadd [#allocation18], 0
      %s189 = sshll.u32 %s19, 4
      %s190 = int_to_ptr.hbm [resolvable:$true] %s189
      %s191 = sshll.u32 [#allocation19], 4
      %s192 = int_to_ptr.vmem [resolvable:$true] %s191
      %197 = dma.hbm_to_vmem [thread:$0]  %s190, 512, %s192, [#allocation18], 128, 128, 8
    $region81: #{tpu_custom_call.1} parent=1 // pred_fallthru
      _
    // Predicated region
    $region82: #{tpu_custom_call.1} parent=1 // pred_check
      _
    $region83: #{tpu_custom_call.1} parent=1 // pred_check_branch
      %199 = sbr.rel (0) target = $region85
    $region84: #{tpu_custom_call.1} parent=1 // pred_region
      _
    $region85: #{tpu_custom_call.1} parent=1 // pred_fallthru
      _
    // Predicated region
    $region86: #{tpu_custom_call.1} parent=1 // pred_check
      _
    $region87: #{tpu_custom_call.1} parent=1 // pred_check_branch
      %201 = sbr.rel (0) target = $region89
    $region88: #{tpu_custom_call.1} parent=1 // pred_region
      _
    $region89: #{tpu_custom_call.1} parent=1 // pred_fallthru
      _
    // Predicated region
    $region90: #{tpu_custom_call.1} parent=1 // pred_check
      _
    $region91: #{tpu_custom_call.1} parent=1 // pred_check_branch
      %203 = sbr.rel (0) target = $region93
    $region92: #{tpu_custom_call.1} parent=1 // pred_region
      _
    $region93: #{tpu_custom_call.1} parent=1 // pred_fallthru
      _
    // Predicated region
    $region94: #{tpu_custom_call.1} parent=1 // pred_check
      _
    $region95: #{tpu_custom_call.1} parent=1 // pred_check_branch
      %205 = sbr.rel (0) target = $region97
    $region96: #{tpu_custom_call.1} parent=1 // pred_region
      _
    $region97: #{tpu_custom_call.1} parent=1 // pred_fallthru
      _
    // Predicated region
    $region98: #{tpu_custom_call.1} parent=1 // pred_check
      _
    $region99: #{tpu_custom_call.1} parent=1 // pred_check_branch
      %207 = sbr.rel (0) target = $region101
    $region100: #{tpu_custom_call.1} parent=1 // pred_region
      _
    $region101: #{tpu_custom_call.1} parent=1 // pred_fallthru
      _
    // Predicated region
    $region102: #{tpu_custom_call.1} parent=1 // pred_check
      _
    $region103: #{tpu_custom_call.1} parent=1 // pred_check_branch
      %209 = sbr.rel (0) target = $region105
    $region104: #{tpu_custom_call.1} parent=1 // pred_region
      %211 = dma.done [#allocation3], 512
    $region105: #{tpu_custom_call.1} parent=1 // pred_fallthru
      _
    // Predicated region
    $region106: #{tpu_custom_call.1} parent=1 // pred_check
      _
    $region107: #{tpu_custom_call.1} parent=1 // pred_check_branch
      %213 = sbr.rel (0) target = $region109
    $region108: #{tpu_custom_call.1} parent=1 // pred_region
      %215 = dma.done [#allocation6], 512
    $region109: #{tpu_custom_call.1} parent=1 // pred_fallthru
      _
    // Predicated region
    $region110: #{tpu_custom_call.1} parent=1 // pred_check
      _
    $region111: #{tpu_custom_call.1} parent=1 // pred_check_branch
      %217 = sbr.rel (0) target = $region113
    $region112: #{tpu_custom_call.1} parent=1 // pred_region
      %219 = dma.done [#allocation6], 512
    $region113: #{tpu_custom_call.1} parent=1 // pred_fallthru
      _
    // Predicated region
    $region114: #{tpu_custom_call.1} parent=1 // pred_check
      _
    $region115: #{tpu_custom_call.1} parent=1 // pred_check_branch
      %221 = sbr.rel (0) target = $region117
    $region116: #{tpu_custom_call.1} parent=1 // pred_region
      %223 = dma.done [#allocation9], 256
    $region117: #{tpu_custom_call.1} parent=1 // pred_fallthru
      _
    // Predicated region
    $region118: #{tpu_custom_call.1} parent=1 // pred_check
      _
    $region119: #{tpu_custom_call.1} parent=1 // pred_check_branch
      %225 = sbr.rel (0) target = $region121
    $region120: #{tpu_custom_call.1} parent=1 // pred_region
      %227 = dma.done [#allocation9], 512
    $region121: #{tpu_custom_call.1} parent=1 // pred_fallthru
      _
    // Predicated region
    $region122: #{tpu_custom_call.1} parent=1 // pred_check
      _
    $region123: #{tpu_custom_call.1} parent=1 // pred_check_branch
      %229 = sbr.rel (0) target = $region125
    $region124: #{tpu_custom_call.1} parent=1 // pred_region
      %231 = dma.done [#allocation12], 512
    $region125: #{tpu_custom_call.1} parent=1 // pred_fallthru
      _
    // Predicated region
    $region126: #{tpu_custom_call.1} parent=1 // pred_check
      _
    $region127: #{tpu_custom_call.1} parent=1 // pred_check_branch
      %233 = sbr.rel (0) target = $region129
    $region128: #{tpu_custom_call.1} parent=1 // pred_region
      %235 = dma.done [#allocation12], 512
    $region129: #{tpu_custom_call.1} parent=1 // pred_fallthru
      _
    // Predicated region
    $region130: #{tpu_custom_call.1} parent=1 // pred_check
      _
    $region131: #{tpu_custom_call.1} parent=1 // pred_check_branch
      %237 = sbr.rel (0) target = $region133
    $region132: #{tpu_custom_call.1} parent=1 // pred_region
      %239 = dma.done [#allocation15], 256
    $region133: #{tpu_custom_call.1} parent=1 // pred_fallthru
      _
    // Predicated region
    $region134: #{tpu_custom_call.1} parent=1 // pred_check
      _
    $region135: #{tpu_custom_call.1} parent=1 // pred_check_branch
      %241 = sbr.rel (0) target = $region137
    $region136: #{tpu_custom_call.1} parent=1 // pred_region
      %243 = dma.done [#allocation15], 512
    $region137: #{tpu_custom_call.1} parent=1 // pred_fallthru
      _
    // Predicated region
    $region138: #{tpu_custom_call.1} parent=1 // pred_check
      _
    $region139: #{tpu_custom_call.1} parent=1 // pred_check_branch
      %245 = sbr.rel (0) target = $region141
    $region140: #{tpu_custom_call.1} parent=1 // pred_region
      %247 = dma.done [#allocation18], 512
    $region141: #{tpu_custom_call.1} parent=1 // pred_fallthru
      _
    // Predicated region
    $region142: #{tpu_custom_call.1} parent=1 // pred_check
      _
    $region143: #{tpu_custom_call.1} parent=1 // pred_check_branch
      %249 = sbr.rel (0) target = $region145
    $region144: #{tpu_custom_call.1} parent=1 // pred_region
      %251 = dma.done [#allocation18], 512
    $region145: #{tpu_custom_call.1} parent=1 // pred_fallthru
      _
    %v252 = vld [vmem:[%s0] sm:$0xf]
    %s253 = scalar_lea.vmem %s0, 4
    %v254 = vld [vmem:[%s253] sm:$0xf]
    %s255 = scalar_lea.vmem %s0, 8
    %v256 = vld [vmem:[%s255] sm:$0xf]
    %s257 = scalar_lea.vmem %s0, 12
    %v258 = vld [vmem:[%s257] sm:$0xf]
    %s259 = scalar_lea.vmem %s0, 16
    %v260 = vld [vmem:[%s259] sm:$0xf]
    %s261 = scalar_lea.vmem %s0, 20
    %v262 = vld [vmem:[%s261] sm:$0xf]
    %s263 = scalar_lea.vmem %s0, 24
    %v264 = vld [vmem:[%s263] sm:$0xf]
    %s265 = scalar_lea.vmem %s0, 28
    %v266 = vld [vmem:[%s265] sm:$0xf]
    %v267 = vld [vmem:[%s3] sm:$0xff]
    %v268 = vld [vmem:[%s3 + $0x8] sm:$0xff]
    %v269 = vld [vmem:[#allocation2] sm:$0xff]
    %v270 = vld [vmem:[#allocation2 + $0x8] sm:$0xff]
    %v271 = vld [vmem:[#allocation2 + $0x10] sm:$0xff]
    %v272 = vld [vmem:[#allocation2 + $0x18] sm:$0xff]
    %v273 = vld [vmem:[%s5] sm:$0x1]
    %v275 = vperm.slane %v273, 0
    %vm277 = vcmask 130048
    %v279 = vsel %vm277, %v252, 0
    %281 = vmatpush.msra.mxu0 0.0
    %282 = vmatpush.msra.mxu0 0.0
    %283 = vmatpush.msra.mxu0 0.0
    %284 = vmatpush.msra.mxu0 0.0
    %285 = vmatpush.msra.mxu0 0.0
    %286 = vmatpush.msra.mxu0 0.0
    %287 = vmatpush.msra.mxu0 0.0
    %288 = vmatpush.msra.mxu0 0.0
    %289 = vmatpush.msra.mxu0 0.0
    %290 = vmatpush.msra.mxu0 0.0
    %291 = vmatpush.msra.mxu0 0.0
    %292 = vmatpush.msra.mxu0 0.0
    %293 = vmatpush.msra.mxu0 0.0
    %294 = vmatpush.msra.mxu0 0.0
    %295 = vmatpush.msra.mxu0 %v268
    %296 = vmatpush.msra.mxu0 %v267
    %297 = vmatmul.f32.gmra.mxu0 %v279
    %v298 = vpop.f32.mrf.mxu0
    %v299 = vadd.f32 %v275, %v298
    %300 = vdwg.mxu0
    %v302 = vsel %vm277, %v254, 0
    %304 = vmatpush.msra.mxu0 0.0
    %305 = vmatpush.msra.mxu0 0.0
    %306 = vmatpush.msra.mxu0 0.0
    %307 = vmatpush.msra.mxu0 0.0
    %308 = vmatpush.msra.mxu0 0.0
    %309 = vmatpush.msra.mxu0 0.0
    %310 = vmatpush.msra.mxu0 0.0
    %311 = vmatpush.msra.mxu0 0.0
    %312 = vmatpush.msra.mxu0 0.0
    %313 = vmatpush.msra.mxu0 0.0
    %314 = vmatpush.msra.mxu0 0.0
    %315 = vmatpush.msra.mxu0 0.0
    %316 = vmatpush.msra.mxu0 0.0
    %317 = vmatpush.msra.mxu0 0.0
    %318 = vmatpush.msra.mxu0 %v268
    %319 = vmatpush.msra.mxu0 %v267
    %320 = vmatmul.f32.gmra.mxu0 %v302
    %v321 = vpop.f32.mrf.mxu0
    %v322 = vadd.f32 %v275, %v321
    %323 = vdwg.mxu0
    %v325 = vsel %vm277, %v256, 0
    %327 = vmatpush.msra.mxu0 0.0
    %328 = vmatpush.msra.mxu0 0.0
    %329 = vmatpush.msra.mxu0 0.0
    %330 = vmatpush.msra.mxu0 0.0
    %331 = vmatpush.msra.mxu0 0.0
    %332 = vmatpush.msra.mxu0 0.0
    %333 = vmatpush.msra.mxu0 0.0
    %334 = vmatpush.msra.mxu0 0.0
    %335 = vmatpush.msra.mxu0 0.0
    %336 = vmatpush.msra.mxu0 0.0
    %337 = vmatpush.msra.mxu0 0.0
    %338 = vmatpush.msra.mxu0 0.0
    %339 = vmatpush.msra.mxu0 0.0
    %340 = vmatpush.msra.mxu0 0.0
    %341 = vmatpush.msra.mxu0 %v268
    %342 = vmatpush.msra.mxu0 %v267
    %343 = vmatmul.f32.gmra.mxu0 %v325
    %v344 = vpop.f32.mrf.mxu0
    %v345 = vadd.f32 %v275, %v344
    %346 = vdwg.mxu0
    %v348 = vsel %vm277, %v258, 0
    %350 = vmatpush.msra.mxu0 0.0
    %351 = vmatpush.msra.mxu0 0.0
    %352 = vmatpush.msra.mxu0 0.0
    %353 = vmatpush.msra.mxu0 0.0
    %354 = vmatpush.msra.mxu0 0.0
    %355 = vmatpush.msra.mxu0 0.0
    %356 = vmatpush.msra.mxu0 0.0
    %357 = vmatpush.msra.mxu0 0.0
    %358 = vmatpush.msra.mxu0 0.0
    %359 = vmatpush.msra.mxu0 0.0
    %360 = vmatpush.msra.mxu0 0.0
    %361 = vmatpush.msra.mxu0 0.0
    %362 = vmatpush.msra.mxu0 0.0
    %363 = vmatpush.msra.mxu0 0.0
    %364 = vmatpush.msra.mxu0 %v268
    %365 = vmatpush.msra.mxu0 %v267
    %366 = vmatmul.f32.gmra.mxu0 %v348
    %v367 = vpop.f32.mrf.mxu0
    %v368 = vadd.f32 %v275, %v367
    %369 = vdwg.mxu0
    %v371 = vsel %vm277, %v260, 0
    %373 = vmatpush.msra.mxu0 0.0
    %374 = vmatpush.msra.mxu0 0.0
    %375 = vmatpush.msra.mxu0 0.0
    %376 = vmatpush.msra.mxu0 0.0
    %377 = vmatpush.msra.mxu0 0.0
    %378 = vmatpush.msra.mxu0 0.0
    %379 = vmatpush.msra.mxu0 0.0
    %380 = vmatpush.msra.mxu0 0.0
    %381 = vmatpush.msra.mxu0 0.0
    %382 = vmatpush.msra.mxu0 0.0
    %383 = vmatpush.msra.mxu0 0.0
    %384 = vmatpush.msra.mxu0 0.0
    %385 = vmatpush.msra.mxu0 0.0
    %386 = vmatpush.msra.mxu0 0.0
    %387 = vmatpush.msra.mxu0 %v268
    %388 = vmatpush.msra.mxu0 %v267
    %389 = vmatmul.f32.gmra.mxu0 %v371
    %v390 = vpop.f32.mrf.mxu0
    %v391 = vadd.f32 %v275, %v390
    %392 = vdwg.mxu0
    %v394 = vsel %vm277, %v262, 0
    %396 = vmatpush.msra.mxu0 0.0
    %397 = vmatpush.msra.mxu0 0.0
    %398 = vmatpush.msra.mxu0 0.0
    %399 = vmatpush.msra.mxu0 0.0
    %400 = vmatpush.msra.mxu0 0.0
    %401 = vmatpush.msra.mxu0 0.0
    %402 = vmatpush.msra.mxu0 0.0
    %403 = vmatpush.msra.mxu0 0.0
    %404 = vmatpush.msra.mxu0 0.0
    %405 = vmatpush.msra.mxu0 0.0
    %406 = vmatpush.msra.mxu0 0.0
    %407 = vmatpush.msra.mxu0 0.0
    %408 = vmatpush.msra.mxu0 0.0
    %409 = vmatpush.msra.mxu0 0.0
    %410 = vmatpush.msra.mxu0 %v268
    %411 = vmatpush.msra.mxu0 %v267
    %412 = vmatmul.f32.gmra.mxu0 %v394
    %v413 = vpop.f32.mrf.mxu0
    %v414 = vadd.f32 %v275, %v413
    %415 = vdwg.mxu0
    %v417 = vsel %vm277, %v264, 0
    %419 = vmatpush.msra.mxu0 0.0
    %420 = vmatpush.msra.mxu0 0.0
    %421 = vmatpush.msra.mxu0 0.0
    %422 = vmatpush.msra.mxu0 0.0
    %423 = vmatpush.msra.mxu0 0.0
    %424 = vmatpush.msra.mxu0 0.0
    %425 = vmatpush.msra.mxu0 0.0
    %426 = vmatpush.msra.mxu0 0.0
    %427 = vmatpush.msra.mxu0 0.0
    %428 = vmatpush.msra.mxu0 0.0
    %429 = vmatpush.msra.mxu0 0.0
    %430 = vmatpush.msra.mxu0 0.0
    %431 = vmatpush.msra.mxu0 0.0
    %432 = vmatpush.msra.mxu0 0.0
    %433 = vmatpush.msra.mxu0 %v268
    %434 = vmatpush.msra.mxu0 %v267
    %435 = vmatmul.f32.gmra.mxu0 %v417
    %v436 = vpop.f32.mrf.mxu0
    %v437 = vadd.f32 %v275, %v436
    %438 = vdwg.mxu0
    %v440 = vsel %vm277, %v266, 0
    %442 = vmatpush.msra.mxu0 0.0
    %443 = vmatpush.msra.mxu0 0.0
    %444 = vmatpush.msra.mxu0 0.0
    %445 = vmatpush.msra.mxu0 0.0
    %446 = vmatpush.msra.mxu0 0.0
    %447 = vmatpush.msra.mxu0 0.0
    %448 = vmatpush.msra.mxu0 0.0
    %449 = vmatpush.msra.mxu0 0.0
    %450 = vmatpush.msra.mxu0 0.0
    %451 = vmatpush.msra.mxu0 0.0
    %452 = vmatpush.msra.mxu0 0.0
    %453 = vmatpush.msra.mxu0 0.0
    %454 = vmatpush.msra.mxu0 0.0
    %455 = vmatpush.msra.mxu0 0.0
    %456 = vmatpush.msra.mxu0 %v268
    %457 = vmatpush.msra.mxu0 %v267
    %458 = vmatmul.f32.gmra.mxu0 %v440
    %v459 = vpop.f32.mrf.mxu0
    %v460 = vadd.f32 %v275, %v459
    %461 = vdwg.mxu0
    %vm462 = vcmask 261120
    %v464 = vsel %vm462, 0.0, 0
    %466 = vmatpush.msra.mxu0 0.0
    %467 = vmatpush.msra.mxu0 0.0
    %468 = vmatpush.msra.mxu0 0.0
    %469 = vmatpush.msra.mxu0 0.0
    %470 = vmatpush.msra.mxu0 0.0
    %471 = vmatpush.msra.mxu0 0.0
    %472 = vmatpush.msra.mxu0 0.0
    %473 = vmatpush.msra.mxu0 0.0
    %474 = vmatpush.msra.mxu0 0.0
    %475 = vmatpush.msra.mxu0 0.0
    %476 = vmatpush.msra.mxu0 0.0
    %477 = vmatpush.msra.mxu0 0.0
    %478 = vmatpush.msra.mxu0 %v272
    %479 = vmatpush.msra.mxu0 %v271
    %480 = vmatpush.msra.mxu0 %v270
    %481 = vmatpush.msra.mxu0 %v269
    %482 = vmatmul.f32.gmra.mxu0 %v464
    %v483 = vpop.f32.mrf.mxu0
    %v484 = vadd.f32 0.0, %v483
    %485 = vdwg.mxu0
    %v486 = vadd.f32 %v299, %v484
    %v487 = vmul.f32 %v486, 0.5
    %v488 = vtanh.pop %v487
    %v489 = vadd.f32 %v488, 1.0
    %v490 = vmul.f32 %v489, 0.5
    %v491 = vtanh.pop %v486
    %v492 = vmul.f32 %v490, 0.0
    %494 = vrot.lane.b32.xlu0 %v491, 64
    %v495 = vpop.permute.xlu0 %494
    %v497 = vmul.f32 %v490, %v495
    %499 = vrot.lane.b32.xlu0 %v497, 32
    %v500 = vpop.permute.xlu0 %499
    %v502 = vadd.f32 %v492, %v500
    %v503 = vtanh.pop %v502
    %505 = vrot.lane.b32.xlu0 %v503, 64
    %v506 = vpop.permute.xlu0 %505
    %v508 = vmul.f32 %v490, %v506
    %510 = vrot.lane.b32.xlu0 %v508, 32
    %v511 = vpop.permute.xlu0 %510
    %v512 = vsel %vm462, %v511, 0
    %514 = vmatpush.msra.mxu0 0.0
    %515 = vmatpush.msra.mxu0 0.0
    %516 = vmatpush.msra.mxu0 0.0
    %517 = vmatpush.msra.mxu0 0.0
    %518 = vmatpush.msra.mxu0 0.0
    %519 = vmatpush.msra.mxu0 0.0
    %520 = vmatpush.msra.mxu0 0.0
    %521 = vmatpush.msra.mxu0 0.0
    %522 = vmatpush.msra.mxu0 0.0
    %523 = vmatpush.msra.mxu0 0.0
    %524 = vmatpush.msra.mxu0 0.0
    %525 = vmatpush.msra.mxu0 0.0
    %526 = vmatpush.msra.mxu0 %v272
    %527 = vmatpush.msra.mxu0 %v271
    %528 = vmatpush.msra.mxu0 %v270
    %529 = vmatpush.msra.mxu0 %v269
    %530 = vmatmul.f32.gmra.mxu0 %v512
    %v531 = vpop.f32.mrf.mxu0
    %v532 = vadd.f32 0.0, %v531
    %533 = vdwg.mxu0
    %v534 = vadd.f32 %v322, %v532
    %v535 = vmul.f32 %v534, 0.5
    %v536 = vtanh.pop %v535
    %v537 = vadd.f32 %v536, 1.0
    %v538 = vmul.f32 %v537, 0.5
    %v539 = vtanh.pop %v534
    %v540 = vmul.f32 %v538, %v502
    %542 = vrot.lane.b32.xlu0 %v539, 64
    %v543 = vpop.permute.xlu0 %542
    %v545 = vmul.f32 %v538, %v543
    %547 = vrot.lane.b32.xlu0 %v545, 32
    %v548 = vpop.permute.xlu0 %547
    %v550 = vadd.f32 %v540, %v548
    %v551 = vtanh.pop %v550
    %553 = vrot.lane.b32.xlu0 %v551, 64
    %v554 = vpop.permute.xlu0 %553
    %v556 = vmul.f32 %v538, %v554
    %558 = vrot.lane.b32.xlu0 %v556, 32
    %v559 = vpop.permute.xlu0 %558
    %v560 = vsel %vm462, %v559, 0
    %562 = vmatpush.msra.mxu0 0.0
    %563 = vmatpush.msra.mxu0 0.0
    %564 = vmatpush.msra.mxu0 0.0
    %565 = vmatpush.msra.mxu0 0.0
    %566 = vmatpush.msra.mxu0 0.0
    %567 = vmatpush.msra.mxu0 0.0
    %568 = vmatpush.msra.mxu0 0.0
    %569 = vmatpush.msra.mxu0 0.0
    %570 = vmatpush.msra.mxu0 0.0
    %571 = vmatpush.msra.mxu0 0.0
    %572 = vmatpush.msra.mxu0 0.0
    %573 = vmatpush.msra.mxu0 0.0
    %574 = vmatpush.msra.mxu0 %v272
    %575 = vmatpush.msra.mxu0 %v271
    %576 = vmatpush.msra.mxu0 %v270
    %577 = vmatpush.msra.mxu0 %v269
    %578 = vmatmul.f32.gmra.mxu0 %v560
    %v579 = vpop.f32.mrf.mxu0
    %v580 = vadd.f32 0.0, %v579
    %581 = vdwg.mxu0
    %v582 = vadd.f32 %v345, %v580
    %v583 = vmul.f32 %v582, 0.5
    %v584 = vtanh.pop %v583
    %v585 = vadd.f32 %v584, 1.0
    %v586 = vmul.f32 %v585, 0.5
    %v587 = vtanh.pop %v582
    %v588 = vmul.f32 %v586, %v550
    %590 = vrot.lane.b32.xlu0 %v587, 64
    %v591 = vpop.permute.xlu0 %590
    %v593 = vmul.f32 %v586, %v591
    %595 = vrot.lane.b32.xlu0 %v593, 32
    %v596 = vpop.permute.xlu0 %595
    %v598 = vadd.f32 %v588, %v596
    %v599 = vtanh.pop %v598
    %601 = vrot.lane.b32.xlu0 %v599, 64
    %v602 = vpop.permute.xlu0 %601
    %v604 = vmul.f32 %v586, %v602
    %606 = vrot.lane.b32.xlu0 %v604, 32
    %v607 = vpop.permute.xlu0 %606
    %v608 = vsel %vm462, %v607, 0
    %610 = vmatpush.msra.mxu0 0.0
    %611 = vmatpush.msra.mxu0 0.0
    %612 = vmatpush.msra.mxu0 0.0
    %613 = vmatpush.msra.mxu0 0.0
    %614 = vmatpush.msra.mxu0 0.0
    %615 = vmatpush.msra.mxu0 0.0
    %616 = vmatpush.msra.mxu0 0.0
    %617 = vmatpush.msra.mxu0 0.0
    %618 = vmatpush.msra.mxu0 0.0
    %619 = vmatpush.msra.mxu0 0.0
    %620 = vmatpush.msra.mxu0 0.0
    %621 = vmatpush.msra.mxu0 0.0
    %622 = vmatpush.msra.mxu0 %v272
    %623 = vmatpush.msra.mxu0 %v271
    %624 = vmatpush.msra.mxu0 %v270
    %625 = vmatpush.msra.mxu0 %v269
    %626 = vmatmul.f32.gmra.mxu0 %v608
    %v627 = vpop.f32.mrf.mxu0
    %v628 = vadd.f32 0.0, %v627
    %629 = vdwg.mxu0
    %v630 = vadd.f32 %v368, %v628
    %v631 = vmul.f32 %v630, 0.5
    %v632 = vtanh.pop %v631
    %v633 = vadd.f32 %v632, 1.0
    %v634 = vmul.f32 %v633, 0.5
    %v635 = vtanh.pop %v630
    %v636 = vmul.f32 %v634, %v598
    %638 = vrot.lane.b32.xlu0 %v635, 64
    %v639 = vpop.permute.xlu0 %638
    %v641 = vmul.f32 %v634, %v639
    %643 = vrot.lane.b32.xlu0 %v641, 32
    %v644 = vpop.permute.xlu0 %643
    %v646 = vadd.f32 %v636, %v644
    %v647 = vtanh.pop %v646
    %649 = vrot.lane.b32.xlu0 %v647, 64
    %v650 = vpop.permute.xlu0 %649
    %v652 = vmul.f32 %v634, %v650
    %654 = vrot.lane.b32.xlu0 %v652, 32
    %v655 = vpop.permute.xlu0 %654
    %v656 = vsel %vm462, %v655, 0
    %658 = vmatpush.msra.mxu0 0.0
    %659 = vmatpush.msra.mxu0 0.0
    %660 = vmatpush.msra.mxu0 0.0
    %661 = vmatpush.msra.mxu0 0.0
    %662 = vmatpush.msra.mxu0 0.0
    %663 = vmatpush.msra.mxu0 0.0
    %664 = vmatpush.msra.mxu0 0.0
    %665 = vmatpush.msra.mxu0 0.0
    %666 = vmatpush.msra.mxu0 0.0
    %667 = vmatpush.msra.mxu0 0.0
    %668 = vmatpush.msra.mxu0 0.0
    %669 = vmatpush.msra.mxu0 0.0
    %670 = vmatpush.msra.mxu0 %v272
    %671 = vmatpush.msra.mxu0 %v271
    %672 = vmatpush.msra.mxu0 %v270
    %673 = vmatpush.msra.mxu0 %v269
    %674 = vmatmul.f32.gmra.mxu0 %v656
    %v675 = vpop.f32.mrf.mxu0
    %v676 = vadd.f32 0.0, %v675
    %677 = vdwg.mxu0
    %v678 = vadd.f32 %v391, %v676
    %v679 = vmul.f32 %v678, 0.5
    %v680 = vtanh.pop %v679
    %v681 = vadd.f32 %v680, 1.0
    %v682 = vmul.f32 %v681, 0.5
    %v683 = vtanh.pop %v678
    %v684 = vmul.f32 %v682, %v646
    %686 = vrot.lane.b32.xlu0 %v683, 64
    %v687 = vpop.permute.xlu0 %686
    %v689 = vmul.f32 %v682, %v687
    %691 = vrot.lane.b32.xlu0 %v689, 32
    %v692 = vpop.permute.xlu0 %691
    %v694 = vadd.f32 %v684, %v692
    %v695 = vtanh.pop %v694
    %697 = vrot.lane.b32.xlu0 %v695, 64
    %v698 = vpop.permute.xlu0 %697
    %v700 = vmul.f32 %v682, %v698
    %702 = vrot.lane.b32.xlu0 %v700, 32
    %v703 = vpop.permute.xlu0 %702
    %v704 = vsel %vm462, %v703, 0
    %706 = vmatpush.msra.mxu0 0.0
    %707 = vmatpush.msra.mxu0 0.0
    %708 = vmatpush.msra.mxu0 0.0
    %709 = vmatpush.msra.mxu0 0.0
    %710 = vmatpush.msra.mxu0 0.0
    %711 = vmatpush.msra.mxu0 0.0
    %712 = vmatpush.msra.mxu0 0.0
    %713 = vmatpush.msra.mxu0 0.0
    %714 = vmatpush.msra.mxu0 0.0
    %715 = vmatpush.msra.mxu0 0.0
    %716 = vmatpush.msra.mxu0 0.0
    %717 = vmatpush.msra.mxu0 0.0
    %718 = vmatpush.msra.mxu0 %v272
    %719 = vmatpush.msra.mxu0 %v271
    %720 = vmatpush.msra.mxu0 %v270
    %721 = vmatpush.msra.mxu0 %v269
    %722 = vmatmul.f32.gmra.mxu0 %v704
    %v723 = vpop.f32.mrf.mxu0
    %v724 = vadd.f32 0.0, %v723
    %725 = vdwg.mxu0
    %v726 = vadd.f32 %v414, %v724
    %v727 = vmul.f32 %v726, 0.5
    %v728 = vtanh.pop %v727
    %v729 = vadd.f32 %v728, 1.0
    %v730 = vmul.f32 %v729, 0.5
    %v731 = vtanh.pop %v726
    %v732 = vmul.f32 %v730, %v694
    %734 = vrot.lane.b32.xlu0 %v731, 64
    %v735 = vpop.permute.xlu0 %734
    %v737 = vmul.f32 %v730, %v735
    %739 = vrot.lane.b32.xlu0 %v737, 32
    %v740 = vpop.permute.xlu0 %739
    %v742 = vadd.f32 %v732, %v740
    %v743 = vtanh.pop %v742
    %745 = vrot.lane.b32.xlu0 %v743, 64
    %v746 = vpop.permute.xlu0 %745
    %v748 = vmul.f32 %v730, %v746
    %750 = vrot.lane.b32.xlu0 %v748, 32
    %v751 = vpop.permute.xlu0 %750
    %v752 = vsel %vm462, %v751, 0
    %754 = vmatpush.msra.mxu0 0.0
    %755 = vmatpush.msra.mxu0 0.0
    %756 = vmatpush.msra.mxu0 0.0
    %757 = vmatpush.msra.mxu0 0.0
    %758 = vmatpush.msra.mxu0 0.0
    %759 = vmatpush.msra.mxu0 0.0
    %760 = vmatpush.msra.mxu0 0.0
    %761 = vmatpush.msra.mxu0 0.0
    %762 = vmatpush.msra.mxu0 0.0
    %763 = vmatpush.msra.mxu0 0.0
    %764 = vmatpush.msra.mxu0 0.0
    %765 = vmatpush.msra.mxu0 0.0
    %766 = vmatpush.msra.mxu0 %v272
    %767 = vmatpush.msra.mxu0 %v271
    %768 = vmatpush.msra.mxu0 %v270
    %769 = vmatpush.msra.mxu0 %v269
    %770 = vmatmul.f32.gmra.mxu0 %v752
    %v771 = vpop.f32.mrf.mxu0
    %v772 = vadd.f32 0.0, %v771
    %773 = vdwg.mxu0
    %v774 = vadd.f32 %v437, %v772
    %v775 = vmul.f32 %v774, 0.5
    %v776 = vtanh.pop %v775
    %v777 = vadd.f32 %v776, 1.0
    %v778 = vmul.f32 %v777, 0.5
    %v779 = vtanh.pop %v774
    %v780 = vmul.f32 %v778, %v742
    %782 = vrot.lane.b32.xlu0 %v779, 64
    %v783 = vpop.permute.xlu0 %782
    %v785 = vmul.f32 %v778, %v783
    %787 = vrot.lane.b32.xlu0 %v785, 32
    %v788 = vpop.permute.xlu0 %787
    %v790 = vadd.f32 %v780, %v788
    %v791 = vtanh.pop %v790
    %793 = vrot.lane.b32.xlu0 %v791, 64
    %v794 = vpop.permute.xlu0 %793
    %v796 = vmul.f32 %v778, %v794
    %798 = vrot.lane.b32.xlu0 %v796, 32
    %v799 = vpop.permute.xlu0 %798
    %v800 = vsel %vm462, %v799, 0
    %802 = vmatpush.msra.mxu0 0.0
    %803 = vmatpush.msra.mxu0 0.0
    %804 = vmatpush.msra.mxu0 0.0
    %805 = vmatpush.msra.mxu0 0.0
    %806 = vmatpush.msra.mxu0 0.0
    %807 = vmatpush.msra.mxu0 0.0
    %808 = vmatpush.msra.mxu0 0.0
    %809 = vmatpush.msra.mxu0 0.0
    %810 = vmatpush.msra.mxu0 0.0
    %811 = vmatpush.msra.mxu0 0.0
    %812 = vmatpush.msra.mxu0 0.0
    %813 = vmatpush.msra.mxu0 0.0
    %814 = vmatpush.msra.mxu0 %v272
    %815 = vmatpush.msra.mxu0 %v271
    %816 = vmatpush.msra.mxu0 %v270
    %817 = vmatpush.msra.mxu0 %v269
    %818 = vmatmul.f32.gmra.mxu0 %v800
    %v819 = vpop.f32.mrf.mxu0
    %v820 = vadd.f32 0.0, %v819
    %821 = vdwg.mxu0
    %v822 = vadd.f32 %v460, %v820
    %v823 = vmul.f32 %v822, 0.5
    %v824 = vtanh.pop %v823
    %v825 = vadd.f32 %v824, 1.0
    %v826 = vmul.f32 %v825, 0.5
    %v827 = vtanh.pop %v822
    %v828 = vmul.f32 %v826, %v790
    %830 = vrot.lane.b32.xlu0 %v827, 64
    %v831 = vpop.permute.xlu0 %830
    %v833 = vmul.f32 %v826, %v831
    %835 = vrot.lane.b32.xlu0 %v833, 32
    %v836 = vpop.permute.xlu0 %835
    %v838 = vadd.f32 %v828, %v836
    %v839 = vtanh.pop %v838
    %841 = vrot.lane.b32.xlu0 %v839, 64
    %v842 = vpop.permute.xlu0 %841
    %v844 = vmul.f32 %v826, %v842
    %v845 = vld [vmem:[#allocation5] sm:$0xff]
    %v846 = vld [vmem:[#allocation5 + $0x8] sm:$0xff]
    %v847 = vld [vmem:[#allocation5 + $0x10] sm:$0xff]
    %v848 = vld [vmem:[#allocation5 + $0x18] sm:$0xff]
    %v849 = vld [vmem:[#allocation7] sm:$0xff]
    %v850 = vld [vmem:[#allocation7 + $0x8] sm:$0xff]
    %v851 = vld [vmem:[#allocation7 + $0x10] sm:$0xff]
    %v852 = vld [vmem:[#allocation7 + $0x18] sm:$0xff]
    %v853 = vld [vmem:[%s8] sm:$0x1]
    %v855 = vperm.slane %v853, 0
    %857 = vmatpush.msra.mxu0 0.0
    %858 = vmatpush.msra.mxu0 0.0
    %859 = vmatpush.msra.mxu0 0.0
    %860 = vmatpush.msra.mxu0 0.0
    %861 = vmatpush.msra.mxu0 0.0
    %862 = vmatpush.msra.mxu0 0.0
    %863 = vmatpush.msra.mxu0 0.0
    %864 = vmatpush.msra.mxu0 0.0
    %865 = vmatpush.msra.mxu0 0.0
    %866 = vmatpush.msra.mxu0 0.0
    %867 = vmatpush.msra.mxu0 0.0
    %868 = vmatpush.msra.mxu0 0.0
    %869 = vmatpush.msra.mxu0 %v848
    %870 = vmatpush.msra.mxu0 %v847
    %871 = vmatpush.msra.mxu0 %v846
    %872 = vmatpush.msra.mxu0 %v845
    %873 = vmatmul.f32.gmra.mxu0 %v512
    %v874 = vpop.f32.mrf.mxu0
    %v875 = vadd.f32 %v855, %v874
    %876 = vdwg.mxu0
    %877 = vmatpush.msra.mxu0 0.0
    %878 = vmatpush.msra.mxu0 0.0
    %879 = vmatpush.msra.mxu0 0.0
    %880 = vmatpush.msra.mxu0 0.0
    %881 = vmatpush.msra.mxu0 0.0
    %882 = vmatpush.msra.mxu0 0.0
    %883 = vmatpush.msra.mxu0 0.0
    %884 = vmatpush.msra.mxu0 0.0
    %885 = vmatpush.msra.mxu0 0.0
    %886 = vmatpush.msra.mxu0 0.0
    %887 = vmatpush.msra.mxu0 0.0
    %888 = vmatpush.msra.mxu0 0.0
    %889 = vmatpush.msra.mxu0 %v848
    %890 = vmatpush.msra.mxu0 %v847
    %891 = vmatpush.msra.mxu0 %v846
    %892 = vmatpush.msra.mxu0 %v845
    %893 = vmatmul.f32.gmra.mxu0 %v560
    %v894 = vpop.f32.mrf.mxu0
    %v895 = vadd.f32 %v855, %v894
    %896 = vdwg.mxu0
    %897 = vmatpush.msra.mxu0 0.0
    %898 = vmatpush.msra.mxu0 0.0
    %899 = vmatpush.msra.mxu0 0.0
    %900 = vmatpush.msra.mxu0 0.0
    %901 = vmatpush.msra.mxu0 0.0
    %902 = vmatpush.msra.mxu0 0.0
    %903 = vmatpush.msra.mxu0 0.0
    %904 = vmatpush.msra.mxu0 0.0
    %905 = vmatpush.msra.mxu0 0.0
    %906 = vmatpush.msra.mxu0 0.0
    %907 = vmatpush.msra.mxu0 0.0
    %908 = vmatpush.msra.mxu0 0.0
    %909 = vmatpush.msra.mxu0 %v848
    %910 = vmatpush.msra.mxu0 %v847
    %911 = vmatpush.msra.mxu0 %v846
    %912 = vmatpush.msra.mxu0 %v845
    %913 = vmatmul.f32.gmra.mxu0 %v608
    %v914 = vpop.f32.mrf.mxu0
    %v915 = vadd.f32 %v855, %v914
    %916 = vdwg.mxu0
    %917 = vmatpush.msra.mxu0 0.0
    %918 = vmatpush.msra.mxu0 0.0
    %919 = vmatpush.msra.mxu0 0.0
    %920 = vmatpush.msra.mxu0 0.0
    %921 = vmatpush.msra.mxu0 0.0
    %922 = vmatpush.msra.mxu0 0.0
    %923 = vmatpush.msra.mxu0 0.0
    %924 = vmatpush.msra.mxu0 0.0
    %925 = vmatpush.msra.mxu0 0.0
    %926 = vmatpush.msra.mxu0 0.0
    %927 = vmatpush.msra.mxu0 0.0
    %928 = vmatpush.msra.mxu0 0.0
    %929 = vmatpush.msra.mxu0 %v848
    %930 = vmatpush.msra.mxu0 %v847
    %931 = vmatpush.msra.mxu0 %v846
    %932 = vmatpush.msra.mxu0 %v845
    %933 = vmatmul.f32.gmra.mxu0 %v656
    %v934 = vpop.f32.mrf.mxu0
    %v935 = vadd.f32 %v855, %v934
    %936 = vdwg.mxu0
    %937 = vmatpush.msra.mxu0 0.0
    %938 = vmatpush.msra.mxu0 0.0
    %939 = vmatpush.msra.mxu0 0.0
    %940 = vmatpush.msra.mxu0 0.0
    %941 = vmatpush.msra.mxu0 0.0
    %942 = vmatpush.msra.mxu0 0.0
    %943 = vmatpush.msra.mxu0 0.0
    %944 = vmatpush.msra.mxu0 0.0
    %945 = vmatpush.msra.mxu0 0.0
    %946 = vmatpush.msra.mxu0 0.0
    %947 = vmatpush.msra.mxu0 0.0
    %948 = vmatpush.msra.mxu0 0.0
    %949 = vmatpush.msra.mxu0 %v848
    %950 = vmatpush.msra.mxu0 %v847
    %951 = vmatpush.msra.mxu0 %v846
    %952 = vmatpush.msra.mxu0 %v845
    %953 = vmatmul.f32.gmra.mxu0 %v704
    %v954 = vpop.f32.mrf.mxu0
    %v955 = vadd.f32 %v855, %v954
    %956 = vdwg.mxu0
    %957 = vmatpush.msra.mxu0 0.0
    %958 = vmatpush.msra.mxu0 0.0
    %959 = vmatpush.msra.mxu0 0.0
    %960 = vmatpush.msra.mxu0 0.0
    %961 = vmatpush.msra.mxu0 0.0
    %962 = vmatpush.msra.mxu0 0.0
    %963 = vmatpush.msra.mxu0 0.0
    %964 = vmatpush.msra.mxu0 0.0
    %965 = vmatpush.msra.mxu0 0.0
    %966 = vmatpush.msra.mxu0 0.0
    %967 = vmatpush.msra.mxu0 0.0
    %968 = vmatpush.msra.mxu0 0.0
    %969 = vmatpush.msra.mxu0 %v848
    %970 = vmatpush.msra.mxu0 %v847
    %971 = vmatpush.msra.mxu0 %v846
    %972 = vmatpush.msra.mxu0 %v845
    %973 = vmatmul.f32.gmra.mxu0 %v752
    %v974 = vpop.f32.mrf.mxu0
    %v975 = vadd.f32 %v855, %v974
    %976 = vdwg.mxu0
    %977 = vmatpush.msra.mxu0 0.0
    %978 = vmatpush.msra.mxu0 0.0
    %979 = vmatpush.msra.mxu0 0.0
    %980 = vmatpush.msra.mxu0 0.0
    %981 = vmatpush.msra.mxu0 0.0
    %982 = vmatpush.msra.mxu0 0.0
    %983 = vmatpush.msra.mxu0 0.0
    %984 = vmatpush.msra.mxu0 0.0
    %985 = vmatpush.msra.mxu0 0.0
    %986 = vmatpush.msra.mxu0 0.0
    %987 = vmatpush.msra.mxu0 0.0
    %988 = vmatpush.msra.mxu0 0.0
    %989 = vmatpush.msra.mxu0 %v848
    %990 = vmatpush.msra.mxu0 %v847
    %991 = vmatpush.msra.mxu0 %v846
    %992 = vmatpush.msra.mxu0 %v845
    %993 = vmatmul.f32.gmra.mxu0 %v800
    %v994 = vpop.f32.mrf.mxu0
    %v995 = vadd.f32 %v855, %v994
    %996 = vdwg.mxu0
    %998 = vrot.lane.b32.xlu0 %v844, 32
    %v999 = vpop.permute.xlu0 %998
    %v1000 = vsel %vm462, %v999, 0
    %1002 = vmatpush.msra.mxu0 0.0
    %1003 = vmatpush.msra.mxu0 0.0
    %1004 = vmatpush.msra.mxu0 0.0
    %1005 = vmatpush.msra.mxu0 0.0
    %1006 = vmatpush.msra.mxu0 0.0
    %1007 = vmatpush.msra.mxu0 0.0
    %1008 = vmatpush.msra.mxu0 0.0
    %1009 = vmatpush.msra.mxu0 0.0
    %1010 = vmatpush.msra.mxu0 0.0
    %1011 = vmatpush.msra.mxu0 0.0
    %1012 = vmatpush.msra.mxu0 0.0
    %1013 = vmatpush.msra.mxu0 0.0
    %1014 = vmatpush.msra.mxu0 %v848
    %1015 = vmatpush.msra.mxu0 %v847
    %1016 = vmatpush.msra.mxu0 %v846
    %1017 = vmatpush.msra.mxu0 %v845
    %1018 = vmatmul.f32.gmra.mxu0 %v1000
    %v1019 = vpop.f32.mrf.mxu0
    %v1020 = vadd.f32 %v855, %v1019
    %1021 = vdwg.mxu0
    %1022 = vmatpush.msra.mxu0 0.0
    %1023 = vmatpush.msra.mxu0 0.0
    %1024 = vmatpush.msra.mxu0 0.0
    %1025 = vmatpush.msra.mxu0 0.0
    %1026 = vmatpush.msra.mxu0 0.0
    %1027 = vmatpush.msra.mxu0 0.0
    %1028 = vmatpush.msra.mxu0 0.0
    %1029 = vmatpush.msra.mxu0 0.0
    %1030 = vmatpush.msra.mxu0 0.0
    %1031 = vmatpush.msra.mxu0 0.0
    %1032 = vmatpush.msra.mxu0 0.0
    %1033 = vmatpush.msra.mxu0 0.0
    %1034 = vmatpush.msra.mxu0 %v852
    %1035 = vmatpush.msra.mxu0 %v851
    %1036 = vmatpush.msra.mxu0 %v850
    %1037 = vmatpush.msra.mxu0 %v849
    %1038 = vmatmul.f32.gmra.mxu0 %v464
    %v1039 = vpop.f32.mrf.mxu0
    %v1040 = vadd.f32 0.0, %v1039
    %1041 = vdwg.mxu0
    %v1042 = vadd.f32 %v875, %v1040
    %v1043 = vmul.f32 %v1042, 0.5
    %v1044 = vtanh.pop %v1043
    %v1045 = vadd.f32 %v1044, 1.0
    %v1046 = vmul.f32 %v1045, 0.5
    %v1047 = vtanh.pop %v1042
    %v1048 = vmul.f32 %v1046, 0.0
    %1050 = vrot.lane.b32.xlu0 %v1047, 64
    %v1051 = vpop.permute.xlu0 %1050
    %v1053 = vmul.f32 %v1046, %v1051
    %1055 = vrot.lane.b32.xlu0 %v1053, 32
    %v1056 = vpop.permute.xlu0 %1055
    %v1058 = vadd.f32 %v1048, %v1056
    %v1059 = vtanh.pop %v1058
    %1061 = vrot.lane.b32.xlu0 %v1059, 64
    %v1062 = vpop.permute.xlu0 %1061
    %v1064 = vmul.f32 %v1046, %v1062
    %1066 = vrot.lane.b32.xlu0 %v1064, 32
    %v1067 = vpop.permute.xlu0 %1066
    %v1068 = vsel %vm462, %v1067, 0
    %1070 = vmatpush.msra.mxu0 0.0
    %1071 = vmatpush.msra.mxu0 0.0
    %1072 = vmatpush.msra.mxu0 0.0
    %1073 = vmatpush.msra.mxu0 0.0
    %1074 = vmatpush.msra.mxu0 0.0
    %1075 = vmatpush.msra.mxu0 0.0
    %1076 = vmatpush.msra.mxu0 0.0
    %1077 = vmatpush.msra.mxu0 0.0
    %1078 = vmatpush.msra.mxu0 0.0
    %1079 = vmatpush.msra.mxu0 0.0
    %1080 = vmatpush.msra.mxu0 0.0
    %1081 = vmatpush.msra.mxu0 0.0
    %1082 = vmatpush.msra.mxu0 %v852
    %1083 = vmatpush.msra.mxu0 %v851
    %1084 = vmatpush.msra.mxu0 %v850
    %1085 = vmatpush.msra.mxu0 %v849
    %1086 = vmatmul.f32.gmra.mxu0 %v1068
    %v1087 = vpop.f32.mrf.mxu0
    %v1088 = vadd.f32 0.0, %v1087
    %1089 = vdwg.mxu0
    %v1090 = vadd.f32 %v895, %v1088
    %v1091 = vmul.f32 %v1090, 0.5
    %v1092 = vtanh.pop %v1091
    %v1093 = vadd.f32 %v1092, 1.0
    %v1094 = vmul.f32 %v1093, 0.5
    %v1095 = vtanh.pop %v1090
    %v1096 = vmul.f32 %v1094, %v1058
    %1098 = vrot.lane.b32.xlu0 %v1095, 64
    %v1099 = vpop.permute.xlu0 %1098
    %v1101 = vmul.f32 %v1094, %v1099
    %1103 = vrot.lane.b32.xlu0 %v1101, 32
    %v1104 = vpop.permute.xlu0 %1103
    %v1106 = vadd.f32 %v1096, %v1104
    %v1107 = vtanh.pop %v1106
    %1109 = vrot.lane.b32.xlu0 %v1107, 64
    %v1110 = vpop.permute.xlu0 %1109
    %v1112 = vmul.f32 %v1094, %v1110
    %1114 = vrot.lane.b32.xlu0 %v1112, 32
    %v1115 = vpop.permute.xlu0 %1114
    %v1116 = vsel %vm462, %v1115, 0
    %1118 = vmatpush.msra.mxu0 0.0
    %1119 = vmatpush.msra.mxu0 0.0
    %1120 = vmatpush.msra.mxu0 0.0
    %1121 = vmatpush.msra.mxu0 0.0
    %1122 = vmatpush.msra.mxu0 0.0
    %1123 = vmatpush.msra.mxu0 0.0
    %1124 = vmatpush.msra.mxu0 0.0
    %1125 = vmatpush.msra.mxu0 0.0
    %1126 = vmatpush.msra.mxu0 0.0
    %1127 = vmatpush.msra.mxu0 0.0
    %1128 = vmatpush.msra.mxu0 0.0
    %1129 = vmatpush.msra.mxu0 0.0
    %1130 = vmatpush.msra.mxu0 %v852
    %1131 = vmatpush.msra.mxu0 %v851
    %1132 = vmatpush.msra.mxu0 %v850
    %1133 = vmatpush.msra.mxu0 %v849
    %1134 = vmatmul.f32.gmra.mxu0 %v1116
    %v1135 = vpop.f32.mrf.mxu0
    %v1136 = vadd.f32 0.0, %v1135
    %1137 = vdwg.mxu0
    %v1138 = vadd.f32 %v915, %v1136
    %v1139 = vmul.f32 %v1138, 0.5
    %v1140 = vtanh.pop %v1139
    %v1141 = vadd.f32 %v1140, 1.0
    %v1142 = vmul.f32 %v1141, 0.5
    %v1143 = vtanh.pop %v1138
    %v1144 = vmul.f32 %v1142, %v1106
    %1146 = vrot.lane.b32.xlu0 %v1143, 64
    %v1147 = vpop.permute.xlu0 %1146
    %v1149 = vmul.f32 %v1142, %v1147
    %1151 = vrot.lane.b32.xlu0 %v1149, 32
    %v1152 = vpop.permute.xlu0 %1151
    %v1154 = vadd.f32 %v1144, %v1152
    %v1155 = vtanh.pop %v1154
    %1157 = vrot.lane.b32.xlu0 %v1155, 64
    %v1158 = vpop.permute.xlu0 %1157
    %v1160 = vmul.f32 %v1142, %v1158
    %1162 = vrot.lane.b32.xlu0 %v1160, 32
    %v1163 = vpop.permute.xlu0 %1162
    %v1164 = vsel %vm462, %v1163, 0
    %1166 = vmatpush.msra.mxu0 0.0
    %1167 = vmatpush.msra.mxu0 0.0
    %1168 = vmatpush.msra.mxu0 0.0
    %1169 = vmatpush.msra.mxu0 0.0
    %1170 = vmatpush.msra.mxu0 0.0
    %1171 = vmatpush.msra.mxu0 0.0
    %1172 = vmatpush.msra.mxu0 0.0
    %1173 = vmatpush.msra.mxu0 0.0
    %1174 = vmatpush.msra.mxu0 0.0
    %1175 = vmatpush.msra.mxu0 0.0
    %1176 = vmatpush.msra.mxu0 0.0
    %1177 = vmatpush.msra.mxu0 0.0
    %1178 = vmatpush.msra.mxu0 %v852
    %1179 = vmatpush.msra.mxu0 %v851
    %1180 = vmatpush.msra.mxu0 %v850
    %1181 = vmatpush.msra.mxu0 %v849
    %1182 = vmatmul.f32.gmra.mxu0 %v1164
    %v1183 = vpop.f32.mrf.mxu0
    %v1184 = vadd.f32 0.0, %v1183
    %1185 = vdwg.mxu0
    %v1186 = vadd.f32 %v935, %v1184
    %v1187 = vmul.f32 %v1186, 0.5
    %v1188 = vtanh.pop %v1187
    %v1189 = vadd.f32 %v1188, 1.0
    %v1190 = vmul.f32 %v1189, 0.5
    %v1191 = vtanh.pop %v1186
    %v1192 = vmul.f32 %v1190, %v1154
    %1194 = vrot.lane.b32.xlu0 %v1191, 64
    %v1195 = vpop.permute.xlu0 %1194
    %v1197 = vmul.f32 %v1190, %v1195
    %1199 = vrot.lane.b32.xlu0 %v1197, 32
    %v1200 = vpop.permute.xlu0 %1199
    %v1202 = vadd.f32 %v1192, %v1200
    %v1203 = vtanh.pop %v1202
    %1205 = vrot.lane.b32.xlu0 %v1203, 64
    %v1206 = vpop.permute.xlu0 %1205
    %v1208 = vmul.f32 %v1190, %v1206
    %1210 = vrot.lane.b32.xlu0 %v1208, 32
    %v1211 = vpop.permute.xlu0 %1210
    %v1212 = vsel %vm462, %v1211, 0
    %1214 = vmatpush.msra.mxu0 0.0
    %1215 = vmatpush.msra.mxu0 0.0
    %1216 = vmatpush.msra.mxu0 0.0
    %1217 = vmatpush.msra.mxu0 0.0
    %1218 = vmatpush.msra.mxu0 0.0
    %1219 = vmatpush.msra.mxu0 0.0
    %1220 = vmatpush.msra.mxu0 0.0
    %1221 = vmatpush.msra.mxu0 0.0
    %1222 = vmatpush.msra.mxu0 0.0
    %1223 = vmatpush.msra.mxu0 0.0
    %1224 = vmatpush.msra.mxu0 0.0
    %1225 = vmatpush.msra.mxu0 0.0
    %1226 = vmatpush.msra.mxu0 %v852
    %1227 = vmatpush.msra.mxu0 %v851
    %1228 = vmatpush.msra.mxu0 %v850
    %1229 = vmatpush.msra.mxu0 %v849
    %1230 = vmatmul.f32.gmra.mxu0 %v1212
    %v1231 = vpop.f32.mrf.mxu0
    %v1232 = vadd.f32 0.0, %v1231
    %1233 = vdwg.mxu0
    %v1234 = vadd.f32 %v955, %v1232
    %v1235 = vmul.f32 %v1234, 0.5
    %v1236 = vtanh.pop %v1235
    %v1237 = vadd.f32 %v1236, 1.0
    %v1238 = vmul.f32 %v1237, 0.5
    %v1239 = vtanh.pop %v1234
    %v1240 = vmul.f32 %v1238, %v1202
    %1242 = vrot.lane.b32.xlu0 %v1239, 64
    %v1243 = vpop.permute.xlu0 %1242
    %v1245 = vmul.f32 %v1238, %v1243
    %1247 = vrot.lane.b32.xlu0 %v1245, 32
    %v1248 = vpop.permute.xlu0 %1247
    %v1250 = vadd.f32 %v1240, %v1248
    %v1251 = vtanh.pop %v1250
    %1253 = vrot.lane.b32.xlu0 %v1251, 64
    %v1254 = vpop.permute.xlu0 %1253
    %v1256 = vmul.f32 %v1238, %v1254
    %1258 = vrot.lane.b32.xlu0 %v1256, 32
    %v1259 = vpop.permute.xlu0 %1258
    %v1260 = vsel %vm462, %v1259, 0
    %1262 = vmatpush.msra.mxu0 0.0
    %1263 = vmatpush.msra.mxu0 0.0
    %1264 = vmatpush.msra.mxu0 0.0
    %1265 = vmatpush.msra.mxu0 0.0
    %1266 = vmatpush.msra.mxu0 0.0
    %1267 = vmatpush.msra.mxu0 0.0
    %1268 = vmatpush.msra.mxu0 0.0
    %1269 = vmatpush.msra.mxu0 0.0
    %1270 = vmatpush.msra.mxu0 0.0
    %1271 = vmatpush.msra.mxu0 0.0
    %1272 = vmatpush.msra.mxu0 0.0
    %1273 = vmatpush.msra.mxu0 0.0
    %1274 = vmatpush.msra.mxu0 %v852
    %1275 = vmatpush.msra.mxu0 %v851
    %1276 = vmatpush.msra.mxu0 %v850
    %1277 = vmatpush.msra.mxu0 %v849
    %1278 = vmatmul.f32.gmra.mxu0 %v1260
    %v1279 = vpop.f32.mrf.mxu0
    %v1280 = vadd.f32 0.0, %v1279
    %1281 = vdwg.mxu0
    %v1282 = vadd.f32 %v975, %v1280
    %v1283 = vmul.f32 %v1282, 0.5
    %v1284 = vtanh.pop %v1283
    %v1285 = vadd.f32 %v1284, 1.0
    %v1286 = vmul.f32 %v1285, 0.5
    %v1287 = vtanh.pop %v1282
    %v1288 = vmul.f32 %v1286, %v1250
    %1290 = vrot.lane.b32.xlu0 %v1287, 64
    %v1291 = vpop.permute.xlu0 %1290
    %v1293 = vmul.f32 %v1286, %v1291
    %1295 = vrot.lane.b32.xlu0 %v1293, 32
    %v1296 = vpop.permute.xlu0 %1295
    %v1298 = vadd.f32 %v1288, %v1296
    %v1299 = vtanh.pop %v1298
    %1301 = vrot.lane.b32.xlu0 %v1299, 64
    %v1302 = vpop.permute.xlu0 %1301
    %v1304 = vmul.f32 %v1286, %v1302
    %1306 = vrot.lane.b32.xlu0 %v1304, 32
    %v1307 = vpop.permute.xlu0 %1306
    %v1308 = vsel %vm462, %v1307, 0
    %1310 = vmatpush.msra.mxu0 0.0
    %1311 = vmatpush.msra.mxu0 0.0
    %1312 = vmatpush.msra.mxu0 0.0
    %1313 = vmatpush.msra.mxu0 0.0
    %1314 = vmatpush.msra.mxu0 0.0
    %1315 = vmatpush.msra.mxu0 0.0
    %1316 = vmatpush.msra.mxu0 0.0
    %1317 = vmatpush.msra.mxu0 0.0
    %1318 = vmatpush.msra.mxu0 0.0
    %1319 = vmatpush.msra.mxu0 0.0
    %1320 = vmatpush.msra.mxu0 0.0
    %1321 = vmatpush.msra.mxu0 0.0
    %1322 = vmatpush.msra.mxu0 %v852
    %1323 = vmatpush.msra.mxu0 %v851
    %1324 = vmatpush.msra.mxu0 %v850
    %1325 = vmatpush.msra.mxu0 %v849
    %1326 = vmatmul.f32.gmra.mxu0 %v1308
    %v1327 = vpop.f32.mrf.mxu0
    %v1328 = vadd.f32 0.0, %v1327
    %1329 = vdwg.mxu0
    %v1330 = vadd.f32 %v995, %v1328
    %v1331 = vmul.f32 %v1330, 0.5
    %v1332 = vtanh.pop %v1331
    %v1333 = vadd.f32 %v1332, 1.0
    %v1334 = vmul.f32 %v1333, 0.5
    %v1335 = vtanh.pop %v1330
    %v1336 = vmul.f32 %v1334, %v1298
    %1338 = vrot.lane.b32.xlu0 %v1335, 64
    %v1339 = vpop.permute.xlu0 %1338
    %v1341 = vmul.f32 %v1334, %v1339
    %1343 = vrot.lane.b32.xlu0 %v1341, 32
    %v1344 = vpop.permute.xlu0 %1343
    %v1346 = vadd.f32 %v1336, %v1344
    %v1347 = vtanh.pop %v1346
    %1349 = vrot.lane.b32.xlu0 %v1347, 64
    %v1350 = vpop.permute.xlu0 %1349
    %v1352 = vmul.f32 %v1334, %v1350
    %1354 = vrot.lane.b32.xlu0 %v1352, 32
    %v1355 = vpop.permute.xlu0 %1354
    %v1356 = vsel %vm462, %v1355, 0
    %1358 = vmatpush.msra.mxu0 0.0
    %1359 = vmatpush.msra.mxu0 0.0
    %1360 = vmatpush.msra.mxu0 0.0
    %1361 = vmatpush.msra.mxu0 0.0
    %1362 = vmatpush.msra.mxu0 0.0
    %1363 = vmatpush.msra.mxu0 0.0
    %1364 = vmatpush.msra.mxu0 0.0
    %1365 = vmatpush.msra.mxu0 0.0
    %1366 = vmatpush.msra.mxu0 0.0
    %1367 = vmatpush.msra.mxu0 0.0
    %1368 = vmatpush.msra.mxu0 0.0
    %1369 = vmatpush.msra.mxu0 0.0
    %1370 = vmatpush.msra.mxu0 %v852
    %1371 = vmatpush.msra.mxu0 %v851
    %1372 = vmatpush.msra.mxu0 %v850
    %1373 = vmatpush.msra.mxu0 %v849
    %1374 = vmatmul.f32.gmra.mxu0 %v1356
    %v1375 = vpop.f32.mrf.mxu0
    %v1376 = vadd.f32 0.0, %v1375
    %1377 = vdwg.mxu0
    %v1378 = vadd.f32 %v1020, %v1376
    %v1379 = vmul.f32 %v1378, 0.5
    %v1380 = vtanh.pop %v1379
    %v1381 = vadd.f32 %v1380, 1.0
    %v1382 = vmul.f32 %v1381, 0.5
    %v1383 = vtanh.pop %v1378
    %v1384 = vmul.f32 %v1382, %v1346
    %1386 = vrot.lane.b32.xlu0 %v1383, 64
    %v1387 = vpop.permute.xlu0 %1386
    %v1389 = vmul.f32 %v1382, %v1387
    %1391 = vrot.lane.b32.xlu0 %v1389, 32
    %v1392 = vpop.permute.xlu0 %1391
    %v1394 = vadd.f32 %v1384, %v1392
    %v1395 = vtanh.pop %v1394
    %1397 = vrot.lane.b32.xlu0 %v1395, 64
    %v1398 = vpop.permute.xlu0 %1397
    %v1400 = vmul.f32 %v1382, %v1398
    %v1401 = vld [vmem:[%s1] sm:$0xf]
    %s1402 = scalar_lea.vmem %s1, 4
    %v1403 = vld [vmem:[%s1402] sm:$0xf]
    %s1404 = scalar_lea.vmem %s1, 8
    %v1405 = vld [vmem:[%s1404] sm:$0xf]
    %s1406 = scalar_lea.vmem %s1, 12
    %v1407 = vld [vmem:[%s1406] sm:$0xf]
    %s1408 = scalar_lea.vmem %s1, 16
    %v1409 = vld [vmem:[%s1408] sm:$0xf]
    %s1410 = scalar_lea.vmem %s1, 20
    %v1411 = vld [vmem:[%s1410] sm:$0xf]
    %s1412 = scalar_lea.vmem %s1, 24
    %v1413 = vld [vmem:[%s1412] sm:$0xf]
    %s1414 = scalar_lea.vmem %s1, 28
    %v1415 = vld [vmem:[%s1414] sm:$0xf]
    %v1416 = vld [vmem:[#allocation8] sm:$0xff]
    %v1417 = vld [vmem:[#allocation8 + $0x8] sm:$0xf]
    %v1418 = vld [vmem:[#allocation10] sm:$0xff]
    %v1419 = vld [vmem:[#allocation10 + $0x8] sm:$0xff]
    %v1420 = vld [vmem:[#allocation10 + $0x10] sm:$0xff]
    %v1421 = vld [vmem:[#allocation10 + $0x18] sm:$0xff]
    %v1422 = vld [vmem:[%s11] sm:$0x1]
    %v1424 = vperm.slane %v1422, 0
    %vm1426 = vcmask 97280
    %v1428 = vsel %vm1426, %v1401, 0
    %vm1430 = vcmask 1043456
    %v1432 = vsel %vm1430, %v1417, 0
    %1434 = vmatpush.msra.mxu0 0.0
    %1435 = vmatpush.msra.mxu0 0.0
    %1436 = vmatpush.msra.mxu0 0.0
    %1437 = vmatpush.msra.mxu0 0.0
    %1438 = vmatpush.msra.mxu0 0.0
    %1439 = vmatpush.msra.mxu0 0.0
    %1440 = vmatpush.msra.mxu0 0.0
    %1441 = vmatpush.msra.mxu0 0.0
    %1442 = vmatpush.msra.mxu0 0.0
    %1443 = vmatpush.msra.mxu0 0.0
    %1444 = vmatpush.msra.mxu0 0.0
    %1445 = vmatpush.msra.mxu0 0.0
    %1446 = vmatpush.msra.mxu0 0.0
    %1447 = vmatpush.msra.mxu0 0.0
    %1448 = vmatpush.msra.mxu0 %v1432
    %1449 = vmatpush.msra.mxu0 %v1416
    %1450 = vmatmul.f32.gmra.mxu0 %v1428
    %v1451 = vpop.f32.mrf.mxu0
    %v1452 = vadd.f32 %v1424, %v1451
    %1453 = vdwg.mxu0
    %v1455 = vsel %vm1426, %v1403, 0
    %1457 = vmatpush.msra.mxu0 0.0
    %1458 = vmatpush.msra.mxu0 0.0
    %1459 = vmatpush.msra.mxu0 0.0
    %1460 = vmatpush.msra.mxu0 0.0
    %1461 = vmatpush.msra.mxu0 0.0
    %1462 = vmatpush.msra.mxu0 0.0
    %1463 = vmatpush.msra.mxu0 0.0
    %1464 = vmatpush.msra.mxu0 0.0
    %1465 = vmatpush.msra.mxu0 0.0
    %1466 = vmatpush.msra.mxu0 0.0
    %1467 = vmatpush.msra.mxu0 0.0
    %1468 = vmatpush.msra.mxu0 0.0
    %1469 = vmatpush.msra.mxu0 0.0
    %1470 = vmatpush.msra.mxu0 0.0
    %1471 = vmatpush.msra.mxu0 %v1432
    %1472 = vmatpush.msra.mxu0 %v1416
    %1473 = vmatmul.f32.gmra.mxu0 %v1455
    %v1474 = vpop.f32.mrf.mxu0
    %v1475 = vadd.f32 %v1424, %v1474
    %1476 = vdwg.mxu0
    %v1478 = vsel %vm1426, %v1405, 0
    %1480 = vmatpush.msra.mxu0 0.0
    %1481 = vmatpush.msra.mxu0 0.0
    %1482 = vmatpush.msra.mxu0 0.0
    %1483 = vmatpush.msra.mxu0 0.0
    %1484 = vmatpush.msra.mxu0 0.0
    %1485 = vmatpush.msra.mxu0 0.0
    %1486 = vmatpush.msra.mxu0 0.0
    %1487 = vmatpush.msra.mxu0 0.0
    %1488 = vmatpush.msra.mxu0 0.0
    %1489 = vmatpush.msra.mxu0 0.0
    %1490 = vmatpush.msra.mxu0 0.0
    %1491 = vmatpush.msra.mxu0 0.0
    %1492 = vmatpush.msra.mxu0 0.0
    %1493 = vmatpush.msra.mxu0 0.0
    %1494 = vmatpush.msra.mxu0 %v1432
    %1495 = vmatpush.msra.mxu0 %v1416
    %1496 = vmatmul.f32.gmra.mxu0 %v1478
    %v1497 = vpop.f32.mrf.mxu0
    %v1498 = vadd.f32 %v1424, %v1497
    %1499 = vdwg.mxu0
    %v1501 = vsel %vm1426, %v1407, 0
    %1503 = vmatpush.msra.mxu0 0.0
    %1504 = vmatpush.msra.mxu0 0.0
    %1505 = vmatpush.msra.mxu0 0.0
    %1506 = vmatpush.msra.mxu0 0.0
    %1507 = vmatpush.msra.mxu0 0.0
    %1508 = vmatpush.msra.mxu0 0.0
    %1509 = vmatpush.msra.mxu0 0.0
    %1510 = vmatpush.msra.mxu0 0.0
    %1511 = vmatpush.msra.mxu0 0.0
    %1512 = vmatpush.msra.mxu0 0.0
    %1513 = vmatpush.msra.mxu0 0.0
    %1514 = vmatpush.msra.mxu0 0.0
    %1515 = vmatpush.msra.mxu0 0.0
    %1516 = vmatpush.msra.mxu0 0.0
    %1517 = vmatpush.msra.mxu0 %v1432
    %1518 = vmatpush.msra.mxu0 %v1416
    %1519 = vmatmul.f32.gmra.mxu0 %v1501
    %v1520 = vpop.f32.mrf.mxu0
    %v1521 = vadd.f32 %v1424, %v1520
    %1522 = vdwg.mxu0
    %v1524 = vsel %vm1426, %v1409, 0
    %1526 = vmatpush.msra.mxu0 0.0
    %1527 = vmatpush.msra.mxu0 0.0
    %1528 = vmatpush.msra.mxu0 0.0
    %1529 = vmatpush.msra.mxu0 0.0
    %1530 = vmatpush.msra.mxu0 0.0
    %1531 = vmatpush.msra.mxu0 0.0
    %1532 = vmatpush.msra.mxu0 0.0
    %1533 = vmatpush.msra.mxu0 0.0
    %1534 = vmatpush.msra.mxu0 0.0
    %1535 = vmatpush.msra.mxu0 0.0
    %1536 = vmatpush.msra.mxu0 0.0
    %1537 = vmatpush.msra.mxu0 0.0
    %1538 = vmatpush.msra.mxu0 0.0
    %1539 = vmatpush.msra.mxu0 0.0
    %1540 = vmatpush.msra.mxu0 %v1432
    %1541 = vmatpush.msra.mxu0 %v1416
    %1542 = vmatmul.f32.gmra.mxu0 %v1524
    %v1543 = vpop.f32.mrf.mxu0
    %v1544 = vadd.f32 %v1424, %v1543
    %1545 = vdwg.mxu0
    %v1547 = vsel %vm1426, %v1411, 0
    %1549 = vmatpush.msra.mxu0 0.0
    %1550 = vmatpush.msra.mxu0 0.0
    %1551 = vmatpush.msra.mxu0 0.0
    %1552 = vmatpush.msra.mxu0 0.0
    %1553 = vmatpush.msra.mxu0 0.0
    %1554 = vmatpush.msra.mxu0 0.0
    %1555 = vmatpush.msra.mxu0 0.0
    %1556 = vmatpush.msra.mxu0 0.0
    %1557 = vmatpush.msra.mxu0 0.0
    %1558 = vmatpush.msra.mxu0 0.0
    %1559 = vmatpush.msra.mxu0 0.0
    %1560 = vmatpush.msra.mxu0 0.0
    %1561 = vmatpush.msra.mxu0 0.0
    %1562 = vmatpush.msra.mxu0 0.0
    %1563 = vmatpush.msra.mxu0 %v1432
    %1564 = vmatpush.msra.mxu0 %v1416
    %1565 = vmatmul.f32.gmra.mxu0 %v1547
    %v1566 = vpop.f32.mrf.mxu0
    %v1567 = vadd.f32 %v1424, %v1566
    %1568 = vdwg.mxu0
    %v1570 = vsel %vm1426, %v1413, 0
    %1572 = vmatpush.msra.mxu0 0.0
    %1573 = vmatpush.msra.mxu0 0.0
    %1574 = vmatpush.msra.mxu0 0.0
    %1575 = vmatpush.msra.mxu0 0.0
    %1576 = vmatpush.msra.mxu0 0.0
    %1577 = vmatpush.msra.mxu0 0.0
    %1578 = vmatpush.msra.mxu0 0.0
    %1579 = vmatpush.msra.mxu0 0.0
    %1580 = vmatpush.msra.mxu0 0.0
    %1581 = vmatpush.msra.mxu0 0.0
    %1582 = vmatpush.msra.mxu0 0.0
    %1583 = vmatpush.msra.mxu0 0.0
    %1584 = vmatpush.msra.mxu0 0.0
    %1585 = vmatpush.msra.mxu0 0.0
    %1586 = vmatpush.msra.mxu0 %v1432
    %1587 = vmatpush.msra.mxu0 %v1416
    %1588 = vmatmul.f32.gmra.mxu0 %v1570
    %v1589 = vpop.f32.mrf.mxu0
    %v1590 = vadd.f32 %v1424, %v1589
    %1591 = vdwg.mxu0
    %v1593 = vsel %vm1426, %v1415, 0
    %1595 = vmatpush.msra.mxu0 0.0
    %1596 = vmatpush.msra.mxu0 0.0
    %1597 = vmatpush.msra.mxu0 0.0
    %1598 = vmatpush.msra.mxu0 0.0
    %1599 = vmatpush.msra.mxu0 0.0
    %1600 = vmatpush.msra.mxu0 0.0
    %1601 = vmatpush.msra.mxu0 0.0
    %1602 = vmatpush.msra.mxu0 0.0
    %1603 = vmatpush.msra.mxu0 0.0
    %1604 = vmatpush.msra.mxu0 0.0
    %1605 = vmatpush.msra.mxu0 0.0
    %1606 = vmatpush.msra.mxu0 0.0
    %1607 = vmatpush.msra.mxu0 0.0
    %1608 = vmatpush.msra.mxu0 0.0
    %1609 = vmatpush.msra.mxu0 %v1432
    %1610 = vmatpush.msra.mxu0 %v1416
    %1611 = vmatmul.f32.gmra.mxu0 %v1593
    %v1612 = vpop.f32.mrf.mxu0
    %v1613 = vadd.f32 %v1424, %v1612
    %1614 = vdwg.mxu0
    %1615 = vmatpush.msra.mxu0 0.0
    %1616 = vmatpush.msra.mxu0 0.0
    %1617 = vmatpush.msra.mxu0 0.0
    %1618 = vmatpush.msra.mxu0 0.0
    %1619 = vmatpush.msra.mxu0 0.0
    %1620 = vmatpush.msra.mxu0 0.0
    %1621 = vmatpush.msra.mxu0 0.0
    %1622 = vmatpush.msra.mxu0 0.0
    %1623 = vmatpush.msra.mxu0 0.0
    %1624 = vmatpush.msra.mxu0 0.0
    %1625 = vmatpush.msra.mxu0 0.0
    %1626 = vmatpush.msra.mxu0 0.0
    %1627 = vmatpush.msra.mxu0 %v1421
    %1628 = vmatpush.msra.mxu0 %v1420
    %1629 = vmatpush.msra.mxu0 %v1419
    %1630 = vmatpush.msra.mxu0 %v1418
    %1631 = vmatmul.f32.gmra.mxu0 %v464
    %v1632 = vpop.f32.mrf.mxu0
    %v1633 = vadd.f32 0.0, %v1632
    %1634 = vdwg.mxu0
    %v1635 = vadd.f32 %v1452, %v1633
    %v1636 = vmul.f32 %v1635, 0.5
    %v1637 = vtanh.pop %v1636
    %v1638 = vadd.f32 %v1637, 1.0
    %v1639 = vmul.f32 %v1638, 0.5
    %v1640 = vtanh.pop %v1635
    %v1641 = vmul.f32 %v1639, 0.0
    %1643 = vrot.lane.b32.xlu0 %v1640, 64
    %v1644 = vpop.permute.xlu0 %1643
    %v1646 = vmul.f32 %v1639, %v1644
    %1648 = vrot.lane.b32.xlu0 %v1646, 32
    %v1649 = vpop.permute.xlu0 %1648
    %v1651 = vadd.f32 %v1641, %v1649
    %v1652 = vtanh.pop %v1651
    %1654 = vrot.lane.b32.xlu0 %v1652, 64
    %v1655 = vpop.permute.xlu0 %1654
    %v1657 = vmul.f32 %v1639, %v1655
    %1659 = vrot.lane.b32.xlu0 %v1657, 32
    %v1660 = vpop.permute.xlu0 %1659
    %v1661 = vsel %vm462, %v1660, 0
    %1663 = vmatpush.msra.mxu0 0.0
    %1664 = vmatpush.msra.mxu0 0.0
    %1665 = vmatpush.msra.mxu0 0.0
    %1666 = vmatpush.msra.mxu0 0.0
    %1667 = vmatpush.msra.mxu0 0.0
    %1668 = vmatpush.msra.mxu0 0.0
    %1669 = vmatpush.msra.mxu0 0.0
    %1670 = vmatpush.msra.mxu0 0.0
    %1671 = vmatpush.msra.mxu0 0.0
    %1672 = vmatpush.msra.mxu0 0.0
    %1673 = vmatpush.msra.mxu0 0.0
    %1674 = vmatpush.msra.mxu0 0.0
    %1675 = vmatpush.msra.mxu0 %v1421
    %1676 = vmatpush.msra.mxu0 %v1420
    %1677 = vmatpush.msra.mxu0 %v1419
    %1678 = vmatpush.msra.mxu0 %v1418
    %1679 = vmatmul.f32.gmra.mxu0 %v1661
    %v1680 = vpop.f32.mrf.mxu0
    %v1681 = vadd.f32 0.0, %v1680
    %1682 = vdwg.mxu0
    %v1683 = vadd.f32 %v1475, %v1681
    %v1684 = vmul.f32 %v1683, 0.5
    %v1685 = vtanh.pop %v1684
    %v1686 = vadd.f32 %v1685, 1.0
    %v1687 = vmul.f32 %v1686, 0.5
    %v1688 = vtanh.pop %v1683
    %v1689 = vmul.f32 %v1687, %v1651
    %1691 = vrot.lane.b32.xlu0 %v1688, 64
    %v1692 = vpop.permute.xlu0 %1691
    %v1694 = vmul.f32 %v1687, %v1692
    %1696 = vrot.lane.b32.xlu0 %v1694, 32
    %v1697 = vpop.permute.xlu0 %1696
    %v1699 = vadd.f32 %v1689, %v1697
    %v1700 = vtanh.pop %v1699
    %1702 = vrot.lane.b32.xlu0 %v1700, 64
    %v1703 = vpop.permute.xlu0 %1702
    %v1705 = vmul.f32 %v1687, %v1703
    %1707 = vrot.lane.b32.xlu0 %v1705, 32
    %v1708 = vpop.permute.xlu0 %1707
    %v1709 = vsel %vm462, %v1708, 0
    %1711 = vmatpush.msra.mxu0 0.0
    %1712 = vmatpush.msra.mxu0 0.0
    %1713 = vmatpush.msra.mxu0 0.0
    %1714 = vmatpush.msra.mxu0 0.0
    %1715 = vmatpush.msra.mxu0 0.0
    %1716 = vmatpush.msra.mxu0 0.0
    %1717 = vmatpush.msra.mxu0 0.0
    %1718 = vmatpush.msra.mxu0 0.0
    %1719 = vmatpush.msra.mxu0 0.0
    %1720 = vmatpush.msra.mxu0 0.0
    %1721 = vmatpush.msra.mxu0 0.0
    %1722 = vmatpush.msra.mxu0 0.0
    %1723 = vmatpush.msra.mxu0 %v1421
    %1724 = vmatpush.msra.mxu0 %v1420
    %1725 = vmatpush.msra.mxu0 %v1419
    %1726 = vmatpush.msra.mxu0 %v1418
    %1727 = vmatmul.f32.gmra.mxu0 %v1709
    %v1728 = vpop.f32.mrf.mxu0
    %v1729 = vadd.f32 0.0, %v1728
    %1730 = vdwg.mxu0
    %v1731 = vadd.f32 %v1498, %v1729
    %v1732 = vmul.f32 %v1731, 0.5
    %v1733 = vtanh.pop %v1732
    %v1734 = vadd.f32 %v1733, 1.0
    %v1735 = vmul.f32 %v1734, 0.5
    %v1736 = vtanh.pop %v1731
    %v1737 = vmul.f32 %v1735, %v1699
    %1739 = vrot.lane.b32.xlu0 %v1736, 64
    %v1740 = vpop.permute.xlu0 %1739
    %v1742 = vmul.f32 %v1735, %v1740
    %1744 = vrot.lane.b32.xlu0 %v1742, 32
    %v1745 = vpop.permute.xlu0 %1744
    %v1747 = vadd.f32 %v1737, %v1745
    %v1748 = vtanh.pop %v1747
    %1750 = vrot.lane.b32.xlu0 %v1748, 64
    %v1751 = vpop.permute.xlu0 %1750
    %v1753 = vmul.f32 %v1735, %v1751
    %1755 = vrot.lane.b32.xlu0 %v1753, 32
    %v1756 = vpop.permute.xlu0 %1755
    %v1757 = vsel %vm462, %v1756, 0
    %1759 = vmatpush.msra.mxu0 0.0
    %1760 = vmatpush.msra.mxu0 0.0
    %1761 = vmatpush.msra.mxu0 0.0
    %1762 = vmatpush.msra.mxu0 0.0
    %1763 = vmatpush.msra.mxu0 0.0
    %1764 = vmatpush.msra.mxu0 0.0
    %1765 = vmatpush.msra.mxu0 0.0
    %1766 = vmatpush.msra.mxu0 0.0
    %1767 = vmatpush.msra.mxu0 0.0
    %1768 = vmatpush.msra.mxu0 0.0
    %1769 = vmatpush.msra.mxu0 0.0
    %1770 = vmatpush.msra.mxu0 0.0
    %1771 = vmatpush.msra.mxu0 %v1421
    %1772 = vmatpush.msra.mxu0 %v1420
    %1773 = vmatpush.msra.mxu0 %v1419
    %1774 = vmatpush.msra.mxu0 %v1418
    %1775 = vmatmul.f32.gmra.mxu0 %v1757
    %v1776 = vpop.f32.mrf.mxu0
    %v1777 = vadd.f32 0.0, %v1776
    %1778 = vdwg.mxu0
    %v1779 = vadd.f32 %v1521, %v1777
    %v1780 = vmul.f32 %v1779, 0.5
    %v1781 = vtanh.pop %v1780
    %v1782 = vadd.f32 %v1781, 1.0
    %v1783 = vmul.f32 %v1782, 0.5
    %v1784 = vtanh.pop %v1779
    %v1785 = vmul.f32 %v1783, %v1747
    %1787 = vrot.lane.b32.xlu0 %v1784, 64
    %v1788 = vpop.permute.xlu0 %1787
    %v1790 = vmul.f32 %v1783, %v1788
    %1792 = vrot.lane.b32.xlu0 %v1790, 32
    %v1793 = vpop.permute.xlu0 %1792
    %v1795 = vadd.f32 %v1785, %v1793
    %v1796 = vtanh.pop %v1795
    %1798 = vrot.lane.b32.xlu0 %v1796, 64
    %v1799 = vpop.permute.xlu0 %1798
    %v1801 = vmul.f32 %v1783, %v1799
    %1803 = vrot.lane.b32.xlu0 %v1801, 32
    %v1804 = vpop.permute.xlu0 %1803
    %v1805 = vsel %vm462, %v1804, 0
    %1807 = vmatpush.msra.mxu0 0.0
    %1808 = vmatpush.msra.mxu0 0.0
    %1809 = vmatpush.msra.mxu0 0.0
    %1810 = vmatpush.msra.mxu0 0.0
    %1811 = vmatpush.msra.mxu0 0.0
    %1812 = vmatpush.msra.mxu0 0.0
    %1813 = vmatpush.msra.mxu0 0.0
    %1814 = vmatpush.msra.mxu0 0.0
    %1815 = vmatpush.msra.mxu0 0.0
    %1816 = vmatpush.msra.mxu0 0.0
    %1817 = vmatpush.msra.mxu0 0.0
    %1818 = vmatpush.msra.mxu0 0.0
    %1819 = vmatpush.msra.mxu0 %v1421
    %1820 = vmatpush.msra.mxu0 %v1420
    %1821 = vmatpush.msra.mxu0 %v1419
    %1822 = vmatpush.msra.mxu0 %v1418
    %1823 = vmatmul.f32.gmra.mxu0 %v1805
    %v1824 = vpop.f32.mrf.mxu0
    %v1825 = vadd.f32 0.0, %v1824
    %1826 = vdwg.mxu0
    %v1827 = vadd.f32 %v1544, %v1825
    %v1828 = vmul.f32 %v1827, 0.5
    %v1829 = vtanh.pop %v1828
    %v1830 = vadd.f32 %v1829, 1.0
    %v1831 = vmul.f32 %v1830, 0.5
    %v1832 = vtanh.pop %v1827
    %v1833 = vmul.f32 %v1831, %v1795
    %1835 = vrot.lane.b32.xlu0 %v1832, 64
    %v1836 = vpop.permute.xlu0 %1835
    %v1838 = vmul.f32 %v1831, %v1836
    %1840 = vrot.lane.b32.xlu0 %v1838, 32
    %v1841 = vpop.permute.xlu0 %1840
    %v1843 = vadd.f32 %v1833, %v1841
    %v1844 = vtanh.pop %v1843
    %1846 = vrot.lane.b32.xlu0 %v1844, 64
    %v1847 = vpop.permute.xlu0 %1846
    %v1849 = vmul.f32 %v1831, %v1847
    %1851 = vrot.lane.b32.xlu0 %v1849, 32
    %v1852 = vpop.permute.xlu0 %1851
    %v1853 = vsel %vm462, %v1852, 0
    %1855 = vmatpush.msra.mxu0 0.0
    %1856 = vmatpush.msra.mxu0 0.0
    %1857 = vmatpush.msra.mxu0 0.0
    %1858 = vmatpush.msra.mxu0 0.0
    %1859 = vmatpush.msra.mxu0 0.0
    %1860 = vmatpush.msra.mxu0 0.0
    %1861 = vmatpush.msra.mxu0 0.0
    %1862 = vmatpush.msra.mxu0 0.0
    %1863 = vmatpush.msra.mxu0 0.0
    %1864 = vmatpush.msra.mxu0 0.0
    %1865 = vmatpush.msra.mxu0 0.0
    %1866 = vmatpush.msra.mxu0 0.0
    %1867 = vmatpush.msra.mxu0 %v1421
    %1868 = vmatpush.msra.mxu0 %v1420
    %1869 = vmatpush.msra.mxu0 %v1419
    %1870 = vmatpush.msra.mxu0 %v1418
    %1871 = vmatmul.f32.gmra.mxu0 %v1853
    %v1872 = vpop.f32.mrf.mxu0
    %v1873 = vadd.f32 0.0, %v1872
    %1874 = vdwg.mxu0
    %v1875 = vadd.f32 %v1567, %v1873
    %v1876 = vmul.f32 %v1875, 0.5
    %v1877 = vtanh.pop %v1876
    %v1878 = vadd.f32 %v1877, 1.0
    %v1879 = vmul.f32 %v1878, 0.5
    %v1880 = vtanh.pop %v1875
    %v1881 = vmul.f32 %v1879, %v1843
    %1883 = vrot.lane.b32.xlu0 %v1880, 64
    %v1884 = vpop.permute.xlu0 %1883
    %v1886 = vmul.f32 %v1879, %v1884
    %1888 = vrot.lane.b32.xlu0 %v1886, 32
    %v1889 = vpop.permute.xlu0 %1888
    %v1891 = vadd.f32 %v1881, %v1889
    %v1892 = vtanh.pop %v1891
    %1894 = vrot.lane.b32.xlu0 %v1892, 64
    %v1895 = vpop.permute.xlu0 %1894
    %v1897 = vmul.f32 %v1879, %v1895
    %1899 = vrot.lane.b32.xlu0 %v1897, 32
    %v1900 = vpop.permute.xlu0 %1899
    %v1901 = vsel %vm462, %v1900, 0
    %1903 = vmatpush.msra.mxu0 0.0
    %1904 = vmatpush.msra.mxu0 0.0
    %1905 = vmatpush.msra.mxu0 0.0
    %1906 = vmatpush.msra.mxu0 0.0
    %1907 = vmatpush.msra.mxu0 0.0
    %1908 = vmatpush.msra.mxu0 0.0
    %1909 = vmatpush.msra.mxu0 0.0
    %1910 = vmatpush.msra.mxu0 0.0
    %1911 = vmatpush.msra.mxu0 0.0
    %1912 = vmatpush.msra.mxu0 0.0
    %1913 = vmatpush.msra.mxu0 0.0
    %1914 = vmatpush.msra.mxu0 0.0
    %1915 = vmatpush.msra.mxu0 %v1421
    %1916 = vmatpush.msra.mxu0 %v1420
    %1917 = vmatpush.msra.mxu0 %v1419
    %1918 = vmatpush.msra.mxu0 %v1418
    %1919 = vmatmul.f32.gmra.mxu0 %v1901
    %v1920 = vpop.f32.mrf.mxu0
    %v1921 = vadd.f32 0.0, %v1920
    %1922 = vdwg.mxu0
    %v1923 = vadd.f32 %v1590, %v1921
    %v1924 = vmul.f32 %v1923, 0.5
    %v1925 = vtanh.pop %v1924
    %v1926 = vadd.f32 %v1925, 1.0
    %v1927 = vmul.f32 %v1926, 0.5
    %v1928 = vtanh.pop %v1923
    %v1929 = vmul.f32 %v1927, %v1891
    %1931 = vrot.lane.b32.xlu0 %v1928, 64
    %v1932 = vpop.permute.xlu0 %1931
    %v1934 = vmul.f32 %v1927, %v1932
    %1936 = vrot.lane.b32.xlu0 %v1934, 32
    %v1937 = vpop.permute.xlu0 %1936
    %v1939 = vadd.f32 %v1929, %v1937
    %v1940 = vtanh.pop %v1939
    %1942 = vrot.lane.b32.xlu0 %v1940, 64
    %v1943 = vpop.permute.xlu0 %1942
    %v1945 = vmul.f32 %v1927, %v1943
    %1947 = vrot.lane.b32.xlu0 %v1945, 32
    %v1948 = vpop.permute.xlu0 %1947
    %v1949 = vsel %vm462, %v1948, 0
    %1951 = vmatpush.msra.mxu0 0.0
    %1952 = vmatpush.msra.mxu0 0.0
    %1953 = vmatpush.msra.mxu0 0.0
    %1954 = vmatpush.msra.mxu0 0.0
    %1955 = vmatpush.msra.mxu0 0.0
    %1956 = vmatpush.msra.mxu0 0.0
    %1957 = vmatpush.msra.mxu0 0.0
    %1958 = vmatpush.msra.mxu0 0.0
    %1959 = vmatpush.msra.mxu0 0.0
    %1960 = vmatpush.msra.mxu0 0.0
    %1961 = vmatpush.msra.mxu0 0.0
    %1962 = vmatpush.msra.mxu0 0.0
    %1963 = vmatpush.msra.mxu0 %v1421
    %1964 = vmatpush.msra.mxu0 %v1420
    %1965 = vmatpush.msra.mxu0 %v1419
    %1966 = vmatpush.msra.mxu0 %v1418
    %1967 = vmatmul.f32.gmra.mxu0 %v1949
    %v1968 = vpop.f32.mrf.mxu0
    %v1969 = vadd.f32 0.0, %v1968
    %1970 = vdwg.mxu0
    %v1971 = vadd.f32 %v1613, %v1969
    %v1972 = vmul.f32 %v1971, 0.5
    %v1973 = vtanh.pop %v1972
    %v1974 = vadd.f32 %v1973, 1.0
    %v1975 = vmul.f32 %v1974, 0.5
    %v1976 = vtanh.pop %v1971
    %v1977 = vmul.f32 %v1975, %v1939
    %1979 = vrot.lane.b32.xlu0 %v1976, 64
    %v1980 = vpop.permute.xlu0 %1979
    %v1982 = vmul.f32 %v1975, %v1980
    %1984 = vrot.lane.b32.xlu0 %v1982, 32
    %v1985 = vpop.permute.xlu0 %1984
    %v1987 = vadd.f32 %v1977, %v1985
    %v1988 = vtanh.pop %v1987
    %1990 = vrot.lane.b32.xlu0 %v1988, 64
    %v1991 = vpop.permute.xlu0 %1990
    %v1993 = vmul.f32 %v1975, %v1991
    %v1994 = vld [vmem:[#allocation11] sm:$0xff]
    %v1995 = vld [vmem:[#allocation11 + $0x8] sm:$0xff]
    %v1996 = vld [vmem:[#allocation11 + $0x10] sm:$0xff]
    %v1997 = vld [vmem:[#allocation11 + $0x18] sm:$0xff]
    %v1998 = vld [vmem:[#allocation13] sm:$0xff]
    %v1999 = vld [vmem:[#allocation13 + $0x8] sm:$0xff]
    %v2000 = vld [vmem:[#allocation13 + $0x10] sm:$0xff]
    %v2001 = vld [vmem:[#allocation13 + $0x18] sm:$0xff]
    %v2002 = vld [vmem:[%s14] sm:$0x1]
    %v2004 = vperm.slane %v2002, 0
    %2006 = vmatpush.msra.mxu0 0.0
    %2007 = vmatpush.msra.mxu0 0.0
    %2008 = vmatpush.msra.mxu0 0.0
    %2009 = vmatpush.msra.mxu0 0.0
    %2010 = vmatpush.msra.mxu0 0.0
    %2011 = vmatpush.msra.mxu0 0.0
    %2012 = vmatpush.msra.mxu0 0.0
    %2013 = vmatpush.msra.mxu0 0.0
    %2014 = vmatpush.msra.mxu0 0.0
    %2015 = vmatpush.msra.mxu0 0.0
    %2016 = vmatpush.msra.mxu0 0.0
    %2017 = vmatpush.msra.mxu0 0.0
    %2018 = vmatpush.msra.mxu0 %v1997
    %2019 = vmatpush.msra.mxu0 %v1996
    %2020 = vmatpush.msra.mxu0 %v1995
    %2021 = vmatpush.msra.mxu0 %v1994
    %2022 = vmatmul.f32.gmra.mxu0 %v1661
    %v2023 = vpop.f32.mrf.mxu0
    %v2024 = vadd.f32 %v2004, %v2023
    %2025 = vdwg.mxu0
    %2026 = vmatpush.msra.mxu0 0.0
    %2027 = vmatpush.msra.mxu0 0.0
    %2028 = vmatpush.msra.mxu0 0.0
    %2029 = vmatpush.msra.mxu0 0.0
    %2030 = vmatpush.msra.mxu0 0.0
    %2031 = vmatpush.msra.mxu0 0.0
    %2032 = vmatpush.msra.mxu0 0.0
    %2033 = vmatpush.msra.mxu0 0.0
    %2034 = vmatpush.msra.mxu0 0.0
    %2035 = vmatpush.msra.mxu0 0.0
    %2036 = vmatpush.msra.mxu0 0.0
    %2037 = vmatpush.msra.mxu0 0.0
    %2038 = vmatpush.msra.mxu0 %v1997
    %2039 = vmatpush.msra.mxu0 %v1996
    %2040 = vmatpush.msra.mxu0 %v1995
    %2041 = vmatpush.msra.mxu0 %v1994
    %2042 = vmatmul.f32.gmra.mxu0 %v1709
    %v2043 = vpop.f32.mrf.mxu0
    %v2044 = vadd.f32 %v2004, %v2043
    %2045 = vdwg.mxu0
    %2046 = vmatpush.msra.mxu0 0.0
    %2047 = vmatpush.msra.mxu0 0.0
    %2048 = vmatpush.msra.mxu0 0.0
    %2049 = vmatpush.msra.mxu0 0.0
    %2050 = vmatpush.msra.mxu0 0.0
    %2051 = vmatpush.msra.mxu0 0.0
    %2052 = vmatpush.msra.mxu0 0.0
    %2053 = vmatpush.msra.mxu0 0.0
    %2054 = vmatpush.msra.mxu0 0.0
    %2055 = vmatpush.msra.mxu0 0.0
    %2056 = vmatpush.msra.mxu0 0.0
    %2057 = vmatpush.msra.mxu0 0.0
    %2058 = vmatpush.msra.mxu0 %v1997
    %2059 = vmatpush.msra.mxu0 %v1996
    %2060 = vmatpush.msra.mxu0 %v1995
    %2061 = vmatpush.msra.mxu0 %v1994
    %2062 = vmatmul.f32.gmra.mxu0 %v1757
    %v2063 = vpop.f32.mrf.mxu0
    %v2064 = vadd.f32 %v2004, %v2063
    %2065 = vdwg.mxu0
    %2066 = vmatpush.msra.mxu0 0.0
    %2067 = vmatpush.msra.mxu0 0.0
    %2068 = vmatpush.msra.mxu0 0.0
    %2069 = vmatpush.msra.mxu0 0.0
    %2070 = vmatpush.msra.mxu0 0.0
    %2071 = vmatpush.msra.mxu0 0.0
    %2072 = vmatpush.msra.mxu0 0.0
    %2073 = vmatpush.msra.mxu0 0.0
    %2074 = vmatpush.msra.mxu0 0.0
    %2075 = vmatpush.msra.mxu0 0.0
    %2076 = vmatpush.msra.mxu0 0.0
    %2077 = vmatpush.msra.mxu0 0.0
    %2078 = vmatpush.msra.mxu0 %v1997
    %2079 = vmatpush.msra.mxu0 %v1996
    %2080 = vmatpush.msra.mxu0 %v1995
    %2081 = vmatpush.msra.mxu0 %v1994
    %2082 = vmatmul.f32.gmra.mxu0 %v1805
    %v2083 = vpop.f32.mrf.mxu0
    %v2084 = vadd.f32 %v2004, %v2083
    %2085 = vdwg.mxu0
    %2086 = vmatpush.msra.mxu0 0.0
    %2087 = vmatpush.msra.mxu0 0.0
    %2088 = vmatpush.msra.mxu0 0.0
    %2089 = vmatpush.msra.mxu0 0.0
    %2090 = vmatpush.msra.mxu0 0.0
    %2091 = vmatpush.msra.mxu0 0.0
    %2092 = vmatpush.msra.mxu0 0.0
    %2093 = vmatpush.msra.mxu0 0.0
    %2094 = vmatpush.msra.mxu0 0.0
    %2095 = vmatpush.msra.mxu0 0.0
    %2096 = vmatpush.msra.mxu0 0.0
    %2097 = vmatpush.msra.mxu0 0.0
    %2098 = vmatpush.msra.mxu0 %v1997
    %2099 = vmatpush.msra.mxu0 %v1996
    %2100 = vmatpush.msra.mxu0 %v1995
    %2101 = vmatpush.msra.mxu0 %v1994
    %2102 = vmatmul.f32.gmra.mxu0 %v1853
    %v2103 = vpop.f32.mrf.mxu0
    %v2104 = vadd.f32 %v2004, %v2103
    %2105 = vdwg.mxu0
    %2106 = vmatpush.msra.mxu0 0.0
    %2107 = vmatpush.msra.mxu0 0.0
    %2108 = vmatpush.msra.mxu0 0.0
    %2109 = vmatpush.msra.mxu0 0.0
    %2110 = vmatpush.msra.mxu0 0.0
    %2111 = vmatpush.msra.mxu0 0.0
    %2112 = vmatpush.msra.mxu0 0.0
    %2113 = vmatpush.msra.mxu0 0.0
    %2114 = vmatpush.msra.mxu0 0.0
    %2115 = vmatpush.msra.mxu0 0.0
    %2116 = vmatpush.msra.mxu0 0.0
    %2117 = vmatpush.msra.mxu0 0.0
    %2118 = vmatpush.msra.mxu0 %v1997
    %2119 = vmatpush.msra.mxu0 %v1996
    %2120 = vmatpush.msra.mxu0 %v1995
    %2121 = vmatpush.msra.mxu0 %v1994
    %2122 = vmatmul.f32.gmra.mxu0 %v1901
    %v2123 = vpop.f32.mrf.mxu0
    %v2124 = vadd.f32 %v2004, %v2123
    %2125 = vdwg.mxu0
    %2126 = vmatpush.msra.mxu0 0.0
    %2127 = vmatpush.msra.mxu0 0.0
    %2128 = vmatpush.msra.mxu0 0.0
    %2129 = vmatpush.msra.mxu0 0.0
    %2130 = vmatpush.msra.mxu0 0.0
    %2131 = vmatpush.msra.mxu0 0.0
    %2132 = vmatpush.msra.mxu0 0.0
    %2133 = vmatpush.msra.mxu0 0.0
    %2134 = vmatpush.msra.mxu0 0.0
    %2135 = vmatpush.msra.mxu0 0.0
    %2136 = vmatpush.msra.mxu0 0.0
    %2137 = vmatpush.msra.mxu0 0.0
    %2138 = vmatpush.msra.mxu0 %v1997
    %2139 = vmatpush.msra.mxu0 %v1996
    %2140 = vmatpush.msra.mxu0 %v1995
    %2141 = vmatpush.msra.mxu0 %v1994
    %2142 = vmatmul.f32.gmra.mxu0 %v1949
    %v2143 = vpop.f32.mrf.mxu0
    %v2144 = vadd.f32 %v2004, %v2143
    %2145 = vdwg.mxu0
    %2147 = vrot.lane.b32.xlu0 %v1993, 32
    %v2148 = vpop.permute.xlu0 %2147
    %v2149 = vsel %vm462, %v2148, 0
    %2151 = vmatpush.msra.mxu0 0.0
    %2152 = vmatpush.msra.mxu0 0.0
    %2153 = vmatpush.msra.mxu0 0.0
    %2154 = vmatpush.msra.mxu0 0.0
    %2155 = vmatpush.msra.mxu0 0.0
    %2156 = vmatpush.msra.mxu0 0.0
    %2157 = vmatpush.msra.mxu0 0.0
    %2158 = vmatpush.msra.mxu0 0.0
    %2159 = vmatpush.msra.mxu0 0.0
    %2160 = vmatpush.msra.mxu0 0.0
    %2161 = vmatpush.msra.mxu0 0.0
    %2162 = vmatpush.msra.mxu0 0.0
    %2163 = vmatpush.msra.mxu0 %v1997
    %2164 = vmatpush.msra.mxu0 %v1996
    %2165 = vmatpush.msra.mxu0 %v1995
    %2166 = vmatpush.msra.mxu0 %v1994
    %2167 = vmatmul.f32.gmra.mxu0 %v2149
    %v2168 = vpop.f32.mrf.mxu0
    %v2169 = vadd.f32 %v2004, %v2168
    %2170 = vdwg.mxu0
    %2171 = vmatpush.msra.mxu0 0.0
    %2172 = vmatpush.msra.mxu0 0.0
    %2173 = vmatpush.msra.mxu0 0.0
    %2174 = vmatpush.msra.mxu0 0.0
    %2175 = vmatpush.msra.mxu0 0.0
    %2176 = vmatpush.msra.mxu0 0.0
    %2177 = vmatpush.msra.mxu0 0.0
    %2178 = vmatpush.msra.mxu0 0.0
    %2179 = vmatpush.msra.mxu0 0.0
    %2180 = vmatpush.msra.mxu0 0.0
    %2181 = vmatpush.msra.mxu0 0.0
    %2182 = vmatpush.msra.mxu0 0.0
    %2183 = vmatpush.msra.mxu0 %v2001
    %2184 = vmatpush.msra.mxu0 %v2000
    %2185 = vmatpush.msra.mxu0 %v1999
    %2186 = vmatpush.msra.mxu0 %v1998
    %2187 = vmatmul.f32.gmra.mxu0 %v464
    %v2188 = vpop.f32.mrf.mxu0
    %v2189 = vadd.f32 0.0, %v2188
    %2190 = vdwg.mxu0
    %v2191 = vadd.f32 %v2024, %v2189
    %v2192 = vmul.f32 %v2191, 0.5
    %v2193 = vtanh.pop %v2192
    %v2194 = vadd.f32 %v2193, 1.0
    %v2195 = vmul.f32 %v2194, 0.5
    %v2196 = vtanh.pop %v2191
    %v2197 = vmul.f32 %v2195, 0.0
    %2199 = vrot.lane.b32.xlu0 %v2196, 64
    %v2200 = vpop.permute.xlu0 %2199
    %v2202 = vmul.f32 %v2195, %v2200
    %2204 = vrot.lane.b32.xlu0 %v2202, 32
    %v2205 = vpop.permute.xlu0 %2204
    %v2207 = vadd.f32 %v2197, %v2205
    %v2208 = vtanh.pop %v2207
    %2210 = vrot.lane.b32.xlu0 %v2208, 64
    %v2211 = vpop.permute.xlu0 %2210
    %v2213 = vmul.f32 %v2195, %v2211
    %2215 = vrot.lane.b32.xlu0 %v2213, 32
    %v2216 = vpop.permute.xlu0 %2215
    %v2217 = vsel %vm462, %v2216, 0
    %2219 = vmatpush.msra.mxu0 0.0
    %2220 = vmatpush.msra.mxu0 0.0
    %2221 = vmatpush.msra.mxu0 0.0
    %2222 = vmatpush.msra.mxu0 0.0
    %2223 = vmatpush.msra.mxu0 0.0
    %2224 = vmatpush.msra.mxu0 0.0
    %2225 = vmatpush.msra.mxu0 0.0
    %2226 = vmatpush.msra.mxu0 0.0
    %2227 = vmatpush.msra.mxu0 0.0
    %2228 = vmatpush.msra.mxu0 0.0
    %2229 = vmatpush.msra.mxu0 0.0
    %2230 = vmatpush.msra.mxu0 0.0
    %2231 = vmatpush.msra.mxu0 %v2001
    %2232 = vmatpush.msra.mxu0 %v2000
    %2233 = vmatpush.msra.mxu0 %v1999
    %2234 = vmatpush.msra.mxu0 %v1998
    %2235 = vmatmul.f32.gmra.mxu0 %v2217
    %v2236 = vpop.f32.mrf.mxu0
    %v2237 = vadd.f32 0.0, %v2236
    %2238 = vdwg.mxu0
    %v2239 = vadd.f32 %v2044, %v2237
    %v2240 = vmul.f32 %v2239, 0.5
    %v2241 = vtanh.pop %v2240
    %v2242 = vadd.f32 %v2241, 1.0
    %v2243 = vmul.f32 %v2242, 0.5
    %v2244 = vtanh.pop %v2239
    %v2245 = vmul.f32 %v2243, %v2207
    %2247 = vrot.lane.b32.xlu0 %v2244, 64
    %v2248 = vpop.permute.xlu0 %2247
    %v2250 = vmul.f32 %v2243, %v2248
    %2252 = vrot.lane.b32.xlu0 %v2250, 32
    %v2253 = vpop.permute.xlu0 %2252
    %v2255 = vadd.f32 %v2245, %v2253
    %v2256 = vtanh.pop %v2255
    %2258 = vrot.lane.b32.xlu0 %v2256, 64
    %v2259 = vpop.permute.xlu0 %2258
    %v2261 = vmul.f32 %v2243, %v2259
    %2263 = vrot.lane.b32.xlu0 %v2261, 32
    %v2264 = vpop.permute.xlu0 %2263
    %v2265 = vsel %vm462, %v2264, 0
    %2267 = vmatpush.msra.mxu0 0.0
    %2268 = vmatpush.msra.mxu0 0.0
    %2269 = vmatpush.msra.mxu0 0.0
    %2270 = vmatpush.msra.mxu0 0.0
    %2271 = vmatpush.msra.mxu0 0.0
    %2272 = vmatpush.msra.mxu0 0.0
    %2273 = vmatpush.msra.mxu0 0.0
    %2274 = vmatpush.msra.mxu0 0.0
    %2275 = vmatpush.msra.mxu0 0.0
    %2276 = vmatpush.msra.mxu0 0.0
    %2277 = vmatpush.msra.mxu0 0.0
    %2278 = vmatpush.msra.mxu0 0.0
    %2279 = vmatpush.msra.mxu0 %v2001
    %2280 = vmatpush.msra.mxu0 %v2000
    %2281 = vmatpush.msra.mxu0 %v1999
    %2282 = vmatpush.msra.mxu0 %v1998
    %2283 = vmatmul.f32.gmra.mxu0 %v2265
    %v2284 = vpop.f32.mrf.mxu0
    %v2285 = vadd.f32 0.0, %v2284
    %2286 = vdwg.mxu0
    %v2287 = vadd.f32 %v2064, %v2285
    %v2288 = vmul.f32 %v2287, 0.5
    %v2289 = vtanh.pop %v2288
    %v2290 = vadd.f32 %v2289, 1.0
    %v2291 = vmul.f32 %v2290, 0.5
    %v2292 = vtanh.pop %v2287
    %v2293 = vmul.f32 %v2291, %v2255
    %2295 = vrot.lane.b32.xlu0 %v2292, 64
    %v2296 = vpop.permute.xlu0 %2295
    %v2298 = vmul.f32 %v2291, %v2296
    %2300 = vrot.lane.b32.xlu0 %v2298, 32
    %v2301 = vpop.permute.xlu0 %2300
    %v2303 = vadd.f32 %v2293, %v2301
    %v2304 = vtanh.pop %v2303
    %2306 = vrot.lane.b32.xlu0 %v2304, 64
    %v2307 = vpop.permute.xlu0 %2306
    %v2309 = vmul.f32 %v2291, %v2307
    %2311 = vrot.lane.b32.xlu0 %v2309, 32
    %v2312 = vpop.permute.xlu0 %2311
    %v2313 = vsel %vm462, %v2312, 0
    %2315 = vmatpush.msra.mxu0 0.0
    %2316 = vmatpush.msra.mxu0 0.0
    %2317 = vmatpush.msra.mxu0 0.0
    %2318 = vmatpush.msra.mxu0 0.0
    %2319 = vmatpush.msra.mxu0 0.0
    %2320 = vmatpush.msra.mxu0 0.0
    %2321 = vmatpush.msra.mxu0 0.0
    %2322 = vmatpush.msra.mxu0 0.0
    %2323 = vmatpush.msra.mxu0 0.0
    %2324 = vmatpush.msra.mxu0 0.0
    %2325 = vmatpush.msra.mxu0 0.0
    %2326 = vmatpush.msra.mxu0 0.0
    %2327 = vmatpush.msra.mxu0 %v2001
    %2328 = vmatpush.msra.mxu0 %v2000
    %2329 = vmatpush.msra.mxu0 %v1999
    %2330 = vmatpush.msra.mxu0 %v1998
    %2331 = vmatmul.f32.gmra.mxu0 %v2313
    %v2332 = vpop.f32.mrf.mxu0
    %v2333 = vadd.f32 0.0, %v2332
    %2334 = vdwg.mxu0
    %v2335 = vadd.f32 %v2084, %v2333
    %v2336 = vmul.f32 %v2335, 0.5
    %v2337 = vtanh.pop %v2336
    %v2338 = vadd.f32 %v2337, 1.0
    %v2339 = vmul.f32 %v2338, 0.5
    %v2340 = vtanh.pop %v2335
    %v2341 = vmul.f32 %v2339, %v2303
    %2343 = vrot.lane.b32.xlu0 %v2340, 64
    %v2344 = vpop.permute.xlu0 %2343
    %v2346 = vmul.f32 %v2339, %v2344
    %2348 = vrot.lane.b32.xlu0 %v2346, 32
    %v2349 = vpop.permute.xlu0 %2348
    %v2351 = vadd.f32 %v2341, %v2349
    %v2352 = vtanh.pop %v2351
    %2354 = vrot.lane.b32.xlu0 %v2352, 64
    %v2355 = vpop.permute.xlu0 %2354
    %v2357 = vmul.f32 %v2339, %v2355
    %2359 = vrot.lane.b32.xlu0 %v2357, 32
    %v2360 = vpop.permute.xlu0 %2359
    %v2361 = vsel %vm462, %v2360, 0
    %2363 = vmatpush.msra.mxu0 0.0
    %2364 = vmatpush.msra.mxu0 0.0
    %2365 = vmatpush.msra.mxu0 0.0
    %2366 = vmatpush.msra.mxu0 0.0
    %2367 = vmatpush.msra.mxu0 0.0
    %2368 = vmatpush.msra.mxu0 0.0
    %2369 = vmatpush.msra.mxu0 0.0
    %2370 = vmatpush.msra.mxu0 0.0
    %2371 = vmatpush.msra.mxu0 0.0
    %2372 = vmatpush.msra.mxu0 0.0
    %2373 = vmatpush.msra.mxu0 0.0
    %2374 = vmatpush.msra.mxu0 0.0
    %2375 = vmatpush.msra.mxu0 %v2001
    %2376 = vmatpush.msra.mxu0 %v2000
    %2377 = vmatpush.msra.mxu0 %v1999
    %2378 = vmatpush.msra.mxu0 %v1998
    %2379 = vmatmul.f32.gmra.mxu0 %v2361
    %v2380 = vpop.f32.mrf.mxu0
    %v2381 = vadd.f32 0.0, %v2380
    %2382 = vdwg.mxu0
    %v2383 = vadd.f32 %v2104, %v2381
    %v2384 = vmul.f32 %v2383, 0.5
    %v2385 = vtanh.pop %v2384
    %v2386 = vadd.f32 %v2385, 1.0
    %v2387 = vmul.f32 %v2386, 0.5
    %v2388 = vtanh.pop %v2383
    %v2389 = vmul.f32 %v2387, %v2351
    %2391 = vrot.lane.b32.xlu0 %v2388, 64
    %v2392 = vpop.permute.xlu0 %2391
    %v2394 = vmul.f32 %v2387, %v2392
    %2396 = vrot.lane.b32.xlu0 %v2394, 32
    %v2397 = vpop.permute.xlu0 %2396
    %v2399 = vadd.f32 %v2389, %v2397
    %v2400 = vtanh.pop %v2399
    %2402 = vrot.lane.b32.xlu0 %v2400, 64
    %v2403 = vpop.permute.xlu0 %2402
    %v2405 = vmul.f32 %v2387, %v2403
    %2407 = vrot.lane.b32.xlu0 %v2405, 32
    %v2408 = vpop.permute.xlu0 %2407
    %v2409 = vsel %vm462, %v2408, 0
    %2411 = vmatpush.msra.mxu0 0.0
    %2412 = vmatpush.msra.mxu0 0.0
    %2413 = vmatpush.msra.mxu0 0.0
    %2414 = vmatpush.msra.mxu0 0.0
    %2415 = vmatpush.msra.mxu0 0.0
    %2416 = vmatpush.msra.mxu0 0.0
    %2417 = vmatpush.msra.mxu0 0.0
    %2418 = vmatpush.msra.mxu0 0.0
    %2419 = vmatpush.msra.mxu0 0.0
    %2420 = vmatpush.msra.mxu0 0.0
    %2421 = vmatpush.msra.mxu0 0.0
    %2422 = vmatpush.msra.mxu0 0.0
    %2423 = vmatpush.msra.mxu0 %v2001
    %2424 = vmatpush.msra.mxu0 %v2000
    %2425 = vmatpush.msra.mxu0 %v1999
    %2426 = vmatpush.msra.mxu0 %v1998
    %2427 = vmatmul.f32.gmra.mxu0 %v2409
    %v2428 = vpop.f32.mrf.mxu0
    %v2429 = vadd.f32 0.0, %v2428
    %2430 = vdwg.mxu0
    %v2431 = vadd.f32 %v2124, %v2429
    %v2432 = vmul.f32 %v2431, 0.5
    %v2433 = vtanh.pop %v2432
    %v2434 = vadd.f32 %v2433, 1.0
    %v2435 = vmul.f32 %v2434, 0.5
    %v2436 = vtanh.pop %v2431
    %v2437 = vmul.f32 %v2435, %v2399
    %2439 = vrot.lane.b32.xlu0 %v2436, 64
    %v2440 = vpop.permute.xlu0 %2439
    %v2442 = vmul.f32 %v2435, %v2440
    %2444 = vrot.lane.b32.xlu0 %v2442, 32
    %v2445 = vpop.permute.xlu0 %2444
    %v2447 = vadd.f32 %v2437, %v2445
    %v2448 = vtanh.pop %v2447
    %2450 = vrot.lane.b32.xlu0 %v2448, 64
    %v2451 = vpop.permute.xlu0 %2450
    %v2453 = vmul.f32 %v2435, %v2451
    %2455 = vrot.lane.b32.xlu0 %v2453, 32
    %v2456 = vpop.permute.xlu0 %2455
    %v2457 = vsel %vm462, %v2456, 0
    %2459 = vmatpush.msra.mxu0 0.0
    %2460 = vmatpush.msra.mxu0 0.0
    %2461 = vmatpush.msra.mxu0 0.0
    %2462 = vmatpush.msra.mxu0 0.0
    %2463 = vmatpush.msra.mxu0 0.0
    %2464 = vmatpush.msra.mxu0 0.0
    %2465 = vmatpush.msra.mxu0 0.0
    %2466 = vmatpush.msra.mxu0 0.0
    %2467 = vmatpush.msra.mxu0 0.0
    %2468 = vmatpush.msra.mxu0 0.0
    %2469 = vmatpush.msra.mxu0 0.0
    %2470 = vmatpush.msra.mxu0 0.0
    %2471 = vmatpush.msra.mxu0 %v2001
    %2472 = vmatpush.msra.mxu0 %v2000
    %2473 = vmatpush.msra.mxu0 %v1999
    %2474 = vmatpush.msra.mxu0 %v1998
    %2475 = vmatmul.f32.gmra.mxu0 %v2457
    %v2476 = vpop.f32.mrf.mxu0
    %v2477 = vadd.f32 0.0, %v2476
    %2478 = vdwg.mxu0
    %v2479 = vadd.f32 %v2144, %v2477
    %v2480 = vmul.f32 %v2479, 0.5
    %v2481 = vtanh.pop %v2480
    %v2482 = vadd.f32 %v2481, 1.0
    %v2483 = vmul.f32 %v2482, 0.5
    %v2484 = vtanh.pop %v2479
    %v2485 = vmul.f32 %v2483, %v2447
    %2487 = vrot.lane.b32.xlu0 %v2484, 64
    %v2488 = vpop.permute.xlu0 %2487
    %v2490 = vmul.f32 %v2483, %v2488
    %2492 = vrot.lane.b32.xlu0 %v2490, 32
    %v2493 = vpop.permute.xlu0 %2492
    %v2495 = vadd.f32 %v2485, %v2493
    %v2496 = vtanh.pop %v2495
    %2498 = vrot.lane.b32.xlu0 %v2496, 64
    %v2499 = vpop.permute.xlu0 %2498
    %v2501 = vmul.f32 %v2483, %v2499
    %2503 = vrot.lane.b32.xlu0 %v2501, 32
    %v2504 = vpop.permute.xlu0 %2503
    %v2505 = vsel %vm462, %v2504, 0
    %2507 = vmatpush.msra.mxu0 0.0
    %2508 = vmatpush.msra.mxu0 0.0
    %2509 = vmatpush.msra.mxu0 0.0
    %2510 = vmatpush.msra.mxu0 0.0
    %2511 = vmatpush.msra.mxu0 0.0
    %2512 = vmatpush.msra.mxu0 0.0
    %2513 = vmatpush.msra.mxu0 0.0
    %2514 = vmatpush.msra.mxu0 0.0
    %2515 = vmatpush.msra.mxu0 0.0
    %2516 = vmatpush.msra.mxu0 0.0
    %2517 = vmatpush.msra.mxu0 0.0
    %2518 = vmatpush.msra.mxu0 0.0
    %2519 = vmatpush.msra.mxu0 %v2001
    %2520 = vmatpush.msra.mxu0 %v2000
    %2521 = vmatpush.msra.mxu0 %v1999
    %2522 = vmatpush.msra.mxu0 %v1998
    %2523 = vmatmul.f32.gmra.mxu0 %v2505
    %v2524 = vpop.f32.mrf.mxu0
    %v2525 = vadd.f32 0.0, %v2524
    %2526 = vdwg.mxu0
    %v2527 = vadd.f32 %v2169, %v2525
    %v2528 = vmul.f32 %v2527, 0.5
    %v2529 = vtanh.pop %v2528
    %v2530 = vadd.f32 %v2529, 1.0
    %v2531 = vmul.f32 %v2530, 0.5
    %v2532 = vtanh.pop %v2527
    %v2533 = vmul.f32 %v2531, %v2495
    %2535 = vrot.lane.b32.xlu0 %v2532, 64
    %v2536 = vpop.permute.xlu0 %2535
    %v2538 = vmul.f32 %v2531, %v2536
    %2540 = vrot.lane.b32.xlu0 %v2538, 32
    %v2541 = vpop.permute.xlu0 %2540
    %v2543 = vadd.f32 %v2533, %v2541
    %v2544 = vtanh.pop %v2543
    %2546 = vrot.lane.b32.xlu0 %v2544, 64
    %v2547 = vpop.permute.xlu0 %2546
    %v2549 = vmul.f32 %v2531, %v2547
    %v2550 = vld [vmem:[%s2] sm:$0xf]
    %v2551 = vld [vmem:[#allocation14] sm:$0xff]
    %v2552 = vld [vmem:[#allocation14 + $0x8] sm:$0x3]
    %v2553 = vld [vmem:[%s16] sm:$0x1]
    %v2555 = vperm.slane %v2553, 0
    %vm2557 = vcmask 80896
    %v2559 = vsel %vm2557, %v2550, 0
    %vm2561 = vcmask 1041408
    %v2563 = vsel %vm2561, %v2552, 0
    %2565 = vmatpush.msra.mxu0 0.0
    %2566 = vmatpush.msra.mxu0 0.0
    %2567 = vmatpush.msra.mxu0 0.0
    %2568 = vmatpush.msra.mxu0 0.0
    %2569 = vmatpush.msra.mxu0 0.0
    %2570 = vmatpush.msra.mxu0 0.0
    %2571 = vmatpush.msra.mxu0 0.0
    %2572 = vmatpush.msra.mxu0 0.0
    %2573 = vmatpush.msra.mxu0 0.0
    %2574 = vmatpush.msra.mxu0 0.0
    %2575 = vmatpush.msra.mxu0 0.0
    %2576 = vmatpush.msra.mxu0 0.0
    %2577 = vmatpush.msra.mxu0 0.0
    %2578 = vmatpush.msra.mxu0 0.0
    %2579 = vmatpush.msra.mxu0 %v2563
    %2580 = vmatpush.msra.mxu0 %v2551
    %2581 = vmatmul.f32.gmra.mxu0 %v2559
    %v2582 = vpop.f32.mrf.mxu0
    %v2583 = vadd.f32 %v2555, %v2582
    %2584 = vdwg.mxu0
    %v2585 = vld [vmem:[#allocation16] sm:$0xff]
    %v2586 = vld [vmem:[#allocation16 + $0x8] sm:$0xff]
    %v2587 = vld [vmem:[#allocation16 + $0x10] sm:$0xff]
    %v2588 = vld [vmem:[#allocation16 + $0x18] sm:$0xff]
    %v2589 = vld [vmem:[#allocation17] sm:$0xff]
    %v2590 = vld [vmem:[#allocation17 + $0x8] sm:$0xff]
    %v2591 = vld [vmem:[#allocation17 + $0x10] sm:$0xff]
    %v2592 = vld [vmem:[#allocation17 + $0x18] sm:$0xff]
    %2594 = vrot.lane.b32.xlu0 %v2549, 32
    %v2595 = vpop.permute.xlu0 %2594
    %v2596 = vsel %vm462, %v2595, 0
    %2598 = vmatpush.msra.mxu0 0.0
    %2599 = vmatpush.msra.mxu0 0.0
    %2600 = vmatpush.msra.mxu0 0.0
    %2601 = vmatpush.msra.mxu0 0.0
    %2602 = vmatpush.msra.mxu0 0.0
    %2603 = vmatpush.msra.mxu0 0.0
    %2604 = vmatpush.msra.mxu0 0.0
    %2605 = vmatpush.msra.mxu0 0.0
    %2606 = vmatpush.msra.mxu0 0.0
    %2607 = vmatpush.msra.mxu0 0.0
    %2608 = vmatpush.msra.mxu0 0.0
    %2609 = vmatpush.msra.mxu0 0.0
    %2610 = vmatpush.msra.mxu0 %v2592
    %2611 = vmatpush.msra.mxu0 %v2591
    %2612 = vmatpush.msra.mxu0 %v2590
    %2613 = vmatpush.msra.mxu0 %v2589
    %2614 = vmatmul.f32.gmra.mxu0 %v2596
    %v2615 = vpop.f32.mrf.mxu0
    %v2616 = vadd.f32 0.0, %v2615
    %2617 = vdwg.mxu0
    %2619 = vrot.lane.b32.xlu0 %v1400, 32
    %v2620 = vpop.permute.xlu0 %2619
    %v2621 = vsel %vm462, %v2620, 0
    %2623 = vmatpush.msra.mxu0 0.0
    %2624 = vmatpush.msra.mxu0 0.0
    %2625 = vmatpush.msra.mxu0 0.0
    %2626 = vmatpush.msra.mxu0 0.0
    %2627 = vmatpush.msra.mxu0 0.0
    %2628 = vmatpush.msra.mxu0 0.0
    %2629 = vmatpush.msra.mxu0 0.0
    %2630 = vmatpush.msra.mxu0 0.0
    %2631 = vmatpush.msra.mxu0 0.0
    %2632 = vmatpush.msra.mxu0 0.0
    %2633 = vmatpush.msra.mxu0 0.0
    %2634 = vmatpush.msra.mxu0 0.0
    %2635 = vmatpush.msra.mxu0 %v2588
    %2636 = vmatpush.msra.mxu0 %v2587
    %2637 = vmatpush.msra.mxu0 %v2586
    %2638 = vmatpush.msra.mxu0 %v2585
    %2639 = vmatmul.f32.gmra.mxu0 %v2621
    %v2640 = vpop.f32.mrf.mxu0
    %v2641 = vadd.f32 %v2616, %v2640
    %2642 = vdwg.mxu0
    %v2643 = vld [vmem:[#allocation19] sm:$0xff]
    %v2644 = vld [vmem:[#allocation19 + $0x8] sm:$0xff]
    %v2645 = vld [vmem:[#allocation19 + $0x10] sm:$0xff]
    %v2646 = vld [vmem:[#allocation19 + $0x18] sm:$0xff]
    %v2648 = vsel %vm462, %v2583, 0
    %2650 = vmatpush.msra.mxu0 0.0
    %2651 = vmatpush.msra.mxu0 0.0
    %2652 = vmatpush.msra.mxu0 0.0
    %2653 = vmatpush.msra.mxu0 0.0
    %2654 = vmatpush.msra.mxu0 0.0
    %2655 = vmatpush.msra.mxu0 0.0
    %2656 = vmatpush.msra.mxu0 0.0
    %2657 = vmatpush.msra.mxu0 0.0
    %2658 = vmatpush.msra.mxu0 0.0
    %2659 = vmatpush.msra.mxu0 0.0
    %2660 = vmatpush.msra.mxu0 0.0
    %2661 = vmatpush.msra.mxu0 0.0
    %2662 = vmatpush.msra.mxu0 %v2646
    %2663 = vmatpush.msra.mxu0 %v2645
    %2664 = vmatpush.msra.mxu0 %v2644
    %2665 = vmatpush.msra.mxu0 %v2643
    %2666 = vmatmul.f32.gmra.mxu0 %v2648
    %v2667 = vpop.f32.mrf.mxu0
    %v2668 = vadd.f32 0.0, %v2667
    %2669 = vdwg.mxu0
    %v2670 = vadd.f32 %v2641, %v2668
    %v2671 = vld [vmem:[%s20] sm:$0x1]
    %v2673 = vperm.slane %v2671, 0
    %v2675 = vadd.f32 %v2670, %v2673
    %v2676 = vtanh.pop %v2675
    %v2677 = vld [vmem:[%s21] sm:$0xff]
    %v2678 = vld [vmem:[%s21 + $0x8] sm:$0xff]
    %v2679 = vld [vmem:[%s21 + $0x10] sm:$0xff]
    %v2680 = vld [vmem:[%s21 + $0x18] sm:$0xff]
    %v2681 = vld [vmem:[%s21 + $0x20] sm:$0xff]
    %v2682 = vld [vmem:[%s21 + $0x28] sm:$0xff]
    %v2683 = vld [vmem:[%s22] sm:$0x1]
    %v2685 = vperm.slane %v2683, 0
    %vm2687 = vcmask 392192
    %v2689 = vsel %vm2687, %v2676, 0
    %2691 = vmatpush.msra.mxu0 0.0
    %2692 = vmatpush.msra.mxu0 0.0
    %2693 = vmatpush.msra.mxu0 0.0
    %2694 = vmatpush.msra.mxu0 0.0
    %2695 = vmatpush.msra.mxu0 0.0
    %2696 = vmatpush.msra.mxu0 0.0
    %2697 = vmatpush.msra.mxu0 0.0
    %2698 = vmatpush.msra.mxu0 0.0
    %2699 = vmatpush.msra.mxu0 0.0
    %2700 = vmatpush.msra.mxu0 0.0
    %2701 = vmatpush.msra.mxu0 %v2682
    %2702 = vmatpush.msra.mxu0 %v2681
    %2703 = vmatpush.msra.mxu0 %v2680
    %2704 = vmatpush.msra.mxu0 %v2679
    %2705 = vmatpush.msra.mxu0 %v2678
    %2706 = vmatpush.msra.mxu0 %v2677
    %2707 = vmatmul.f32.gmra.mxu0 %v2689
    %v2708 = vpop.f32.mrf.mxu0
    %v2709 = vadd.f32 %v2685, %v2708
    %2710 = vdwg.mxu0
    %v2711 = vtanh.pop %v2709
    %v2712 = vld [vmem:[%s23] sm:$0xff]
    %v2713 = vld [vmem:[%s23 + $0x8] sm:$0xff]
    %v2714 = vld [vmem:[%s23 + $0x10] sm:$0xff]
    %v2715 = vld [vmem:[%s24] sm:$0x1]
    %v2717 = vperm.slane %v2715, 0
    %vm2719 = vcmask 195584
    %v2721 = vsel %vm2719, %v2711, 0
    %2723 = vmatpush.msra.mxu0 0.0
    %2724 = vmatpush.msra.mxu0 0.0
    %2725 = vmatpush.msra.mxu0 0.0
    %2726 = vmatpush.msra.mxu0 0.0
    %2727 = vmatpush.msra.mxu0 0.0
    %2728 = vmatpush.msra.mxu0 0.0
    %2729 = vmatpush.msra.mxu0 0.0
    %2730 = vmatpush.msra.mxu0 0.0
    %2731 = vmatpush.msra.mxu0 0.0
    %2732 = vmatpush.msra.mxu0 0.0
    %2733 = vmatpush.msra.mxu0 0.0
    %2734 = vmatpush.msra.mxu0 0.0
    %2735 = vmatpush.msra.mxu0 0.0
    %2736 = vmatpush.msra.mxu0 %v2714
    %2737 = vmatpush.msra.mxu0 %v2713
    %2738 = vmatpush.msra.mxu0 %v2712
    %2739 = vmatmul.f32.gmra.mxu0 %v2721
    %v2740 = vpop.f32.mrf.mxu0
    %v2741 = vadd.f32 %v2717, %v2740
    %2742 = vdwg.mxu0
    %v2743 = vtanh.pop %v2741
    %v2744 = vmul.f32 %v2743, 0.5
    %v2745 = vtanh.pop %v2744
    %v2746 = vadd.f32 %v2745, 1.0
    %v2747 = vmul.f32 %v2746, 0.5
    %vm2748 = vcmask 27648
    %2749 = vst.msk [vmem:[#allocation20] sm:$0xf] %vm2748, %v2747
    // Predicated region
    $region146: #{tpu_custom_call.1} parent=1 // pred_check
      _
    $region147: #{tpu_custom_call.1} parent=1 // pred_check_branch
      %2751 = sbr.rel (0) target = $region149
    $region148: #{tpu_custom_call.1} parent=1 // pred_region
      %2753 = vsyncadd [#allocation4], 0
      %s2755 = sshll.u32 [#allocation20], 4
      %s2756 = int_to_ptr.vmem [resolvable:$true] %s2755
      %s2757 = sshll.u32 %s25, 4
      %s2758 = int_to_ptr.hbm [resolvable:$true] %s2757
      %2760 = dma.vmem_to_hbm [thread:$0]  %s2756, 64, %s2758, [#allocation4]
    $region149: #{tpu_custom_call.1} parent=1 // pred_fallthru
      _
    // Predicated region
    $region150: #{tpu_custom_call.1} parent=1 // pred_check
      _
    $region151: #{tpu_custom_call.1} parent=1 // pred_check_branch
      %2762 = sbr.rel (0) target = $region153
    $region152: #{tpu_custom_call.1} parent=1 // pred_region
      %2764 = dma.done [#allocation4], 64
    $region153: #{tpu_custom_call.1} parent=1 // pred_fallthru
      _
    %2765 = vsyncpa [#allocation3], 1
    %2766 = vsyncpa [#allocation6], 1
    %2767 = vsyncpa [#allocation9], 1
    %2768 = vsyncpa [#allocation12], 1
    %2769 = vsyncpa [#allocation15], 1
    %2770 = vsyncpa [#allocation18], 1
    %2771 = vsyncpa [#allocation4], 1

</llo_original>
